<compile_context>
chip_gen: v6e
topology: v6e:2x2x1
jax: 0.10.0
libtpu: 0.0.40
codegen_flags: <defaults>
</compile_context>

<pallas_src>
import jax
import jax.numpy as jnp
from jax.experimental import pallas as pl
from jax.experimental.pallas import tpu as pltpu

_VMEM_LIMIT = 32 * 1024 * 1024  # safe on v5e/v6e/v7x (v7x physical = 64 MiB)


def _tile(extent, max_tile):
    """Full extent if it fits in one block, else the aligned max tile size."""
    return extent if extent <= max_tile else max_tile


# ----------------------------- Pallas kernels ------------------------------

def _conv_gemm_t_kernel(w_ref, b_ref, p_ref, o_ref):
    # w: (Cout, K) bf16, p: (K, TM) bf16, b: (Cout, 1) f32, o: (Cout, TM) bf16
    acc = jnp.dot(w_ref[...], p_ref[...], preferred_element_type=jnp.float32)
    acc = acc + b_ref[...]                       # f32 epilogue
    o_ref[...] = jnp.maximum(acc, 0.0).astype(o_ref.dtype)


def conv_relu_transposed(patches_t, w2d, bias, *, max_tm=512):
    """relu(W @ patches.T + b); output (Cout, M) with M = B*OH*OW lane-dense."""
    K, M = patches_t.shape
    cout, k2 = w2d.shape
    assert K == k2
    TM = _tile(M, max_tm)                        # max_tm is a multiple of 128
    cost = pl.CostEstimate(
        flops=2 * M * K * cout,
        transcendentals=0,
        bytes_accessed=M * K * 2 + K * cout * 2 + cout * 4 + M * cout * 2)
    return pl.pallas_call(
        _conv_gemm_t_kernel,
        out_shape=jax.ShapeDtypeStruct((cout, M), jnp.bfloat16),
        grid=(pl.cdiv(M, TM),),
        in_specs=[
            pl.BlockSpec((cout, K), lambda i: (0, 0)),   # weights: resident
            pl.BlockSpec((cout, 1), lambda i: (0, 0)),   # bias: resident
            pl.BlockSpec((K, TM), lambda i: (0, i)),     # patches: M-tiled
        ],
        out_specs=pl.BlockSpec((cout, TM), lambda i: (0, i)),
        compiler_params=pltpu.CompilerParams(
            dimension_semantics=("parallel",),
            vmem_limit_bytes=_VMEM_LIMIT),
        cost_estimate=cost,
    )(w2d.astype(jnp.bfloat16),
      bias.reshape(cout, 1).astype(jnp.float32),
      patches_t.astype(jnp.bfloat16))


def _max4_kernel(a_ref, b_ref, c_ref, d_ref, o_ref):
    o_ref[...] = jnp.maximum(jnp.maximum(a_ref[...], b_ref[...]),
                             jnp.maximum(c_ref[...], d_ref[...]))


def max_pool_2x2(x, *, max_tb=256):
    """2x2 max pool, stride 2, on NCHW input; runs lane-dense on (B, C*OH*OW)."""
    B, C, H, W = x.shape
    OH, OW = H // 2, W // 2
    L = C * OH * OW
    # strided slicing / reshape is JAX glue; the max runs in the Pallas kernel
    # with a large (lane-dense) last dimension instead of OW=12.
    s00 = x[:, :, 0::2, 0::2].reshape(B, L)
    s01 = x[:, :, 0::2, 1::2].reshape(B, L)
    s10 = x[:, :, 1::2, 0::2].reshape(B, L)
    s11 = x[:, :, 1::2, 1::2].reshape(B, L)
    TB = _tile(B, max_tb)                        # max_tb is a multiple of 8
    out = pl.pallas_call(
        _max4_kernel,
        out_shape=jax.ShapeDtypeStruct((B, L), x.dtype),
        grid=(pl.cdiv(B, TB),),
        in_specs=[pl.BlockSpec((TB, L), lambda i: (i, 0))] * 4,
        out_specs=pl.BlockSpec((TB, L), lambda i: (i, 0)),
        compiler_params=pltpu.CompilerParams(
            dimension_semantics=("parallel",),
            vmem_limit_bytes=_VMEM_LIMIT),
    )(s00, s01, s10, s11)
    return out.reshape(B, C, OH, OW)


def _fc_fused_kernel(x_ref, w1_ref, b1_ref, w2_ref, b2_ref, o_ref):
    # x: (TM, K1) bf16, w1: (K1, N1) bf16, w2: (N1, N2) bf16, biases f32.
    h = jnp.dot(x_ref[...], w1_ref[...], preferred_element_type=jnp.float32)
    h = jnp.maximum(h + b1_ref[...], 0.0)                    # f32 epilogue
    z = jnp.dot(h.astype(w2_ref.dtype), w2_ref[...],
                preferred_element_type=jnp.float32)
    z = z + b2_ref[...]
    m = jnp.max(z, axis=-1, keepdims=True)
    s = z - m
    lse = jnp.log(jnp.sum(jnp.exp(s), axis=-1, keepdims=True))
    o_ref[...] = (s - lse).astype(o_ref.dtype)


def fc_relu_fc_logsoftmax(x, w1, b1, w2, b2, *, max_tm=512):
    """log_softmax(relu(x @ w1 + b1) @ w2 + b2), fused in one kernel."""
    M, K1 = x.shape
    k1b, N1 = w1.shape
    n1b, N2 = w2.shape
    assert K1 == k1b and N1 == n1b
    TM = _tile(M, max_tm)                        # max_tm is a multiple of 8
    cost = pl.CostEstimate(
        flops=2 * M * K1 * N1 + 2 * M * N1 * N2,
        transcendentals=M * N2,
        bytes_accessed=(M * K1 * 2 + K1 * N1 * 2 + N1 * 4
                        + N1 * N2 * 2 + N2 * 4 + M * N2 * 4))
    return pl.pallas_call(
        _fc_fused_kernel,
        out_shape=jax.ShapeDtypeStruct((M, N2), jnp.float32),
        grid=(pl.cdiv(M, TM),),
        in_specs=[
            pl.BlockSpec((TM, K1), lambda i: (i, 0)),    # activations: M-tiled
            pl.BlockSpec((K1, N1), lambda i: (0, 0)),    # fc1 weight: resident
            pl.BlockSpec((1, N1), lambda i: (0, 0)),
            pl.BlockSpec((N1, N2), lambda i: (0, 0)),    # fc2 weight: resident
            pl.BlockSpec((1, N2), lambda i: (0, 0)),
        ],
        out_specs=pl.BlockSpec((TM, N2), lambda i: (i, 0)),
        compiler_params=pltpu.CompilerParams(
            dimension_semantics=("parallel",),
            vmem_limit_bytes=_VMEM_LIMIT),
        cost_estimate=cost,
    )(x.astype(jnp.bfloat16), w1.astype(jnp.bfloat16),
      b1.reshape(1, N1).astype(jnp.float32),
      w2.astype(jnp.bfloat16), b2.reshape(1, N2).astype(jnp.float32))


# ------------------------------- glue (JAX) --------------------------------

def im2col_t(x, kh, kw):
    """Valid conv, stride 1: (B,C,H,W) -> ((C*kh*kw, B*OH*OW), OH, OW).

    Row ordering is (C, kh, kw) to match PyTorch's weight.reshape(Cout, -1);
    columns are (B, OH, OW) row-major, so the transposed GEMM output
    (Cout, B*OH*OW) reshapes directly to (Cout, B, OH, OW).
    """
    B, C, H, W = x.shape
    oh, ow = H - kh + 1, W - kw + 1
    cols = [x[:, :, i:i + oh, j:j + ow]          # (B, C, oh, ow)
            for i in range(kh) for j in range(kw)]
    p = jnp.stack(cols, axis=0)                  # (kh*kw, B, C, oh, ow)
    p = p.transpose(2, 0, 1, 3, 4)               # (C, kh*kw, B, oh, ow)
    return p.reshape(C * kh * kw, B * oh * ow), oh, ow


def init_params(key):
    """Deterministic init mimicking PyTorch's default uniform(-1/sqrt(fan_in))."""
    ks = jax.random.split(key, 8)

    def u(k, shape, fan_in):
        bound = 1.0 / float(fan_in) ** 0.5
        return jax.random.uniform(k, shape, jnp.float32, -bound, bound)

    return dict(
        conv1_w=u(ks[0], (10, 1, 5, 5), 1 * 5 * 5),
        conv1_b=u(ks[1], (10,), 1 * 5 * 5),
        conv2_w=u(ks[2], (20, 10, 3, 3), 10 * 3 * 3),
        conv2_b=u(ks[3], (20,), 10 * 3 * 3),
        fc1_w=u(ks[4], (500, 20 * 10 * 10), 20 * 10 * 10),
        fc1_b=u(ks[5], (500,), 20 * 10 * 10),
        fc2_w=u(ks[6], (10, 500), 500),
        fc2_b=u(ks[7], (10,), 500),
    )


@jax.jit
def convnet_forward(x, params):
    B = x.shape[0]
    xb = x.astype(jnp.bfloat16)                  # halve im2col HBM traffic

    # conv1 (1 -> 10, 5x5) + relu: lane-dense transposed GEMM
    p1, oh1, ow1 = im2col_t(xb, 5, 5)                        # (25, B*576)
    w1 = params["conv1_w"].reshape(10, -1)                   # (10, 25)
    y1t = conv_relu_transposed(p1, w1, params["conv1_b"])    # (10, B*576) bf16
    y1 = y1t.reshape(10, B, oh1, ow1).transpose(1, 0, 2, 3)  # (B, 10, 24, 24)

    # max_pool2d(2, 2)
    y1 = max_pool_2x2(y1)                                    # (B, 10, 12, 12)

    # conv2 (10 -> 20, 3x3) + relu
    p2, oh2, ow2 = im2col_t(y1, 3, 3)                        # (90, B*100)
    w2 = params["conv2_w"].reshape(20, -1)                   # (20, 90)
    y2t = conv_relu_transposed(p2, w2, params["conv2_b"])    # (20, B*100) bf16
    y2 = y2t.reshape(20, B, oh2, ow2).transpose(1, 0, 2, 3)  # (B, 20, 10, 10)

    # flatten in NCHW order -> matches torch's out.view(B, -1)
    flat = y2.reshape(B, 20 * oh2 * ow2)                     # (B, 2000)

    # fc1 + relu ; fc2 + log_softmax, fused into a single kernel
    return fc_relu_fc_logsoftmax(flat, params["fc1_w"].T, params["fc1_b"],
                                 params["fc2_w"].T, params["fc2_b"])


if __name__ == "__main__":
    key = jax.random.PRNGKey(0)
    k_param, k_x = jax.random.split(key)
    params = init_params(k_param)
    # fc1's in-features (20*10*10) pin the input spatial size to 28x28 (MNIST).
    x = jax.random.normal(k_x, (2, 1, 28, 28), jnp.float32)
    out = jax.block_until_ready(convnet_forward(x, params))
    assert out.shape == (2, 10)
    # log_softmax rows must exponentiate to probability distributions.
    row_sums = jnp.exp(out).sum(axis=-1)
    assert bool(jnp.all(jnp.abs(row_sums - 1.0) < 1e-3))
    print("KERNEL_OK")
</pallas_src>

<mosaic_0001>
module attributes {stable_mosaic.version = 11 : i64} {
  func.func @_conv_gemm_t_kernel(%arg0: i32, %arg1: memref<10x25xbf16, #tpu.memory_space<vmem>>, %arg2: memref<10x1xf32, #tpu.memory_space<vmem>>, %arg3: memref<25x512xbf16, #tpu.memory_space<vmem>>, %arg4: memref<10x512xbf16, #tpu.memory_space<vmem>>) attributes {dimension_semantics = [#tpu.dimension_semantics<parallel>], iteration_bounds = array<i64: 3>, scalar_prefetch = 0 : i64, scratch_operands = 0 : i64, tpu.core_type = #tpu.core_type<tc>, window_params = [{pipeline_mode = #tpu.pipeline_mode<synchronous>, transform_indices = @transform_0, window_bounds = array<i64: 10, 25>}, {pipeline_mode = #tpu.pipeline_mode<synchronous>, transform_indices = @transform_1, window_bounds = array<i64: 10, 1>}, {transform_indices = @transform_2, window_bounds = array<i64: 25, 512>}, {transform_indices = @transform_3, window_bounds = array<i64: 10, 512>}]} {
    %c0 = arith.constant 0 : index
    %c0_0 = arith.constant 0 : index
    %0 = vector.load %arg1[%c0, %c0_0] : memref<10x25xbf16, #tpu.memory_space<vmem>>, vector<10x25xbf16>
    %c0_1 = arith.constant 0 : index
    %c0_2 = arith.constant 0 : index
    %1 = vector.load %arg3[%c0_1, %c0_2] : memref<25x512xbf16, #tpu.memory_space<vmem>>, vector<25x512xbf16>
    %cst = arith.constant dense<0.000000e+00> : vector<10x512xf32>
    %2 = tpu.matmul %0, %1, %cst {dimension_numbers = #tpu.dot_dimension_numbers<[1], [0], [0], [1], [0, 0, 1, 1], [], []>} : vector<10x25xbf16>, vector<25x512xbf16>, vector<10x512xf32> -> vector<10x512xf32>
    %c0_3 = arith.constant 0 : index
    %c0_4 = arith.constant 0 : index
    %3 = vector.load %arg2[%c0_3, %c0_4] : memref<10x1xf32, #tpu.memory_space<vmem>>, vector<10x1xf32>
    %4 = vector.broadcast %3 : vector<10x1xf32> to vector<10x512xf32>
    %5 = arith.addf %2, %4 : vector<10x512xf32>
    %cst_5 = arith.constant 0.000000e+00 : f32
    %6 = vector.broadcast %cst_5 : f32 to vector<10x512xf32>
    %7 = arith.maximumf %5, %6 : vector<10x512xf32>
    %8 = arith.truncf %7 : vector<10x512xf32> to vector<10x512xbf16>
    %c0_6 = arith.constant 0 : index
    %c0_7 = arith.constant 0 : index
    %9 = vector.load %arg4[%c0_6, %c0_7] : memref<10x512xbf16, #tpu.memory_space<vmem>>, vector<10x512xbf16>
    tpu.vector_store %arg4[%c0_6, %c0_7], %8 {strides = array<i32>} : memref<10x512xbf16, #tpu.memory_space<vmem>>, vector<10x512xbf16>,
    return
  }
  func.func @transform_0(%arg0: i32) -> (i32, i32) {
    %c0_i32 = arith.constant 0 : i32
    %c0_i32_0 = arith.constant 0 : i32
    %c0_i32_1 = arith.constant 0 : i32
    return %c0_i32, %c0_i32_0 : i32, i32
  }
  func.func @transform_1(%arg0: i32) -> (i32, i32) {
    %c0_i32 = arith.constant 0 : i32
    %c0_i32_0 = arith.constant 0 : i32
    %c0_i32_1 = arith.constant 0 : i32
    return %c0_i32, %c0_i32_0 : i32, i32
  }
  func.func @transform_2(%arg0: i32) -> (i32, i32) {
    %c0_i32 = arith.constant 0 : i32
    %c0_i32_0 = arith.constant 0 : i32
    return %c0_i32, %arg0 : i32, i32
  }
  func.func @transform_3(%arg0: i32) -> (i32, i32) {
    %c0_i32 = arith.constant 0 : i32
    %c0_i32_0 = arith.constant 0 : i32
    return %c0_i32, %arg0 : i32, i32
  }
}

module attributes {stable_mosaic.version = 11 : i64} {
  func.func @_max4_kernel(%arg0: i32, %arg1: memref<2x1440xbf16, #tpu.memory_space<vmem>>, %arg2: memref<2x1440xbf16, #tpu.memory_space<vmem>>, %arg3: memref<2x1440xbf16, #tpu.memory_space<vmem>>, %arg4: memref<2x1440xbf16, #tpu.memory_space<vmem>>, %arg5: memref<2x1440xbf16, #tpu.memory_space<vmem>>) attributes {dimension_semantics = [#tpu.dimension_semantics<parallel>], iteration_bounds = array<i64: 1>, scalar_prefetch = 0 : i64, scratch_operands = 0 : i64, tpu.core_type = #tpu.core_type<tc>, window_params = [{transform_indices = @transform_0, window_bounds = array<i64: 2, 1440>}, {transform_indices = @transform_1, window_bounds = array<i64: 2, 1440>}, {transform_indices = @transform_2, window_bounds = array<i64: 2, 1440>}, {transform_indices = @transform_3, window_bounds = array<i64: 2, 1440>}, {transform_indices = @transform_4, window_bounds = array<i64: 2, 1440>}]} {
    %c0 = arith.constant 0 : index
    %c0_0 = arith.constant 0 : index
    %0 = vector.load %arg1[%c0, %c0_0] : memref<2x1440xbf16, #tpu.memory_space<vmem>>, vector<2x1440xbf16>
    %c0_1 = arith.constant 0 : index
    %c0_2 = arith.constant 0 : index
    %1 = vector.load %arg2[%c0_1, %c0_2] : memref<2x1440xbf16, #tpu.memory_space<vmem>>, vector<2x1440xbf16>
    %2 = arith.maximumf %0, %1 : vector<2x1440xbf16>
    %c0_3 = arith.constant 0 : index
    %c0_4 = arith.constant 0 : index
    %3 = vector.load %arg3[%c0_3, %c0_4] : memref<2x1440xbf16, #tpu.memory_space<vmem>>, vector<2x1440xbf16>
    %c0_5 = arith.constant 0 : index
    %c0_6 = arith.constant 0 : index
    %4 = vector.load %arg4[%c0_5, %c0_6] : memref<2x1440xbf16, #tpu.memory_space<vmem>>, vector<2x1440xbf16>
    %5 = arith.maximumf %3, %4 : vector<2x1440xbf16>
    %6 = arith.maximumf %2, %5 : vector<2x1440xbf16>
    %c0_7 = arith.constant 0 : index
    %c0_8 = arith.constant 0 : index
    %7 = vector.load %arg5[%c0_7, %c0_8] : memref<2x1440xbf16, #tpu.memory_space<vmem>>, vector<2x1440xbf16>
    tpu.vector_store %arg5[%c0_7, %c0_8], %6 {strides = array<i32>} : memref<2x1440xbf16, #tpu.memory_space<vmem>>, vector<2x1440xbf16>,
    return
  }
  func.func @transform_0(%arg0: i32) -> (i32, i32) {
    %c0_i32 = arith.constant 0 : i32
    %c0_i32_0 = arith.constant 0 : i32
    return %arg0, %c0_i32 : i32, i32
  }
  func.func @transform_1(%arg0: i32) -> (i32, i32) {
    %c0_i32 = arith.constant 0 : i32
    %c0_i32_0 = arith.constant 0 : i32
    return %arg0, %c0_i32 : i32, i32
  }
  func.func @transform_2(%arg0: i32) -> (i32, i32) {
    %c0_i32 = arith.constant 0 : i32
    %c0_i32_0 = arith.constant 0 : i32
    return %arg0, %c0_i32 : i32, i32
  }
  func.func @transform_3(%arg0: i32) -> (i32, i32) {
    %c0_i32 = arith.constant 0 : i32
    %c0_i32_0 = arith.constant 0 : i32
    return %arg0, %c0_i32 : i32, i32
  }
  func.func @transform_4(%arg0: i32) -> (i32, i32) {
    %c0_i32 = arith.constant 0 : i32
    %c0_i32_0 = arith.constant 0 : i32
    return %arg0, %c0_i32 : i32, i32
  }
}

module attributes {stable_mosaic.version = 11 : i64} {
  func.func @_conv_gemm_t_kernel(%arg0: i32, %arg1: memref<20x90xbf16, #tpu.memory_space<vmem>>, %arg2: memref<20x1xf32, #tpu.memory_space<vmem>>, %arg3: memref<90x200xbf16, #tpu.memory_space<vmem>>, %arg4: memref<20x200xbf16, #tpu.memory_space<vmem>>) attributes {dimension_semantics = [#tpu.dimension_semantics<parallel>], iteration_bounds = array<i64: 1>, scalar_prefetch = 0 : i64, scratch_operands = 0 : i64, tpu.core_type = #tpu.core_type<tc>, window_params = [{pipeline_mode = #tpu.pipeline_mode<synchronous>, transform_indices = @transform_0, window_bounds = array<i64: 20, 90>}, {pipeline_mode = #tpu.pipeline_mode<synchronous>, transform_indices = @transform_1, window_bounds = array<i64: 20, 1>}, {transform_indices = @transform_2, window_bounds = array<i64: 90, 200>}, {transform_indices = @transform_3, window_bounds = array<i64: 20, 200>}]} {
    %c0 = arith.constant 0 : index
    %c0_0 = arith.constant 0 : index
    %0 = vector.load %arg1[%c0, %c0_0] : memref<20x90xbf16, #tpu.memory_space<vmem>>, vector<20x90xbf16>
    %c0_1 = arith.constant 0 : index
    %c0_2 = arith.constant 0 : index
    %1 = vector.load %arg3[%c0_1, %c0_2] : memref<90x200xbf16, #tpu.memory_space<vmem>>, vector<90x200xbf16>
    %cst = arith.constant dense<0.000000e+00> : vector<20x200xf32>
    %2 = tpu.matmul %0, %1, %cst {dimension_numbers = #tpu.dot_dimension_numbers<[1], [0], [0], [1], [0, 0, 1, 1], [], []>} : vector<20x90xbf16>, vector<90x200xbf16>, vector<20x200xf32> -> vector<20x200xf32>
    %c0_3 = arith.constant 0 : index
    %c0_4 = arith.constant 0 : index
    %3 = vector.load %arg2[%c0_3, %c0_4] : memref<20x1xf32, #tpu.memory_space<vmem>>, vector<20x1xf32>
    %4 = vector.broadcast %3 : vector<20x1xf32> to vector<20x200xf32>
    %5 = arith.addf %2, %4 : vector<20x200xf32>
    %cst_5 = arith.constant 0.000000e+00 : f32
    %6 = vector.broadcast %cst_5 : f32 to vector<20x200xf32>
    %7 = arith.maximumf %5, %6 : vector<20x200xf32>
    %8 = arith.truncf %7 : vector<20x200xf32> to vector<20x200xbf16>
    %c0_6 = arith.constant 0 : index
    %c0_7 = arith.constant 0 : index
    %9 = vector.load %arg4[%c0_6, %c0_7] : memref<20x200xbf16, #tpu.memory_space<vmem>>, vector<20x200xbf16>
    tpu.vector_store %arg4[%c0_6, %c0_7], %8 {strides = array<i32>} : memref<20x200xbf16, #tpu.memory_space<vmem>>, vector<20x200xbf16>,
    return
  }
  func.func @transform_0(%arg0: i32) -> (i32, i32) {
    %c0_i32 = arith.constant 0 : i32
    %c0_i32_0 = arith.constant 0 : i32
    %c0_i32_1 = arith.constant 0 : i32
    return %c0_i32, %c0_i32_0 : i32, i32
  }
  func.func @transform_1(%arg0: i32) -> (i32, i32) {
    %c0_i32 = arith.constant 0 : i32
    %c0_i32_0 = arith.constant 0 : i32
    %c0_i32_1 = arith.constant 0 : i32
    return %c0_i32, %c0_i32_0 : i32, i32
  }
  func.func @transform_2(%arg0: i32) -> (i32, i32) {
    %c0_i32 = arith.constant 0 : i32
    %c0_i32_0 = arith.constant 0 : i32
    return %c0_i32, %arg0 : i32, i32
  }
  func.func @transform_3(%arg0: i32) -> (i32, i32) {
    %c0_i32 = arith.constant 0 : i32
    %c0_i32_0 = arith.constant 0 : i32
    return %c0_i32, %arg0 : i32, i32
  }
}

module attributes {stable_mosaic.version = 11 : i64} {
  func.func @_fc_fused_kernel(%arg0: i32, %arg1: memref<2x2000xbf16, #tpu.memory_space<vmem>>, %arg2: memref<2000x500xbf16, #tpu.memory_space<vmem>>, %arg3: memref<1x500xf32, #tpu.memory_space<vmem>>, %arg4: memref<500x10xbf16, #tpu.memory_space<vmem>>, %arg5: memref<1x10xf32, #tpu.memory_space<vmem>>, %arg6: memref<2x10xf32, #tpu.memory_space<vmem>>) attributes {dimension_semantics = [#tpu.dimension_semantics<parallel>], iteration_bounds = array<i64: 1>, scalar_prefetch = 0 : i64, scratch_operands = 0 : i64, tpu.core_type = #tpu.core_type<tc>, window_params = [{transform_indices = @transform_0, window_bounds = array<i64: 2, 2000>}, {pipeline_mode = #tpu.pipeline_mode<synchronous>, transform_indices = @transform_1, window_bounds = array<i64: 2000, 500>}, {pipeline_mode = #tpu.pipeline_mode<synchronous>, transform_indices = @transform_2, window_bounds = array<i64: 1, 500>}, {pipeline_mode = #tpu.pipeline_mode<synchronous>, transform_indices = @transform_3, window_bounds = array<i64: 500, 10>}, {pipeline_mode = #tpu.pipeline_mode<synchronous>, transform_indices = @transform_4, window_bounds = array<i64: 1, 10>}, {transform_indices = @transform_5, window_bounds = array<i64: 2, 10>}]} {
    %c0 = arith.constant 0 : index
    %c0_0 = arith.constant 0 : index
    %0 = vector.load %arg1[%c0, %c0_0] : memref<2x2000xbf16, #tpu.memory_space<vmem>>, vector<2x2000xbf16>
    %c0_1 = arith.constant 0 : index
    %c0_2 = arith.constant 0 : index
    %1 = vector.load %arg2[%c0_1, %c0_2] : memref<2000x500xbf16, #tpu.memory_space<vmem>>, vector<2000x500xbf16>
    %cst = arith.constant dense<0.000000e+00> : vector<2x500xf32>
    %2 = tpu.matmul %0, %1, %cst {dimension_numbers = #tpu.dot_dimension_numbers<[1], [0], [0], [1], [0, 0, 1, 1], [], []>} : vector<2x2000xbf16>, vector<2000x500xbf16>, vector<2x500xf32> -> vector<2x500xf32>
    %c0_3 = arith.constant 0 : index
    %c0_4 = arith.constant 0 : index
    %3 = vector.load %arg3[%c0_3, %c0_4] : memref<1x500xf32, #tpu.memory_space<vmem>>, vector<1x500xf32>
    %4 = vector.broadcast %3 : vector<1x500xf32> to vector<2x500xf32>
    %5 = arith.addf %2, %4 : vector<2x500xf32>
    %cst_5 = arith.constant 0.000000e+00 : f32
    %6 = vector.broadcast %cst_5 : f32 to vector<2x500xf32>
    %7 = arith.maximumf %5, %6 : vector<2x500xf32>
    %8 = arith.truncf %7 : vector<2x500xf32> to vector<2x500xbf16>
    %c0_6 = arith.constant 0 : index
    %c0_7 = arith.constant 0 : index
    %9 = vector.load %arg4[%c0_6, %c0_7] : memref<500x10xbf16, #tpu.memory_space<vmem>>, vector<500x10xbf16>
    %cst_8 = arith.constant dense<0.000000e+00> : vector<2x10xf32>
    %10 = tpu.matmul %8, %9, %cst_8 {dimension_numbers = #tpu.dot_dimension_numbers<[1], [0], [0], [1], [0, 0, 1, 1], [], []>} : vector<2x500xbf16>, vector<500x10xbf16>, vector<2x10xf32> -> vector<2x10xf32>
    %c0_9 = arith.constant 0 : index
    %c0_10 = arith.constant 0 : index
    %11 = vector.load %arg5[%c0_9, %c0_10] : memref<1x10xf32, #tpu.memory_space<vmem>>, vector<1x10xf32>
    %12 = vector.broadcast %11 : vector<1x10xf32> to vector<2x10xf32>
    %13 = arith.addf %10, %12 : vector<2x10xf32>
    %cst_11 = arith.constant dense<0xFF800000> : vector<2xf32>
    %14 = vector.multi_reduction <maximumf>, %13, %cst_11 [1] : vector<2x10xf32> to vector<2xf32>
    %15 = vector.shape_cast %14 : vector<2xf32> to vector<2x1xf32>
    %16 = vector.broadcast %15 : vector<2x1xf32> to vector<2x10xf32>
    %17 = arith.subf %13, %16 : vector<2x10xf32>
    %18 = math.exp %17 : vector<2x10xf32>
    %cst_12 = arith.constant dense<0.000000e+00> : vector<2xf32>
    %19 = vector.multi_reduction <add>, %18, %cst_12 [1] : vector<2x10xf32> to vector<2xf32>
    %20 = vector.shape_cast %19 : vector<2xf32> to vector<2x1xf32>
    %21 = math.log %20 : vector<2x1xf32>
    %22 = vector.broadcast %21 : vector<2x1xf32> to vector<2x10xf32>
    %23 = arith.subf %17, %22 : vector<2x10xf32>
    %c0_13 = arith.constant 0 : index
    %c0_14 = arith.constant 0 : index
    %24 = vector.load %arg6[%c0_13, %c0_14] : memref<2x10xf32, #tpu.memory_space<vmem>>, vector<2x10xf32>
    tpu.vector_store %arg6[%c0_13, %c0_14], %23 {strides = array<i32>} : memref<2x10xf32, #tpu.memory_space<vmem>>, vector<2x10xf32>,
    return
  }
  func.func @transform_0(%arg0: i32) -> (i32, i32) {
    %c0_i32 = arith.constant 0 : i32
    %c0_i32_0 = arith.constant 0 : i32
    return %arg0, %c0_i32 : i32, i32
  }
  func.func @transform_1(%arg0: i32) -> (i32, i32) {
    %c0_i32 = arith.constant 0 : i32
    %c0_i32_0 = arith.constant 0 : i32
    %c0_i32_1 = arith.constant 0 : i32
    return %c0_i32, %c0_i32_0 : i32, i32
  }
  func.func @transform_2(%arg0: i32) -> (i32, i32) {
    %c0_i32 = arith.constant 0 : i32
    %c0_i32_0 = arith.constant 0 : i32
    %c0_i32_1 = arith.constant 0 : i32
    return %c0_i32, %c0_i32_0 : i32, i32
  }
  func.func @transform_3(%arg0: i32) -> (i32, i32) {
    %c0_i32 = arith.constant 0 : i32
    %c0_i32_0 = arith.constant 0 : i32
    %c0_i32_1 = arith.constant 0 : i32
    return %c0_i32, %c0_i32_0 : i32, i32
  }
  func.func @transform_4(%arg0: i32) -> (i32, i32) {
    %c0_i32 = arith.constant 0 : i32
    %c0_i32_0 = arith.constant 0 : i32
    %c0_i32_1 = arith.constant 0 : i32
    return %c0_i32, %c0_i32_0 : i32, i32
  }
  func.func @transform_5(%arg0: i32) -> (i32, i32) {
    %c0_i32 = arith.constant 0 : i32
    %c0_i32_0 = arith.constant 0 : i32
    return %arg0, %c0_i32 : i32, i32
  }
}

</mosaic_0001>

<llo_original>
// kernel: convnet_forward.4
$region0: #{convnet_forward.4}
  #allocation0 [shape = 'u32[]', space=smem, size = 0x4, offset = 0x4, fixed_abs, tag = 'smem constant byte address 0x4 - core index']
  #allocation1 [shape = 'u32[144,128]{1,0:T(1,128)}', space=vmem, size = 0x12000, scoped, tag = 'internal scratch']
  %s0 = inlined_call_operand.vmem [shape: bf16[10,25], index: 0, kind: input, shape index: {}]
  %s1 = inlined_call_operand.vmem [shape: f32[10,1], index: 1, kind: input, shape index: {}]
  %s2 = inlined_call_operand.vmem [shape: bf16[25,1152], index: 2, kind: input, shape index: {}]
  %s3 = inlined_call_operand.vmem [shape: bf16[10,1152], index: 3, kind: output, shape index: {}]
  %s4 = sld [smem:[#allocation0]]
  $region173: #{convnet_forward.4} parent=0
    _
  %s6 = ssub.s32 1, %s4
  %s7 = scalar_select 0, %s6, %s4
  $region1: #{convnet_forward.4} parent=0
    #allocation2 [shape = 'u8[65536]{0}', space=vmem, size = 0x10000, scoped, tag = 'input window, operand 2']
    #allocation3 [shape = 'u8[32768]{0}', space=vmem, size = 0x8000, scoped, tag = 'output window, operand 0']
    loop: start=0, step=1, limit=5
    $region2: #{convnet_forward.4} parent=1 // loop_pre_header
      _
    $region3: #{convnet_forward.4} parent=1 // loop_header
      %s9 = sphi 0, %s13
      %p10 = scmp.ge.s32.totalorder %s9, 5
      %s17 = sphi 0, %s17
      %s19 = sphi 0, %s17
      %s20 = sphi 0, %s19
      %s34 = sphi 0, %s20
      %s38 = sphi 0, %s38
      %s40 = sphi 0, %s38
      %s41 = sphi 0, %s40
      %s55 = sphi 0, %s41
      %s61 = sphi 0, %s63
      %s64 = sphi 0, %s61
      %s65 = sphi 0, %s64
      %s81 = sphi 0, %s65
      %s87 = sphi 0, %s89
      %s90 = sphi 0, %s87
      %s91 = sphi 0, %s90
      %s107 = sphi 0, %s91
    $region4: #{convnet_forward.4} parent=1 // loop_header_branch
      %12 = sbr.rel (%p10) target = $region8
    $region5: #{convnet_forward.4} parent=1 // loop_body
      %s14 = ssub.s32 %s9, 1
      %s15 = ssub.s32 %s9, 2
      %s16 = sadd.s32 %s9, 1
      %s18 = sadd.s32 %s17, 1
      %p21 = scmp.eq.s32.totalorder %s9, 2
      %p22 = scmp.ne.s32.totalorder %s17, %s19
      %p23 = scmp.eq.s32.totalorder %s9, 0
      %p24 = por %p22, %p23
      %p25 = scmp.ne.s32.totalorder %s17, %s19
      %p26 = scmp.eq.s32.totalorder %s14, 2
      %p27 = por %p25, %p26
      %p28 = scmp.ne.s32.totalorder %s19, %s20
      %p29 = scmp.eq.s32.totalorder %s14, 0
      %p30 = por %p28, %p29
      %p31 = scmp.ne.s32.totalorder %s19, %s20
      %p32 = scmp.eq.s32.totalorder %s15, 2
      %p33 = por %p31, %p32
      %p35 = scmp.ne.s32.totalorder %s20, %s34
      %p36 = scmp.eq.s32.totalorder %s15, 0
      %p37 = por %p35, %p36
      %s39 = sadd.s32 %s38, 1
      %p42 = scmp.eq.s32.totalorder %s9, 2
      %p43 = scmp.ne.s32.totalorder %s38, %s40
      %p44 = scmp.eq.s32.totalorder %s9, 0
      %p45 = por %p43, %p44
      %p46 = scmp.ne.s32.totalorder %s38, %s40
      %p47 = scmp.eq.s32.totalorder %s14, 2
      %p48 = por %p46, %p47
      %p49 = scmp.ne.s32.totalorder %s40, %s41
      %p50 = scmp.eq.s32.totalorder %s14, 0
      %p51 = por %p49, %p50
      %p52 = scmp.ne.s32.totalorder %s40, %s41
      %p53 = scmp.eq.s32.totalorder %s15, 2
      %p54 = por %p52, %p53
      %p56 = scmp.ne.s32.totalorder %s41, %s55
      %p57 = scmp.eq.s32.totalorder %s15, 0
      %p58 = por %p56, %p57
      %s59 = ssub.s32 %s9, %s16
      %p60 = scmp.eq.s32.totalorder %s59, 0
      %s62 = sadd.s32 %s61, 1
      %s63 = scalar_select %p60, %s61, %s62
      %p66 = pneg %p60
      %p67 = scmp.eq.s32.totalorder %s9, 2
      %p68 = por %p66, %p67
      %p69 = scmp.ne.s32.totalorder %s61, %s64
      %p70 = scmp.eq.s32.totalorder %s9, 0
      %p71 = por %p69, %p70
      %p72 = scmp.ne.s32.totalorder %s61, %s64
      %p73 = scmp.eq.s32.totalorder %s14, 2
      %p74 = por %p72, %p73
      %p75 = scmp.ne.s32.totalorder %s64, %s65
      %p76 = scmp.eq.s32.totalorder %s14, 0
      %p77 = por %p75, %p76
      %p78 = scmp.ne.s32.totalorder %s64, %s65
      %p79 = scmp.eq.s32.totalorder %s15, 2
      %p80 = por %p78, %p79
      %p82 = scmp.ne.s32.totalorder %s65, %s81
      %p83 = scmp.eq.s32.totalorder %s15, 0
      %p84 = por %p82, %p83
      %s85 = ssub.s32 %s9, %s16
      %p86 = scmp.eq.s32.totalorder %s85, 0
      %s88 = sadd.s32 %s87, 1
      %s89 = scalar_select %p86, %s87, %s88
      %p92 = pneg %p86
      %p93 = scmp.eq.s32.totalorder %s9, 2
      %p94 = por %p92, %p93
      %p95 = scmp.ne.s32.totalorder %s87, %s90
      %p96 = scmp.eq.s32.totalorder %s9, 0
      %p97 = por %p95, %p96
      %p98 = scmp.ne.s32.totalorder %s87, %s90
      %p99 = scmp.eq.s32.totalorder %s14, 2
      %p100 = por %p98, %p99
      %p101 = scmp.ne.s32.totalorder %s90, %s91
      %p102 = scmp.eq.s32.totalorder %s14, 0
      %p103 = por %p101, %p102
      %p104 = scmp.ne.s32.totalorder %s90, %s91
      %p105 = scmp.eq.s32.totalorder %s15, 2
      %p106 = por %p104, %p105
      %p108 = scmp.ne.s32.totalorder %s91, %s107
      %p109 = scmp.eq.s32.totalorder %s15, 0
      %p110 = por %p108, %p109
      %p111 = scmp.le.s32.totalorder 1, %s9
      %p112 = scmp.lt.s32.totalorder %s9, 4
      %p113 = pnand %p111, %p112
      %p114 = pneg %p113
      // Predicated region
      $region9: #{convnet_forward.4} parent=5 // pred_check
        _
      $region10: #{convnet_forward.4} parent=5 // pred_check_branch
        %116 = sbr.rel (%p113) target = $region12
      $region11: #{convnet_forward.4} parent=5 // pred_region
        %s117 = ssub.s32 %s9, 1
        // Predicated region
        $region13: #{convnet_forward.4} parent=11 // pred_check
          %p118 = pneg %p30
        $region14: #{convnet_forward.4} parent=11 // pred_check_branch
          %120 = sbr.rel (%p118) target = $region16
        $region15: #{convnet_forward.4} parent=11 // pred_region
          _
        $region16: #{convnet_forward.4} parent=11 // pred_fallthru
          _
        // Predicated region
        $region17: #{convnet_forward.4} parent=11 // pred_check
          %p121 = pneg %p51
        $region18: #{convnet_forward.4} parent=11 // pred_check_branch
          %123 = sbr.rel (%p121) target = $region20
        $region19: #{convnet_forward.4} parent=11 // pred_region
          _
        $region20: #{convnet_forward.4} parent=11 // pred_fallthru
          _
      $region12: #{convnet_forward.4} parent=5 // pred_fallthru
        _
      %p124 = scmp.lt.s32.totalorder %s9, 3
      // Predicated region
      $region21: #{convnet_forward.4} parent=5 // pred_check
        %p125 = pneg %p124
      $region22: #{convnet_forward.4} parent=5 // pred_check_branch
        %127 = sbr.rel (%p125) target = $region24
      $region23: #{convnet_forward.4} parent=5 // pred_region
        // Predicated region
        $region25: #{convnet_forward.4} parent=23 // pred_check
          %p128 = pneg %p71
        $region26: #{convnet_forward.4} parent=23 // pred_check_branch
          %130 = sbr.rel (%p128) target = $region28
        $region27: #{convnet_forward.4} parent=23 // pred_region
          %s131 = sand.u32 %s61, 1
          %s132 = sand.u32 %s61, 1
          %s133 = smul.addr %s132, 64
          %s134 = scalar_lea.vmem [#allocation2], %s133
          %s135 = smul.u32 4, %s9
          %s136 = ssub.s32 9, %s135
          %p137 = scmp.lt.s32.totalorder %s136, 4
          %s138 = scalar_select %p137, %s136, 4
          %s139 = smul.u32 256, %s138
          %p140 = scmp.ne.s32.totalorder 0, %s139
          %s141 = smul.addr %s135, 4
          %s142 = scalar_lea.vmem %s2, %s141
          %s143 = smul.u32 %s138, 4
          // Predicated region
          $region29: #{convnet_forward.4} parent=27 // pred_check
            %p144 = pneg %p140
          $region30: #{convnet_forward.4} parent=27 // pred_check_branch
            %146 = sbr.rel (%p144) target = $region32
          $region31: #{convnet_forward.4} parent=27 // pred_region
            %p147 = scmp.lt.u32.totalorder %s143, 8
            %p148 = pneg %p147
            // Predicated region
            $region33: #{convnet_forward.4} parent=31 // pred_check
              _
            $region34: #{convnet_forward.4} parent=31 // pred_check_branch
              %150 = sbr.rel (%p147) target = $region36
            $region35: #{convnet_forward.4} parent=31 // pred_region
              %s172 = sand.u32 %s143, 7
              %p173 = scmp.eq.s32.totalorder %s172, 0
              // Predicated region
              $region48: #{convnet_forward.4} parent=35 // pred_check
                %p174 = pneg %p173
              $region49: #{convnet_forward.4} parent=35 // pred_check_branch
                %176 = sbr.rel (%p174) target = $region51
              $region50: #{convnet_forward.4} parent=35 // pred_region
                %s177 = sshrl.u32 %s143, 3
                %s178 = sshrl.u32 %s177, 4
                // While loop
                $region52: #{convnet_forward.4} parent=50 // loop_pre_header
                  _
                $region53: #{convnet_forward.4} parent=50 // loop_header
                  %s182 = sphi 0, %s184
                  %p183 = scmp.ge.s32.totalorder %s182, %s178
                  %s187 = sphi 0, %s320
                  %s188 = sphi %s142, %s323
                  %s189 = sphi %s134, %s324
                $region54: #{convnet_forward.4} parent=50 // loop_header_branch
                  %186 = sbr.rel (%p183) target = $region58
                $region55: #{convnet_forward.4} parent=50 // loop_body
                  %v190 = vld [vmem:[%s188] sm:$0xff]
                  %191 = vst [vmem:[%s189] sm:$0xff] %v190
                  %v192 = vld [vmem:[%s188 + $0x8] sm:$0xff]
                  %193 = vst [vmem:[%s189 + $0x8] sm:$0xff] %v192
                  %v194 = vld [vmem:[%s188 + $0x10] sm:$0xff]
                  %195 = vst [vmem:[%s189 + $0x10] sm:$0xff] %v194
                  %v196 = vld [vmem:[%s188 + $0x18] sm:$0xff]
                  %197 = vst [vmem:[%s189 + $0x18] sm:$0xff] %v196
                  %v198 = vld [vmem:[%s188 + $0x20] sm:$0xff]
                  %199 = vst [vmem:[%s189 + $0x20] sm:$0xff] %v198
                  %v200 = vld [vmem:[%s188 + $0x28] sm:$0xff]
                  %201 = vst [vmem:[%s189 + $0x28] sm:$0xff] %v200
                  %v202 = vld [vmem:[%s188 + $0x30] sm:$0xff]
                  %203 = vst [vmem:[%s189 + $0x30] sm:$0xff] %v202
                  %v204 = vld [vmem:[%s188 + $0x38] sm:$0xff]
                  %205 = vst [vmem:[%s189 + $0x38] sm:$0xff] %v204
                  %v206 = vld [vmem:[%s188 + $0x40] sm:$0xff]
                  %207 = vst [vmem:[%s189 + $0x40] sm:$0xff] %v206
                  %v208 = vld [vmem:[%s188 + $0x48] sm:$0xff]
                  %209 = vst [vmem:[%s189 + $0x48] sm:$0xff] %v208
                  %v210 = vld [vmem:[%s188 + $0x50] sm:$0xff]
                  %211 = vst [vmem:[%s189 + $0x50] sm:$0xff] %v210
                  %v212 = vld [vmem:[%s188 + $0x58] sm:$0xff]
                  %213 = vst [vmem:[%s189 + $0x58] sm:$0xff] %v212
                  %v214 = vld [vmem:[%s188 + $0x60] sm:$0xff]
                  %215 = vst [vmem:[%s189 + $0x60] sm:$0xff] %v214
                  %v216 = vld [vmem:[%s188 + $0x68] sm:$0xff]
                  %217 = vst [vmem:[%s189 + $0x68] sm:$0xff] %v216
                  %v218 = vld [vmem:[%s188 + $0x70] sm:$0xff]
                  %219 = vst [vmem:[%s189 + $0x70] sm:$0xff] %v218
                  %v220 = vld [vmem:[%s188 + $0x78] sm:$0xff]
                  %221 = vst [vmem:[%s189 + $0x78] sm:$0xff] %v220
                  %v222 = vld [vmem:[%s188 + $0x24] sm:$0xff]
                  %223 = vst [vmem:[%s189 + $0x10] sm:$0xff] %v222
                  %v224 = vld [vmem:[%s188 + $0x2c] sm:$0xff]
                  %225 = vst [vmem:[%s189 + $0x18] sm:$0xff] %v224
                  %v226 = vld [vmem:[%s188 + $0x34] sm:$0xff]
                  %227 = vst [vmem:[%s189 + $0x20] sm:$0xff] %v226
                  %v228 = vld [vmem:[%s188 + $0x3c] sm:$0xff]
                  %229 = vst [vmem:[%s189 + $0x28] sm:$0xff] %v228
                  %v230 = vld [vmem:[%s188 + $0x44] sm:$0xff]
                  %231 = vst [vmem:[%s189 + $0x30] sm:$0xff] %v230
                  %v232 = vld [vmem:[%s188 + $0x4c] sm:$0xff]
                  %233 = vst [vmem:[%s189 + $0x38] sm:$0xff] %v232
                  %v234 = vld [vmem:[%s188 + $0x54] sm:$0xff]
                  %235 = vst [vmem:[%s189 + $0x40] sm:$0xff] %v234
                  %v236 = vld [vmem:[%s188 + $0x5c] sm:$0xff]
                  %237 = vst [vmem:[%s189 + $0x48] sm:$0xff] %v236
                  %v238 = vld [vmem:[%s188 + $0x64] sm:$0xff]
                  %239 = vst [vmem:[%s189 + $0x50] sm:$0xff] %v238
                  %v240 = vld [vmem:[%s188 + $0x6c] sm:$0xff]
                  %241 = vst [vmem:[%s189 + $0x58] sm:$0xff] %v240
                  %v242 = vld [vmem:[%s188 + $0x74] sm:$0xff]
                  %243 = vst [vmem:[%s189 + $0x60] sm:$0xff] %v242
                  %v244 = vld [vmem:[%s188 + $0x7c] sm:$0xff]
                  %245 = vst [vmem:[%s189 + $0x68] sm:$0xff] %v244
                  %v246 = vld [vmem:[%s188 + $0x84] sm:$0xff]
                  %247 = vst [vmem:[%s189 + $0x70] sm:$0xff] %v246
                  %v248 = vld [vmem:[%s188 + $0x8c] sm:$0xff]
                  %249 = vst [vmem:[%s189 + $0x78] sm:$0xff] %v248
                  %v250 = vld [vmem:[%s188 + $0x94] sm:$0xff]
                  %251 = vst [vmem:[%s189 + $0x80] sm:$0xff] %v250
                  %v252 = vld [vmem:[%s188 + $0x9c] sm:$0xff]
                  %253 = vst [vmem:[%s189 + $0x88] sm:$0xff] %v252
                  %v254 = vld [vmem:[%s188 + $0x48] sm:$0xff]
                  %255 = vst [vmem:[%s189 + $0x20] sm:$0xff] %v254
                  %v256 = vld [vmem:[%s188 + $0x50] sm:$0xff]
                  %257 = vst [vmem:[%s189 + $0x28] sm:$0xff] %v256
                  %v258 = vld [vmem:[%s188 + $0x58] sm:$0xff]
                  %259 = vst [vmem:[%s189 + $0x30] sm:$0xff] %v258
                  %v260 = vld [vmem:[%s188 + $0x60] sm:$0xff]
                  %261 = vst [vmem:[%s189 + $0x38] sm:$0xff] %v260
                  %v262 = vld [vmem:[%s188 + $0x68] sm:$0xff]
                  %263 = vst [vmem:[%s189 + $0x40] sm:$0xff] %v262
                  %v264 = vld [vmem:[%s188 + $0x70] sm:$0xff]
                  %265 = vst [vmem:[%s189 + $0x48] sm:$0xff] %v264
                  %v266 = vld [vmem:[%s188 + $0x78] sm:$0xff]
                  %267 = vst [vmem:[%s189 + $0x50] sm:$0xff] %v266
                  %v268 = vld [vmem:[%s188 + $0x80] sm:$0xff]
                  %269 = vst [vmem:[%s189 + $0x58] sm:$0xff] %v268
                  %v270 = vld [vmem:[%s188 + $0x88] sm:$0xff]
                  %271 = vst [vmem:[%s189 + $0x60] sm:$0xff] %v270
                  %v272 = vld [vmem:[%s188 + $0x90] sm:$0xff]
                  %273 = vst [vmem:[%s189 + $0x68] sm:$0xff] %v272
                  %v274 = vld [vmem:[%s188 + $0x98] sm:$0xff]
                  %275 = vst [vmem:[%s189 + $0x70] sm:$0xff] %v274
                  %v276 = vld [vmem:[%s188 + $0xa0] sm:$0xff]
                  %277 = vst [vmem:[%s189 + $0x78] sm:$0xff] %v276
                  %v278 = vld [vmem:[%s188 + $0xa8] sm:$0xff]
                  %279 = vst [vmem:[%s189 + $0x80] sm:$0xff] %v278
                  %v280 = vld [vmem:[%s188 + $0xb0] sm:$0xff]
                  %281 = vst [vmem:[%s189 + $0x88] sm:$0xff] %v280
                  %v282 = vld [vmem:[%s188 + $0xb8] sm:$0xff]
                  %283 = vst [vmem:[%s189 + $0x90] sm:$0xff] %v282
                  %v284 = vld [vmem:[%s188 + $0xc0] sm:$0xff]
                  %285 = vst [vmem:[%s189 + $0x98] sm:$0xff] %v284
                  %v286 = vld [vmem:[%s188 + $0x6c] sm:$0xff]
                  %287 = vst [vmem:[%s189 + $0x30] sm:$0xff] %v286
                  %v288 = vld [vmem:[%s188 + $0x74] sm:$0xff]
                  %289 = vst [vmem:[%s189 + $0x38] sm:$0xff] %v288
                  %v290 = vld [vmem:[%s188 + $0x7c] sm:$0xff]
                  %291 = vst [vmem:[%s189 + $0x40] sm:$0xff] %v290
                  %v292 = vld [vmem:[%s188 + $0x84] sm:$0xff]
                  %293 = vst [vmem:[%s189 + $0x48] sm:$0xff] %v292
                  %v294 = vld [vmem:[%s188 + $0x8c] sm:$0xff]
                  %295 = vst [vmem:[%s189 + $0x50] sm:$0xff] %v294
                  %v296 = vld [vmem:[%s188 + $0x94] sm:$0xff]
                  %297 = vst [vmem:[%s189 + $0x58] sm:$0xff] %v296
                  %v298 = vld [vmem:[%s188 + $0x9c] sm:$0xff]
                  %299 = vst [vmem:[%s189 + $0x60] sm:$0xff] %v298
                  %v300 = vld [vmem:[%s188 + $0xa4] sm:$0xff]
                  %301 = vst [vmem:[%s189 + $0x68] sm:$0xff] %v300
                  %v302 = vld [vmem:[%s188 + $0xac] sm:$0xff]
                  %303 = vst [vmem:[%s189 + $0x70] sm:$0xff] %v302
                  %v304 = vld [vmem:[%s188 + $0xb4] sm:$0xff]
                  %305 = vst [vmem:[%s189 + $0x78] sm:$0xff] %v304
                  %v306 = vld [vmem:[%s188 + $0xbc] sm:$0xff]
                  %307 = vst [vmem:[%s189 + $0x80] sm:$0xff] %v306
                  %v308 = vld [vmem:[%s188 + $0xc4] sm:$0xff]
                  %309 = vst [vmem:[%s189 + $0x88] sm:$0xff] %v308
                  %v310 = vld [vmem:[%s188 + $0xcc] sm:$0xff]
                  %311 = vst [vmem:[%s189 + $0x90] sm:$0xff] %v310
                  %v312 = vld [vmem:[%s188 + $0xd4] sm:$0xff]
                  %313 = vst [vmem:[%s189 + $0x98] sm:$0xff] %v312
                  %v314 = vld [vmem:[%s188 + $0xdc] sm:$0xff]
                  %315 = vst [vmem:[%s189 + $0xa0] sm:$0xff] %v314
                  %v316 = vld [vmem:[%s188 + $0xe4] sm:$0xff]
                  %317 = vst [vmem:[%s189 + $0xa8] sm:$0xff] %v316
                  %s318 = sadd.s32 1, %s187
                  %p319 = scmp.ge.s32.totalorder %s318, %s178
                  %s320 = scalar_select %p319, 0, %s318
                  %s321 = smul.u32 %s320, 128
                  %s322 = smul.u32 %s320, 128
                  %s323 = scalar_lea.vmem %s142, %s321
                  %s324 = scalar_lea.vmem %s134, %s322 [#allocation2]
                $region56: #{convnet_forward.4} parent=50 // loop_footer
                  %s184 = sadd.s32 %s182, 1
                $region57: #{convnet_forward.4} parent=50 // loop_footer_branch
                  %181 = sbr.rel target = $region53
                $region58: #{convnet_forward.4} parent=50 // loop_exit
                  _
                %s325 = sshrl.u32 %s177, 4
                %s326 = sand.u32 %s177, 15
                %s327 = smul.u32 %s325, 16
                %s328 = smul.u32 128, %s327
                %s329 = sshra.s32 %s328, 4
                %s330 = scalar_lea.vmem %s142, %s329
                %s331 = smul.u32 128, %s327
                %s332 = sshra.s32 %s331, 4
                %s333 = scalar_lea.vmem %s134, %s332 [#allocation2]
                // While loop
                $region59: #{convnet_forward.4} parent=50 // loop_pre_header
                  _
                $region60: #{convnet_forward.4} parent=50 // loop_header
                  %s337 = sphi 0, %s339
                  %p338 = scmp.ge.s32.totalorder %s337, %s326
                  %s342 = sphi 0, %s355
                  %s343 = sphi %s330, %s358
                  %s344 = sphi %s333, %s359
                $region61: #{convnet_forward.4} parent=50 // loop_header_branch
                  %341 = sbr.rel (%p338) target = $region65
                $region62: #{convnet_forward.4} parent=50 // loop_body
                  %v345 = vld [vmem:[%s343] sm:$0xff]
                  %346 = vst [vmem:[%s344] sm:$0xff] %v345
                  %v347 = vld [vmem:[%s343 + $0x24] sm:$0xff]
                  %348 = vst [vmem:[%s344 + $0x10] sm:$0xff] %v347
                  %v349 = vld [vmem:[%s343 + $0x48] sm:$0xff]
                  %350 = vst [vmem:[%s344 + $0x20] sm:$0xff] %v349
                  %v351 = vld [vmem:[%s343 + $0x6c] sm:$0xff]
                  %352 = vst [vmem:[%s344 + $0x30] sm:$0xff] %v351
                  %s353 = sadd.s32 1, %s342
                  %p354 = scmp.ge.s32.totalorder %s353, %s326
                  %s355 = scalar_select %p354, 0, %s353
                  %s356 = smul.u32 %s355, 8
                  %s357 = smul.u32 %s355, 8
                  %s358 = scalar_lea.vmem %s330, %s356
                  %s359 = scalar_lea.vmem %s333, %s357 [#allocation2]
                $region63: #{convnet_forward.4} parent=50 // loop_footer
                  %s339 = sadd.s32 %s337, 1
                $region64: #{convnet_forward.4} parent=50 // loop_footer_branch
                  %336 = sbr.rel target = $region60
                $region65: #{convnet_forward.4} parent=50 // loop_exit
                  _
              $region51: #{convnet_forward.4} parent=35 // pred_fallthru
                _
              %p360 = pneg %p173
              // Predicated region
              $region66: #{convnet_forward.4} parent=35 // pred_check
                _
              $region67: #{convnet_forward.4} parent=35 // pred_check_branch
                %362 = sbr.rel (%p173) target = $region69
              $region68: #{convnet_forward.4} parent=35 // pred_region
                %s363 = sand.u32 %s143, 7
                %s364 = ssub.s32 %s143, %s363
                %s365 = scalar_lea.vmem %s142, %s364
                %s366 = ssub.s32 %s143, %s363
                %s367 = scalar_lea.vmem %s134, %s366 [#allocation2]
                %s368 = sshrl.u32 %s143, 3
                %s369 = sshrl.u32 %s368, 4
                // While loop
                $region70: #{convnet_forward.4} parent=68 // loop_pre_header
                  _
                $region71: #{convnet_forward.4} parent=68 // loop_header
                  %s373 = sphi 0, %s375
                  %p374 = scmp.ge.s32.totalorder %s373, %s369
                  %s378 = sphi 0, %s511
                  %s379 = sphi %s142, %s514
                  %s380 = sphi %s134, %s515
                $region72: #{convnet_forward.4} parent=68 // loop_header_branch
                  %377 = sbr.rel (%p374) target = $region76
                $region73: #{convnet_forward.4} parent=68 // loop_body
                  %v381 = vld [vmem:[%s379] sm:$0xff]
                  %382 = vst [vmem:[%s380] sm:$0xff] %v381
                  %v383 = vld [vmem:[%s379 + $0x8] sm:$0xff]
                  %384 = vst [vmem:[%s380 + $0x8] sm:$0xff] %v383
                  %v385 = vld [vmem:[%s379 + $0x10] sm:$0xff]
                  %386 = vst [vmem:[%s380 + $0x10] sm:$0xff] %v385
                  %v387 = vld [vmem:[%s379 + $0x18] sm:$0xff]
                  %388 = vst [vmem:[%s380 + $0x18] sm:$0xff] %v387
                  %v389 = vld [vmem:[%s379 + $0x20] sm:$0xff]
                  %390 = vst [vmem:[%s380 + $0x20] sm:$0xff] %v389
                  %v391 = vld [vmem:[%s379 + $0x28] sm:$0xff]
                  %392 = vst [vmem:[%s380 + $0x28] sm:$0xff] %v391
                  %v393 = vld [vmem:[%s379 + $0x30] sm:$0xff]
                  %394 = vst [vmem:[%s380 + $0x30] sm:$0xff] %v393
                  %v395 = vld [vmem:[%s379 + $0x38] sm:$0xff]
                  %396 = vst [vmem:[%s380 + $0x38] sm:$0xff] %v395
                  %v397 = vld [vmem:[%s379 + $0x40] sm:$0xff]
                  %398 = vst [vmem:[%s380 + $0x40] sm:$0xff] %v397
                  %v399 = vld [vmem:[%s379 + $0x48] sm:$0xff]
                  %400 = vst [vmem:[%s380 + $0x48] sm:$0xff] %v399
                  %v401 = vld [vmem:[%s379 + $0x50] sm:$0xff]
                  %402 = vst [vmem:[%s380 + $0x50] sm:$0xff] %v401
                  %v403 = vld [vmem:[%s379 + $0x58] sm:$0xff]
                  %404 = vst [vmem:[%s380 + $0x58] sm:$0xff] %v403
                  %v405 = vld [vmem:[%s379 + $0x60] sm:$0xff]
                  %406 = vst [vmem:[%s380 + $0x60] sm:$0xff] %v405
                  %v407 = vld [vmem:[%s379 + $0x68] sm:$0xff]
                  %408 = vst [vmem:[%s380 + $0x68] sm:$0xff] %v407
                  %v409 = vld [vmem:[%s379 + $0x70] sm:$0xff]
                  %410 = vst [vmem:[%s380 + $0x70] sm:$0xff] %v409
                  %v411 = vld [vmem:[%s379 + $0x78] sm:$0xff]
                  %412 = vst [vmem:[%s380 + $0x78] sm:$0xff] %v411
                  %v413 = vld [vmem:[%s379 + $0x24] sm:$0xff]
                  %414 = vst [vmem:[%s380 + $0x10] sm:$0xff] %v413
                  %v415 = vld [vmem:[%s379 + $0x2c] sm:$0xff]
                  %416 = vst [vmem:[%s380 + $0x18] sm:$0xff] %v415
                  %v417 = vld [vmem:[%s379 + $0x34] sm:$0xff]
                  %418 = vst [vmem:[%s380 + $0x20] sm:$0xff] %v417
                  %v419 = vld [vmem:[%s379 + $0x3c] sm:$0xff]
                  %420 = vst [vmem:[%s380 + $0x28] sm:$0xff] %v419
                  %v421 = vld [vmem:[%s379 + $0x44] sm:$0xff]
                  %422 = vst [vmem:[%s380 + $0x30] sm:$0xff] %v421
                  %v423 = vld [vmem:[%s379 + $0x4c] sm:$0xff]
                  %424 = vst [vmem:[%s380 + $0x38] sm:$0xff] %v423
                  %v425 = vld [vmem:[%s379 + $0x54] sm:$0xff]
                  %426 = vst [vmem:[%s380 + $0x40] sm:$0xff] %v425
                  %v427 = vld [vmem:[%s379 + $0x5c] sm:$0xff]
                  %428 = vst [vmem:[%s380 + $0x48] sm:$0xff] %v427
                  %v429 = vld [vmem:[%s379 + $0x64] sm:$0xff]
                  %430 = vst [vmem:[%s380 + $0x50] sm:$0xff] %v429
                  %v431 = vld [vmem:[%s379 + $0x6c] sm:$0xff]
                  %432 = vst [vmem:[%s380 + $0x58] sm:$0xff] %v431
                  %v433 = vld [vmem:[%s379 + $0x74] sm:$0xff]
                  %434 = vst [vmem:[%s380 + $0x60] sm:$0xff] %v433
                  %v435 = vld [vmem:[%s379 + $0x7c] sm:$0xff]
                  %436 = vst [vmem:[%s380 + $0x68] sm:$0xff] %v435
                  %v437 = vld [vmem:[%s379 + $0x84] sm:$0xff]
                  %438 = vst [vmem:[%s380 + $0x70] sm:$0xff] %v437
                  %v439 = vld [vmem:[%s379 + $0x8c] sm:$0xff]
                  %440 = vst [vmem:[%s380 + $0x78] sm:$0xff] %v439
                  %v441 = vld [vmem:[%s379 + $0x94] sm:$0xff]
                  %442 = vst [vmem:[%s380 + $0x80] sm:$0xff] %v441
                  %v443 = vld [vmem:[%s379 + $0x9c] sm:$0xff]
                  %444 = vst [vmem:[%s380 + $0x88] sm:$0xff] %v443
                  %v445 = vld [vmem:[%s379 + $0x48] sm:$0xff]
                  %446 = vst [vmem:[%s380 + $0x20] sm:$0xff] %v445
                  %v447 = vld [vmem:[%s379 + $0x50] sm:$0xff]
                  %448 = vst [vmem:[%s380 + $0x28] sm:$0xff] %v447
                  %v449 = vld [vmem:[%s379 + $0x58] sm:$0xff]
                  %450 = vst [vmem:[%s380 + $0x30] sm:$0xff] %v449
                  %v451 = vld [vmem:[%s379 + $0x60] sm:$0xff]
                  %452 = vst [vmem:[%s380 + $0x38] sm:$0xff] %v451
                  %v453 = vld [vmem:[%s379 + $0x68] sm:$0xff]
                  %454 = vst [vmem:[%s380 + $0x40] sm:$0xff] %v453
                  %v455 = vld [vmem:[%s379 + $0x70] sm:$0xff]
                  %456 = vst [vmem:[%s380 + $0x48] sm:$0xff] %v455
                  %v457 = vld [vmem:[%s379 + $0x78] sm:$0xff]
                  %458 = vst [vmem:[%s380 + $0x50] sm:$0xff] %v457
                  %v459 = vld [vmem:[%s379 + $0x80] sm:$0xff]
                  %460 = vst [vmem:[%s380 + $0x58] sm:$0xff] %v459
                  %v461 = vld [vmem:[%s379 + $0x88] sm:$0xff]
                  %462 = vst [vmem:[%s380 + $0x60] sm:$0xff] %v461
                  %v463 = vld [vmem:[%s379 + $0x90] sm:$0xff]
                  %464 = vst [vmem:[%s380 + $0x68] sm:$0xff] %v463
                  %v465 = vld [vmem:[%s379 + $0x98] sm:$0xff]
                  %466 = vst [vmem:[%s380 + $0x70] sm:$0xff] %v465
                  %v467 = vld [vmem:[%s379 + $0xa0] sm:$0xff]
                  %468 = vst [vmem:[%s380 + $0x78] sm:$0xff] %v467
                  %v469 = vld [vmem:[%s379 + $0xa8] sm:$0xff]
                  %470 = vst [vmem:[%s380 + $0x80] sm:$0xff] %v469
                  %v471 = vld [vmem:[%s379 + $0xb0] sm:$0xff]
                  %472 = vst [vmem:[%s380 + $0x88] sm:$0xff] %v471
                  %v473 = vld [vmem:[%s379 + $0xb8] sm:$0xff]
                  %474 = vst [vmem:[%s380 + $0x90] sm:$0xff] %v473
                  %v475 = vld [vmem:[%s379 + $0xc0] sm:$0xff]
                  %476 = vst [vmem:[%s380 + $0x98] sm:$0xff] %v475
                  %v477 = vld [vmem:[%s379 + $0x6c] sm:$0xff]
                  %478 = vst [vmem:[%s380 + $0x30] sm:$0xff] %v477
                  %v479 = vld [vmem:[%s379 + $0x74] sm:$0xff]
                  %480 = vst [vmem:[%s380 + $0x38] sm:$0xff] %v479
                  %v481 = vld [vmem:[%s379 + $0x7c] sm:$0xff]
                  %482 = vst [vmem:[%s380 + $0x40] sm:$0xff] %v481
                  %v483 = vld [vmem:[%s379 + $0x84] sm:$0xff]
                  %484 = vst [vmem:[%s380 + $0x48] sm:$0xff] %v483
                  %v485 = vld [vmem:[%s379 + $0x8c] sm:$0xff]
                  %486 = vst [vmem:[%s380 + $0x50] sm:$0xff] %v485
                  %v487 = vld [vmem:[%s379 + $0x94] sm:$0xff]
                  %488 = vst [vmem:[%s380 + $0x58] sm:$0xff] %v487
                  %v489 = vld [vmem:[%s379 + $0x9c] sm:$0xff]
                  %490 = vst [vmem:[%s380 + $0x60] sm:$0xff] %v489
                  %v491 = vld [vmem:[%s379 + $0xa4] sm:$0xff]
                  %492 = vst [vmem:[%s380 + $0x68] sm:$0xff] %v491
                  %v493 = vld [vmem:[%s379 + $0xac] sm:$0xff]
                  %494 = vst [vmem:[%s380 + $0x70] sm:$0xff] %v493
                  %v495 = vld [vmem:[%s379 + $0xb4] sm:$0xff]
                  %496 = vst [vmem:[%s380 + $0x78] sm:$0xff] %v495
                  %v497 = vld [vmem:[%s379 + $0xbc] sm:$0xff]
                  %498 = vst [vmem:[%s380 + $0x80] sm:$0xff] %v497
                  %v499 = vld [vmem:[%s379 + $0xc4] sm:$0xff]
                  %500 = vst [vmem:[%s380 + $0x88] sm:$0xff] %v499
                  %v501 = vld [vmem:[%s379 + $0xcc] sm:$0xff]
                  %502 = vst [vmem:[%s380 + $0x90] sm:$0xff] %v501
                  %v503 = vld [vmem:[%s379 + $0xd4] sm:$0xff]
                  %504 = vst [vmem:[%s380 + $0x98] sm:$0xff] %v503
                  %v505 = vld [vmem:[%s379 + $0xdc] sm:$0xff]
                  %506 = vst [vmem:[%s380 + $0xa0] sm:$0xff] %v505
                  %v507 = vld [vmem:[%s379 + $0xe4] sm:$0xff]
                  %508 = vst [vmem:[%s380 + $0xa8] sm:$0xff] %v507
                  %s509 = sadd.s32 1, %s378
                  %p510 = scmp.ge.s32.totalorder %s509, %s369
                  %s511 = scalar_select %p510, 0, %s509
                  %s512 = smul.u32 %s511, 128
                  %s513 = smul.u32 %s511, 128
                  %s514 = scalar_lea.vmem %s142, %s512
                  %s515 = scalar_lea.vmem %s134, %s513 [#allocation2]
                $region74: #{convnet_forward.4} parent=68 // loop_footer
                  %s375 = sadd.s32 %s373, 1
                $region75: #{convnet_forward.4} parent=68 // loop_footer_branch
                  %372 = sbr.rel target = $region71
                $region76: #{convnet_forward.4} parent=68 // loop_exit
                  _
                %s516 = sshrl.u32 %s368, 4
                %s517 = sand.u32 %s368, 15
                %s518 = smul.u32 %s516, 16
                %s519 = smul.u32 128, %s518
                %s520 = sshra.s32 %s519, 4
                %s521 = scalar_lea.vmem %s142, %s520
                %s522 = smul.u32 128, %s518
                %s523 = sshra.s32 %s522, 4
                %s524 = scalar_lea.vmem %s134, %s523 [#allocation2]
                // While loop
                $region77: #{convnet_forward.4} parent=68 // loop_pre_header
                  _
                $region78: #{convnet_forward.4} parent=68 // loop_header
                  %s528 = sphi 0, %s530
                  %p529 = scmp.ge.s32.totalorder %s528, %s517
                  %s533 = sphi 0, %s546
                  %s534 = sphi %s521, %s549
                  %s535 = sphi %s524, %s550
                $region79: #{convnet_forward.4} parent=68 // loop_header_branch
                  %532 = sbr.rel (%p529) target = $region83
                $region80: #{convnet_forward.4} parent=68 // loop_body
                  %v536 = vld [vmem:[%s534] sm:$0xff]
                  %537 = vst [vmem:[%s535] sm:$0xff] %v536
                  %v538 = vld [vmem:[%s534 + $0x24] sm:$0xff]
                  %539 = vst [vmem:[%s535 + $0x10] sm:$0xff] %v538
                  %v540 = vld [vmem:[%s534 + $0x48] sm:$0xff]
                  %541 = vst [vmem:[%s535 + $0x20] sm:$0xff] %v540
                  %v542 = vld [vmem:[%s534 + $0x6c] sm:$0xff]
                  %543 = vst [vmem:[%s535 + $0x30] sm:$0xff] %v542
                  %s544 = sadd.s32 1, %s533
                  %p545 = scmp.ge.s32.totalorder %s544, %s517
                  %s546 = scalar_select %p545, 0, %s544
                  %s547 = smul.u32 %s546, 8
                  %s548 = smul.u32 %s546, 8
                  %s549 = scalar_lea.vmem %s521, %s547
                  %s550 = scalar_lea.vmem %s524, %s548 [#allocation2]
                $region81: #{convnet_forward.4} parent=68 // loop_footer
                  %s530 = sadd.s32 %s528, 1
                $region82: #{convnet_forward.4} parent=68 // loop_footer_branch
                  %527 = sbr.rel target = $region78
                $region83: #{convnet_forward.4} parent=68 // loop_exit
                  _
                %s551 = sshll.u32 1, %s363
                %s552 = ssub.s32 %s551, 1
                loop: start=0, step=1, limit=1
                $region84: #{convnet_forward.4} parent=68 // loop_pre_header
                  _
                $region85: #{convnet_forward.4} parent=68 // loop_header
                  %s554 = sphi 0, %s558
                  %p555 = scmp.ge.s32.totalorder %s554, 1
                  %s559 = sphi %s365, %s365
                  %s560 = sphi %s367, %s367
                $region86: #{convnet_forward.4} parent=68 // loop_header_branch
                  %557 = sbr.rel (%p555) target = $region90
                $region87: #{convnet_forward.4} parent=68 // loop_body
                  %v561 = vld [vmem:[%s559] sm:%s552]
                  %562 = vst [vmem:[%s560] sm:%s552] %v561
                  %v563 = vld [vmem:[%s559 + $0x24] sm:%s552]
                  %564 = vst [vmem:[%s560 + $0x10] sm:%s552] %v563
                  %v565 = vld [vmem:[%s559 + $0x48] sm:%s552]
                  %566 = vst [vmem:[%s560 + $0x20] sm:%s552] %v565
                  %v567 = vld [vmem:[%s559 + $0x6c] sm:%s552]
                  %568 = vst [vmem:[%s560 + $0x30] sm:%s552] %v567
                $region88: #{convnet_forward.4} parent=68 // loop_footer
                  %s558 = sadd.s32 1, %s554
                $region89: #{convnet_forward.4} parent=68 // loop_footer_branch
                  %553 = sbr.rel target = $region85
                $region90: #{convnet_forward.4} parent=68 // loop_exit
                  _
              $region69: #{convnet_forward.4} parent=35 // pred_fallthru
                _
            $region36: #{convnet_forward.4} parent=31 // pred_fallthru
              _
            // Predicated region
            $region37: #{convnet_forward.4} parent=31 // pred_check
              %p151 = pneg %p147
            $region38: #{convnet_forward.4} parent=31 // pred_check_branch
              %153 = sbr.rel (%p151) target = $region40
            $region39: #{convnet_forward.4} parent=31 // pred_region
              %s154 = sshll.u32 1, %s143
              %s155 = ssub.s32 %s154, 1
              loop: start=0, step=1, limit=1
              $region41: #{convnet_forward.4} parent=39 // loop_pre_header
                _
              $region42: #{convnet_forward.4} parent=39 // loop_header
                %s157 = sphi 0, %s161
                %p158 = scmp.ge.s32.totalorder %s157, 1
                %s162 = sphi %s142, %s142
                %s163 = sphi %s134, %s134
              $region43: #{convnet_forward.4} parent=39 // loop_header_branch
                %160 = sbr.rel (%p158) target = $region47
              $region44: #{convnet_forward.4} parent=39 // loop_body
                %v164 = vld [vmem:[%s162] sm:%s155]
                %165 = vst [vmem:[%s163] sm:%s155] %v164
                %v166 = vld [vmem:[%s162 + $0x24] sm:%s155]
                %167 = vst [vmem:[%s163 + $0x10] sm:%s155] %v166
                %v168 = vld [vmem:[%s162 + $0x48] sm:%s155]
                %169 = vst [vmem:[%s163 + $0x20] sm:%s155] %v168
                %v170 = vld [vmem:[%s162 + $0x6c] sm:%s155]
                %171 = vst [vmem:[%s163 + $0x30] sm:%s155] %v170
              $region45: #{convnet_forward.4} parent=39 // loop_footer
                %s161 = sadd.s32 1, %s157
              $region46: #{convnet_forward.4} parent=39 // loop_footer_branch
                %156 = sbr.rel target = $region42
              $region47: #{convnet_forward.4} parent=39 // loop_exit
                _
            $region40: #{convnet_forward.4} parent=31 // pred_fallthru
              _
          $region32: #{convnet_forward.4} parent=27 // pred_fallthru
            _
          %569 = vnop
        $region28: #{convnet_forward.4} parent=23 // pred_fallthru
          _
      $region24: #{convnet_forward.4} parent=5 // pred_fallthru
        _
      %p570 = scmp.le.s32.totalorder 1, %s9
      %p571 = scmp.lt.s32.totalorder %s9, 4
      %p572 = pnand %p570, %p571
      %p573 = pneg %p572
      // Predicated region
      $region91: #{convnet_forward.4} parent=5 // pred_check
        _
      $region92: #{convnet_forward.4} parent=5 // pred_check_branch
        %575 = sbr.rel (%p572) target = $region94
      $region93: #{convnet_forward.4} parent=5 // pred_region
        %s576 = ssub.s32 %s9, 1
        %s577 = sand.u32 %s64, 1
        %s578 = sand.u32 %s64, 1
        %s579 = smul.addr %s578, 64
        %s580 = scalar_lea.vmem [#allocation2], %s579
        // Predicated region
        $region95: #{convnet_forward.4} parent=93 // pred_check
          %p581 = pneg %p77
        $region96: #{convnet_forward.4} parent=93 // pred_check_branch
          %583 = sbr.rel (%p581) target = $region98
        $region97: #{convnet_forward.4} parent=93 // pred_region
          _
        $region98: #{convnet_forward.4} parent=93 // pred_fallthru
          _
        %p584 = pneg %p30
        %p585 = pneg %p27
        %p586 = pneg %p51
        %p587 = pneg %p48
        %s588 = sand.u32 %s64, 1
        %s589 = sand.u32 %s64, 1
        %s590 = smul.addr %s589, 64
        %s591 = scalar_lea.vmem [#allocation2], %s590
        %p592 = pneg %p77
        %p593 = pneg %p74
        %p594 = pneg %p103
        %p595 = pneg %p100
        %s596 = sand.u32 %s90, 1
        %s597 = sand.u32 %s90, 1
        %s598 = smul.addr %s597, 32
        %s599 = scalar_lea.vmem [#allocation3], %s598
        %s600 = smul.u32 4, %s14
        %s601 = ssub.s32 9, %s600
        %p602 = scmp.lt.s32.totalorder %s601, 4
        %s603 = scalar_select %p602, %s601, 4
        %s604 = smul.u32 256, %s603
        %s605 = smul.u32 4, %s14
        %s606 = ssub.s32 9, %s605
        %p607 = scmp.lt.s32.totalorder %s606, 4
        %s608 = scalar_select %p607, %s606, 4
        %s609 = smul.u32 128, %s608
        %v611 = vld [vmem:[%s0] sm:$0xf]
        %v612 = vld [vmem:[%s0 + $0x4] sm:$0x1]
        %v613 = vld [vmem:[%s580] sm:$0xff]
        %v614 = vld [vmem:[%s580 + $0x8] sm:$0xff]
        %v615 = vld [vmem:[%s580 + $0x10] sm:$0xff]
        %v616 = vld [vmem:[%s580 + $0x18] sm:$0xff]
        %v617 = vld [vmem:[%s580 + $0x20] sm:$0xff]
        %v618 = vld [vmem:[%s580 + $0x28] sm:$0xff]
        %v619 = vld [vmem:[%s580 + $0x30] sm:$0x11]
        %v620 = vld [vmem:[%s580 + $0x38] sm:$0x11]
        %v621 = vld [vmem:[%s1] sm:$0xff]
        %v622 = vld [vmem:[%s1 + $0x8] sm:$0x3]
        %624 = vset.pattern.permute.xlu0 0
        %625 = vperm.xlu0 %624, %v621
        %v626 = vpop.permute.xlu0 %625
        %629 = vset.pattern.permute.xlu0 0
        %630 = vperm.xlu0 %629, %v622
        %v631 = vpop.permute.xlu0 %630
        %v635 = vunpack.c.l.b16 %v611
        %v636 = vunpack.c.l.b16 %v612
        %v637 = vpack.c.b16 %v636, %v635
        %v646 = vunpack.c.l.b16 %v613
        %v647 = vunpack.c.h.b16 %v613
        %v648 = vunpack.c.l.b16 %v614
        %v649 = vunpack.c.h.b16 %v614
        %v650 = vunpack.c.l.b16 %v615
        %v651 = vunpack.c.h.b16 %v615
        %v652 = vunpack.c.l.b16 %v616
        %v653 = vunpack.c.h.b16 %v616
        %v654 = vunpack.c.l.b16 %v617
        %v655 = vunpack.c.h.b16 %v617
        %v656 = vunpack.c.l.b16 %v618
        %v657 = vunpack.c.h.b16 %v618
        %v658 = vunpack.c.l.b16 %v619
        %v659 = vunpack.c.h.b16 %v619
        %v660 = vunpack.c.l.b16 %v620
        %v661 = vunpack.c.h.b16 %v620
        %v662 = vpack.c.b16 %v650, %v646
        %v663 = vpack.c.b16 %v651, %v647
        %v664 = vpack.c.b16 %v652, %v648
        %v665 = vpack.c.b16 %v653, %v649
        %v666 = vpack.c.b16 %v658, %v654
        %v667 = vpack.c.b16 %v659, %v655
        %v668 = vpack.c.b16 %v660, %v656
        %v669 = vpack.c.b16 %v661, %v657
        %vm674 = vcmask 203776
        %v676 = vsel %vm674, %v637, 0
        %vm678 = vcmask 1043456
        %vm679 = vcmask 1044480
        %v680 = vsel %vm678, 4294967295, 65535
        %v681 = vsel %vm679, %v680, 0
        %v683 = vand.u32 %v666, %v681
        %v686 = vand.u32 %v667, %v681
        %v689 = vand.u32 %v668, %v681
        %v692 = vand.u32 %v669, %v681
        %694 = vmatprep.subr.bf16.mxu0 0
        %695 = vmatpush1.bf16.msra.mxu0 0
        %696 = vmatprep.subr.bf16.mxu0 0
        %697 = vmatpush1.bf16.msra.mxu0 0
        %698 = vmatprep.subr.bf16.mxu0 0
        %699 = vmatpush1.bf16.msra.mxu0 0
        %700 = vmatprep.subr.bf16.mxu0 0
        %701 = vmatpush1.bf16.msra.mxu0 0
        %702 = vmatprep.subr.bf16.mxu0 0
        %703 = vmatpush1.bf16.msra.mxu0 0
        %704 = vmatprep.subr.bf16.mxu0 0
        %705 = vmatpush1.bf16.msra.mxu0 0
        %706 = vmatprep.subr.bf16.mxu0 %v686
        %707 = vmatpush1.bf16.msra.mxu0 %v683
        %708 = vmatprep.subr.bf16.mxu0 %v663
        %709 = vmatpush1.bf16.msra.mxu0 %v662
        %710 = vmatprep.subr.bf16.mxu0 0
        %711 = vmatpush2.bf16.msra.mxu0 0
        %712 = vmatprep.subr.bf16.mxu0 0
        %713 = vmatpush2.bf16.msra.mxu0 0
        %714 = vmatprep.subr.bf16.mxu0 0
        %715 = vmatpush2.bf16.msra.mxu0 0
        %716 = vmatprep.subr.bf16.mxu0 0
        %717 = vmatpush2.bf16.msra.mxu0 0
        %718 = vmatprep.subr.bf16.mxu0 0
        %719 = vmatpush2.bf16.msra.mxu0 0
        %720 = vmatprep.subr.bf16.mxu0 0
        %721 = vmatpush2.bf16.msra.mxu0 0
        %722 = vmatprep.subr.bf16.mxu0 0
        %723 = vmatpush2.bf16.msra.mxu0 0
        %724 = vmatprep.subr.bf16.mxu0 0
        %725 = vmatpush2.bf16.msra.mxu0 0
        %726 = vmatprep.mubr.bf16.mxu0 0
        %727 = vmatmul.mubr.bf16.gmra.mxu0 %v676
        %v728 = vpop.f32.mrf.mxu0
        %v729 = vadd.f32 %v626, %v728
        %v730 = vpop.f32.mrf.mxu0
        %v731 = vadd.f32 %v626, %v730
        %v732 = vpop.f32.mrf.mxu0
        %v733 = vadd.f32 %v631, %v732
        %v734 = vpop.f32.mrf.mxu0
        %v735 = vadd.f32 %v631, %v734
        %736 = vdwg.mxu0
        %737 = vmatprep.subr.bf16.mxu0 0
        %738 = vmatpush1.bf16.msra.mxu0 0
        %739 = vmatprep.subr.bf16.mxu0 0
        %740 = vmatpush1.bf16.msra.mxu0 0
        %741 = vmatprep.subr.bf16.mxu0 0
        %742 = vmatpush1.bf16.msra.mxu0 0
        %743 = vmatprep.subr.bf16.mxu0 0
        %744 = vmatpush1.bf16.msra.mxu0 0
        %745 = vmatprep.subr.bf16.mxu0 0
        %746 = vmatpush1.bf16.msra.mxu0 0
        %747 = vmatprep.subr.bf16.mxu0 0
        %748 = vmatpush1.bf16.msra.mxu0 0
        %749 = vmatprep.subr.bf16.mxu0 %v692
        %750 = vmatpush1.bf16.msra.mxu0 %v689
        %751 = vmatprep.subr.bf16.mxu0 %v665
        %752 = vmatpush1.bf16.msra.mxu0 %v664
        %753 = vmatprep.subr.bf16.mxu0 0
        %754 = vmatpush2.bf16.msra.mxu0 0
        %755 = vmatprep.subr.bf16.mxu0 0
        %756 = vmatpush2.bf16.msra.mxu0 0
        %757 = vmatprep.subr.bf16.mxu0 0
        %758 = vmatpush2.bf16.msra.mxu0 0
        %759 = vmatprep.subr.bf16.mxu0 0
        %760 = vmatpush2.bf16.msra.mxu0 0
        %761 = vmatprep.subr.bf16.mxu0 0
        %762 = vmatpush2.bf16.msra.mxu0 0
        %763 = vmatprep.subr.bf16.mxu0 0
        %764 = vmatpush2.bf16.msra.mxu0 0
        %765 = vmatprep.subr.bf16.mxu0 0
        %766 = vmatpush2.bf16.msra.mxu0 0
        %767 = vmatprep.subr.bf16.mxu0 0
        %768 = vmatpush2.bf16.msra.mxu0 0
        %769 = vmatprep.mubr.bf16.mxu0 0
        %770 = vmatmul.mubr.bf16.gmra.mxu0 %v676
        %v771 = vpop.f32.mrf.mxu0
        %v772 = vadd.f32 %v626, %v771
        %v773 = vpop.f32.mrf.mxu0
        %v774 = vadd.f32 %v626, %v773
        %v775 = vpop.f32.mrf.mxu0
        %v776 = vadd.f32 %v631, %v775
        %v777 = vpop.f32.mrf.mxu0
        %v778 = vadd.f32 %v631, %v777
        %779 = vdwg.mxu0
        %v780 = vmax.f32 %v729, 0.0
        %v781 = vmax.f32 %v731, 0.0
        %v782 = vmax.f32 %v772, 0.0
        %v783 = vmax.f32 %v774, 0.0
        %v784 = vmax.f32 %v733, 0.0
        %v785 = vmax.f32 %v735, 0.0
        %v786 = vmax.f32 %v776, 0.0
        %v787 = vmax.f32 %v778, 0.0
        %v788 = vpack.c.bf16 %v784, %v780
        %v789 = vpack.c.bf16 %v785, %v781
        %v790 = vpack.c.bf16 %v786, %v782
        %v791 = vpack.c.bf16 %v787, %v783
        %v796 = vunpack.c.l.b16 %v788
        %v797 = vunpack.c.l.b16 %v789
        %v798 = vunpack.c.l.b16 %v790
        %v799 = vunpack.c.l.b16 %v791
        %v800 = vunpack.c.h.b16 %v788
        %v801 = vunpack.c.h.b16 %v789
        %v802 = vunpack.c.h.b16 %v790
        %v803 = vunpack.c.h.b16 %v791
        %v804 = vpack.c.b16 %v797, %v796
        %v805 = vpack.c.b16 %v799, %v798
        %v806 = vpack.c.b16 %v801, %v800
        %v807 = vpack.c.b16 %v803, %v802
        %812 = vst [vmem:[%s599] sm:$0xff] %v804
        %813 = vst [vmem:[%s599 + $0x8] sm:$0xff] %v805
        %814 = vst [vmem:[%s599 + $0x10] sm:$0x11] %v806
        %815 = vst [vmem:[%s599 + $0x18] sm:$0x11] %v807
        %s816 = sand.u32 %s90, 1
        %s817 = sand.u32 %s90, 1
        %s818 = smul.addr %s817, 32
        %s819 = scalar_lea.vmem [#allocation3], %s818
        // Predicated region
        $region99: #{convnet_forward.4} parent=93 // pred_check
          %p820 = pneg %p100
        $region100: #{convnet_forward.4} parent=93 // pred_check_branch
          %822 = sbr.rel (%p820) target = $region102
        $region101: #{convnet_forward.4} parent=93 // pred_region
          %s823 = smul.u32 4, %s14
          %s824 = ssub.s32 9, %s823
          %p825 = scmp.lt.s32.totalorder %s824, 4
          %s826 = scalar_select %p825, %s824, 4
          %s827 = smul.u32 128, %s826
          %p828 = scmp.ne.s32.totalorder 0, %s827
          %s829 = smul.addr %s823, 4
          %s830 = scalar_lea.vmem %s3, %s829
          %s831 = smul.u32 %s826, 4
          // Predicated region
          $region103: #{convnet_forward.4} parent=101 // pred_check
            %p832 = pneg %p828
          $region104: #{convnet_forward.4} parent=101 // pred_check_branch
            %834 = sbr.rel (%p832) target = $region106
          $region105: #{convnet_forward.4} parent=101 // pred_region
            %p835 = scmp.lt.u32.totalorder %s831, 8
            %p836 = pneg %p835
            // Predicated region
            $region107: #{convnet_forward.4} parent=105 // pred_check
              _
            $region108: #{convnet_forward.4} parent=105 // pred_check_branch
              %838 = sbr.rel (%p835) target = $region110
            $region109: #{convnet_forward.4} parent=105 // pred_region
              %s856 = sand.u32 %s831, 7
              %p857 = scmp.eq.s32.totalorder %s856, 0
              // Predicated region
              $region122: #{convnet_forward.4} parent=109 // pred_check
                %p858 = pneg %p857
              $region123: #{convnet_forward.4} parent=109 // pred_check_branch
                %860 = sbr.rel (%p858) target = $region125
              $region124: #{convnet_forward.4} parent=109 // pred_region
                %s861 = sshrl.u32 %s831, 3
                %s862 = sshrl.u32 %s861, 5
                // While loop
                $region126: #{convnet_forward.4} parent=124 // loop_pre_header
                  _
                $region127: #{convnet_forward.4} parent=124 // loop_header
                  %s866 = sphi 0, %s868
                  %p867 = scmp.ge.s32.totalorder %s866, %s862
                  %s871 = sphi 0, %s1004
                  %s872 = sphi %s819, %s1007
                  %s873 = sphi %s830, %s1008
                $region128: #{convnet_forward.4} parent=124 // loop_header_branch
                  %870 = sbr.rel (%p867) target = $region132
                $region129: #{convnet_forward.4} parent=124 // loop_body
                  %v874 = vld [vmem:[%s872] sm:$0xff]
                  %875 = vst [vmem:[%s873] sm:$0xff] %v874
                  %v876 = vld [vmem:[%s872 + $0x8] sm:$0xff]
                  %877 = vst [vmem:[%s873 + $0x8] sm:$0xff] %v876
                  %v878 = vld [vmem:[%s872 + $0x10] sm:$0xff]
                  %879 = vst [vmem:[%s873 + $0x10] sm:$0xff] %v878
                  %v880 = vld [vmem:[%s872 + $0x18] sm:$0xff]
                  %881 = vst [vmem:[%s873 + $0x18] sm:$0xff] %v880
                  %v882 = vld [vmem:[%s872 + $0x20] sm:$0xff]
                  %883 = vst [vmem:[%s873 + $0x20] sm:$0xff] %v882
                  %v884 = vld [vmem:[%s872 + $0x28] sm:$0xff]
                  %885 = vst [vmem:[%s873 + $0x28] sm:$0xff] %v884
                  %v886 = vld [vmem:[%s872 + $0x30] sm:$0xff]
                  %887 = vst [vmem:[%s873 + $0x30] sm:$0xff] %v886
                  %v888 = vld [vmem:[%s872 + $0x38] sm:$0xff]
                  %889 = vst [vmem:[%s873 + $0x38] sm:$0xff] %v888
                  %v890 = vld [vmem:[%s872 + $0x40] sm:$0xff]
                  %891 = vst [vmem:[%s873 + $0x40] sm:$0xff] %v890
                  %v892 = vld [vmem:[%s872 + $0x48] sm:$0xff]
                  %893 = vst [vmem:[%s873 + $0x48] sm:$0xff] %v892
                  %v894 = vld [vmem:[%s872 + $0x50] sm:$0xff]
                  %895 = vst [vmem:[%s873 + $0x50] sm:$0xff] %v894
                  %v896 = vld [vmem:[%s872 + $0x58] sm:$0xff]
                  %897 = vst [vmem:[%s873 + $0x58] sm:$0xff] %v896
                  %v898 = vld [vmem:[%s872 + $0x60] sm:$0xff]
                  %899 = vst [vmem:[%s873 + $0x60] sm:$0xff] %v898
                  %v900 = vld [vmem:[%s872 + $0x68] sm:$0xff]
                  %901 = vst [vmem:[%s873 + $0x68] sm:$0xff] %v900
                  %v902 = vld [vmem:[%s872 + $0x70] sm:$0xff]
                  %903 = vst [vmem:[%s873 + $0x70] sm:$0xff] %v902
                  %v904 = vld [vmem:[%s872 + $0x78] sm:$0xff]
                  %905 = vst [vmem:[%s873 + $0x78] sm:$0xff] %v904
                  %v906 = vld [vmem:[%s872 + $0x80] sm:$0xff]
                  %907 = vst [vmem:[%s873 + $0x80] sm:$0xff] %v906
                  %v908 = vld [vmem:[%s872 + $0x88] sm:$0xff]
                  %909 = vst [vmem:[%s873 + $0x88] sm:$0xff] %v908
                  %v910 = vld [vmem:[%s872 + $0x90] sm:$0xff]
                  %911 = vst [vmem:[%s873 + $0x90] sm:$0xff] %v910
                  %v912 = vld [vmem:[%s872 + $0x98] sm:$0xff]
                  %913 = vst [vmem:[%s873 + $0x98] sm:$0xff] %v912
                  %v914 = vld [vmem:[%s872 + $0xa0] sm:$0xff]
                  %915 = vst [vmem:[%s873 + $0xa0] sm:$0xff] %v914
                  %v916 = vld [vmem:[%s872 + $0xa8] sm:$0xff]
                  %917 = vst [vmem:[%s873 + $0xa8] sm:$0xff] %v916
                  %v918 = vld [vmem:[%s872 + $0xb0] sm:$0xff]
                  %919 = vst [vmem:[%s873 + $0xb0] sm:$0xff] %v918
                  %v920 = vld [vmem:[%s872 + $0xb8] sm:$0xff]
                  %921 = vst [vmem:[%s873 + $0xb8] sm:$0xff] %v920
                  %v922 = vld [vmem:[%s872 + $0xc0] sm:$0xff]
                  %923 = vst [vmem:[%s873 + $0xc0] sm:$0xff] %v922
                  %v924 = vld [vmem:[%s872 + $0xc8] sm:$0xff]
                  %925 = vst [vmem:[%s873 + $0xc8] sm:$0xff] %v924
                  %v926 = vld [vmem:[%s872 + $0xd0] sm:$0xff]
                  %927 = vst [vmem:[%s873 + $0xd0] sm:$0xff] %v926
                  %v928 = vld [vmem:[%s872 + $0xd8] sm:$0xff]
                  %929 = vst [vmem:[%s873 + $0xd8] sm:$0xff] %v928
                  %v930 = vld [vmem:[%s872 + $0xe0] sm:$0xff]
                  %931 = vst [vmem:[%s873 + $0xe0] sm:$0xff] %v930
                  %v932 = vld [vmem:[%s872 + $0xe8] sm:$0xff]
                  %933 = vst [vmem:[%s873 + $0xe8] sm:$0xff] %v932
                  %v934 = vld [vmem:[%s872 + $0xf0] sm:$0xff]
                  %935 = vst [vmem:[%s873 + $0xf0] sm:$0xff] %v934
                  %v936 = vld [vmem:[%s872 + $0xf8] sm:$0xff]
                  %937 = vst [vmem:[%s873 + $0xf8] sm:$0xff] %v936
                  %v938 = vld [vmem:[%s872 + $0x10] sm:$0xff]
                  %939 = vst [vmem:[%s873 + $0x24] sm:$0xff] %v938
                  %v940 = vld [vmem:[%s872 + $0x18] sm:$0xff]
                  %941 = vst [vmem:[%s873 + $0x2c] sm:$0xff] %v940
                  %v942 = vld [vmem:[%s872 + $0x20] sm:$0xff]
                  %943 = vst [vmem:[%s873 + $0x34] sm:$0xff] %v942
                  %v944 = vld [vmem:[%s872 + $0x28] sm:$0xff]
                  %945 = vst [vmem:[%s873 + $0x3c] sm:$0xff] %v944
                  %v946 = vld [vmem:[%s872 + $0x30] sm:$0xff]
                  %947 = vst [vmem:[%s873 + $0x44] sm:$0xff] %v946
                  %v948 = vld [vmem:[%s872 + $0x38] sm:$0xff]
                  %949 = vst [vmem:[%s873 + $0x4c] sm:$0xff] %v948
                  %v950 = vld [vmem:[%s872 + $0x40] sm:$0xff]
                  %951 = vst [vmem:[%s873 + $0x54] sm:$0xff] %v950
                  %v952 = vld [vmem:[%s872 + $0x48] sm:$0xff]
                  %953 = vst [vmem:[%s873 + $0x5c] sm:$0xff] %v952
                  %v954 = vld [vmem:[%s872 + $0x50] sm:$0xff]
                  %955 = vst [vmem:[%s873 + $0x64] sm:$0xff] %v954
                  %v956 = vld [vmem:[%s872 + $0x58] sm:$0xff]
                  %957 = vst [vmem:[%s873 + $0x6c] sm:$0xff] %v956
                  %v958 = vld [vmem:[%s872 + $0x60] sm:$0xff]
                  %959 = vst [vmem:[%s873 + $0x74] sm:$0xff] %v958
                  %v960 = vld [vmem:[%s872 + $0x68] sm:$0xff]
                  %961 = vst [vmem:[%s873 + $0x7c] sm:$0xff] %v960
                  %v962 = vld [vmem:[%s872 + $0x70] sm:$0xff]
                  %963 = vst [vmem:[%s873 + $0x84] sm:$0xff] %v962
                  %v964 = vld [vmem:[%s872 + $0x78] sm:$0xff]
                  %965 = vst [vmem:[%s873 + $0x8c] sm:$0xff] %v964
                  %v966 = vld [vmem:[%s872 + $0x80] sm:$0xff]
                  %967 = vst [vmem:[%s873 + $0x94] sm:$0xff] %v966
                  %v968 = vld [vmem:[%s872 + $0x88] sm:$0xff]
                  %969 = vst [vmem:[%s873 + $0x9c] sm:$0xff] %v968
                  %v970 = vld [vmem:[%s872 + $0x90] sm:$0xff]
                  %971 = vst [vmem:[%s873 + $0xa4] sm:$0xff] %v970
                  %v972 = vld [vmem:[%s872 + $0x98] sm:$0xff]
                  %973 = vst [vmem:[%s873 + $0xac] sm:$0xff] %v972
                  %v974 = vld [vmem:[%s872 + $0xa0] sm:$0xff]
                  %975 = vst [vmem:[%s873 + $0xb4] sm:$0xff] %v974
                  %v976 = vld [vmem:[%s872 + $0xa8] sm:$0xff]
                  %977 = vst [vmem:[%s873 + $0xbc] sm:$0xff] %v976
                  %v978 = vld [vmem:[%s872 + $0xb0] sm:$0xff]
                  %979 = vst [vmem:[%s873 + $0xc4] sm:$0xff] %v978
                  %v980 = vld [vmem:[%s872 + $0xb8] sm:$0xff]
                  %981 = vst [vmem:[%s873 + $0xcc] sm:$0xff] %v980
                  %v982 = vld [vmem:[%s872 + $0xc0] sm:$0xff]
                  %983 = vst [vmem:[%s873 + $0xd4] sm:$0xff] %v982
                  %v984 = vld [vmem:[%s872 + $0xc8] sm:$0xff]
                  %985 = vst [vmem:[%s873 + $0xdc] sm:$0xff] %v984
                  %v986 = vld [vmem:[%s872 + $0xd0] sm:$0xff]
                  %987 = vst [vmem:[%s873 + $0xe4] sm:$0xff] %v986
                  %v988 = vld [vmem:[%s872 + $0xd8] sm:$0xff]
                  %989 = vst [vmem:[%s873 + $0xec] sm:$0xff] %v988
                  %v990 = vld [vmem:[%s872 + $0xe0] sm:$0xff]
                  %991 = vst [vmem:[%s873 + $0xf4] sm:$0xff] %v990
                  %v992 = vld [vmem:[%s872 + $0xe8] sm:$0xff]
                  %993 = vst [vmem:[%s873 + $0xfc] sm:$0xff] %v992
                  %v994 = vld [vmem:[%s872 + $0xf0] sm:$0xff]
                  %995 = vst [vmem:[%s873 + $0x104] sm:$0xff] %v994
                  %v996 = vld [vmem:[%s872 + $0xf8] sm:$0xff]
                  %997 = vst [vmem:[%s873 + $0x10c] sm:$0xff] %v996
                  %v998 = vld [vmem:[%s872 + $0x100] sm:$0xff]
                  %999 = vst [vmem:[%s873 + $0x114] sm:$0xff] %v998
                  %v1000 = vld [vmem:[%s872 + $0x108] sm:$0xff]
                  %1001 = vst [vmem:[%s873 + $0x11c] sm:$0xff] %v1000
                  %s1002 = sadd.s32 1, %s871
                  %p1003 = scmp.ge.s32.totalorder %s1002, %s862
                  %s1004 = scalar_select %p1003, 0, %s1002
                  %s1005 = smul.u32 %s1004, 256
                  %s1006 = smul.u32 %s1004, 256
                  %s1007 = scalar_lea.vmem %s819, %s1005 [#allocation3]
                  %s1008 = scalar_lea.vmem %s830, %s1006
                $region130: #{convnet_forward.4} parent=124 // loop_footer
                  %s868 = sadd.s32 %s866, 1
                $region131: #{convnet_forward.4} parent=124 // loop_footer_branch
                  %865 = sbr.rel target = $region127
                $region132: #{convnet_forward.4} parent=124 // loop_exit
                  _
                %s1009 = sshrl.u32 %s861, 5
                %s1010 = sand.u32 %s861, 31
                %s1011 = smul.u32 %s1009, 32
                %s1012 = smul.u32 128, %s1011
                %s1013 = sshra.s32 %s1012, 4
                %s1014 = scalar_lea.vmem %s819, %s1013 [#allocation3]
                %s1015 = smul.u32 128, %s1011
                %s1016 = sshra.s32 %s1015, 4
                %s1017 = scalar_lea.vmem %s830, %s1016
                // While loop
                $region133: #{convnet_forward.4} parent=124 // loop_pre_header
                  _
                $region134: #{convnet_forward.4} parent=124 // loop_header
                  %s1021 = sphi 0, %s1023
                  %p1022 = scmp.ge.s32.totalorder %s1021, %s1010
                  %s1026 = sphi 0, %s1035
                  %s1027 = sphi %s1014, %s1038
                  %s1028 = sphi %s1017, %s1039
                $region135: #{convnet_forward.4} parent=124 // loop_header_branch
                  %1025 = sbr.rel (%p1022) target = $region139
                $region136: #{convnet_forward.4} parent=124 // loop_body
                  %v1029 = vld [vmem:[%s1027] sm:$0xff]
                  %1030 = vst [vmem:[%s1028] sm:$0xff] %v1029
                  %v1031 = vld [vmem:[%s1027 + $0x10] sm:$0xff]
                  %1032 = vst [vmem:[%s1028 + $0x24] sm:$0xff] %v1031
                  %s1033 = sadd.s32 1, %s1026
                  %p1034 = scmp.ge.s32.totalorder %s1033, %s1010
                  %s1035 = scalar_select %p1034, 0, %s1033
                  %s1036 = smul.u32 %s1035, 8
                  %s1037 = smul.u32 %s1035, 8
                  %s1038 = scalar_lea.vmem %s1014, %s1036 [#allocation3]
                  %s1039 = scalar_lea.vmem %s1017, %s1037
                $region137: #{convnet_forward.4} parent=124 // loop_footer
                  %s1023 = sadd.s32 %s1021, 1
                $region138: #{convnet_forward.4} parent=124 // loop_footer_branch
                  %1020 = sbr.rel target = $region134
                $region139: #{convnet_forward.4} parent=124 // loop_exit
                  _
              $region125: #{convnet_forward.4} parent=109 // pred_fallthru
                _
              %p1040 = pneg %p857
              // Predicated region
              $region140: #{convnet_forward.4} parent=109 // pred_check
                _
              $region141: #{convnet_forward.4} parent=109 // pred_check_branch
                %1042 = sbr.rel (%p857) target = $region143
              $region142: #{convnet_forward.4} parent=109 // pred_region
                %s1043 = sand.u32 %s831, 7
                %s1044 = ssub.s32 %s831, %s1043
                %s1045 = scalar_lea.vmem %s819, %s1044 [#allocation3]
                %s1046 = ssub.s32 %s831, %s1043
                %s1047 = scalar_lea.vmem %s830, %s1046
                %s1048 = sshrl.u32 %s831, 3
                %s1049 = sshrl.u32 %s1048, 5
                // While loop
                $region144: #{convnet_forward.4} parent=142 // loop_pre_header
                  _
                $region145: #{convnet_forward.4} parent=142 // loop_header
                  %s1053 = sphi 0, %s1055
                  %p1054 = scmp.ge.s32.totalorder %s1053, %s1049
                  %s1058 = sphi 0, %s1191
                  %s1059 = sphi %s819, %s1194
                  %s1060 = sphi %s830, %s1195
                $region146: #{convnet_forward.4} parent=142 // loop_header_branch
                  %1057 = sbr.rel (%p1054) target = $region150
                $region147: #{convnet_forward.4} parent=142 // loop_body
                  %v1061 = vld [vmem:[%s1059] sm:$0xff]
                  %1062 = vst [vmem:[%s1060] sm:$0xff] %v1061
                  %v1063 = vld [vmem:[%s1059 + $0x8] sm:$0xff]
                  %1064 = vst [vmem:[%s1060 + $0x8] sm:$0xff] %v1063
                  %v1065 = vld [vmem:[%s1059 + $0x10] sm:$0xff]
                  %1066 = vst [vmem:[%s1060 + $0x10] sm:$0xff] %v1065
                  %v1067 = vld [vmem:[%s1059 + $0x18] sm:$0xff]
                  %1068 = vst [vmem:[%s1060 + $0x18] sm:$0xff] %v1067
                  %v1069 = vld [vmem:[%s1059 + $0x20] sm:$0xff]
                  %1070 = vst [vmem:[%s1060 + $0x20] sm:$0xff] %v1069
                  %v1071 = vld [vmem:[%s1059 + $0x28] sm:$0xff]
                  %1072 = vst [vmem:[%s1060 + $0x28] sm:$0xff] %v1071
                  %v1073 = vld [vmem:[%s1059 + $0x30] sm:$0xff]
                  %1074 = vst [vmem:[%s1060 + $0x30] sm:$0xff] %v1073
                  %v1075 = vld [vmem:[%s1059 + $0x38] sm:$0xff]
                  %1076 = vst [vmem:[%s1060 + $0x38] sm:$0xff] %v1075
                  %v1077 = vld [vmem:[%s1059 + $0x40] sm:$0xff]
                  %1078 = vst [vmem:[%s1060 + $0x40] sm:$0xff] %v1077
                  %v1079 = vld [vmem:[%s1059 + $0x48] sm:$0xff]
                  %1080 = vst [vmem:[%s1060 + $0x48] sm:$0xff] %v1079
                  %v1081 = vld [vmem:[%s1059 + $0x50] sm:$0xff]
                  %1082 = vst [vmem:[%s1060 + $0x50] sm:$0xff] %v1081
                  %v1083 = vld [vmem:[%s1059 + $0x58] sm:$0xff]
                  %1084 = vst [vmem:[%s1060 + $0x58] sm:$0xff] %v1083
                  %v1085 = vld [vmem:[%s1059 + $0x60] sm:$0xff]
                  %1086 = vst [vmem:[%s1060 + $0x60] sm:$0xff] %v1085
                  %v1087 = vld [vmem:[%s1059 + $0x68] sm:$0xff]
                  %1088 = vst [vmem:[%s1060 + $0x68] sm:$0xff] %v1087
                  %v1089 = vld [vmem:[%s1059 + $0x70] sm:$0xff]
                  %1090 = vst [vmem:[%s1060 + $0x70] sm:$0xff] %v1089
                  %v1091 = vld [vmem:[%s1059 + $0x78] sm:$0xff]
                  %1092 = vst [vmem:[%s1060 + $0x78] sm:$0xff] %v1091
                  %v1093 = vld [vmem:[%s1059 + $0x80] sm:$0xff]
                  %1094 = vst [vmem:[%s1060 + $0x80] sm:$0xff] %v1093
                  %v1095 = vld [vmem:[%s1059 + $0x88] sm:$0xff]
                  %1096 = vst [vmem:[%s1060 + $0x88] sm:$0xff] %v1095
                  %v1097 = vld [vmem:[%s1059 + $0x90] sm:$0xff]
                  %1098 = vst [vmem:[%s1060 + $0x90] sm:$0xff] %v1097
                  %v1099 = vld [vmem:[%s1059 + $0x98] sm:$0xff]
                  %1100 = vst [vmem:[%s1060 + $0x98] sm:$0xff] %v1099
                  %v1101 = vld [vmem:[%s1059 + $0xa0] sm:$0xff]
                  %1102 = vst [vmem:[%s1060 + $0xa0] sm:$0xff] %v1101
                  %v1103 = vld [vmem:[%s1059 + $0xa8] sm:$0xff]
                  %1104 = vst [vmem:[%s1060 + $0xa8] sm:$0xff] %v1103
                  %v1105 = vld [vmem:[%s1059 + $0xb0] sm:$0xff]
                  %1106 = vst [vmem:[%s1060 + $0xb0] sm:$0xff] %v1105
                  %v1107 = vld [vmem:[%s1059 + $0xb8] sm:$0xff]
                  %1108 = vst [vmem:[%s1060 + $0xb8] sm:$0xff] %v1107
                  %v1109 = vld [vmem:[%s1059 + $0xc0] sm:$0xff]
                  %1110 = vst [vmem:[%s1060 + $0xc0] sm:$0xff] %v1109
                  %v1111 = vld [vmem:[%s1059 + $0xc8] sm:$0xff]
                  %1112 = vst [vmem:[%s1060 + $0xc8] sm:$0xff] %v1111
                  %v1113 = vld [vmem:[%s1059 + $0xd0] sm:$0xff]
                  %1114 = vst [vmem:[%s1060 + $0xd0] sm:$0xff] %v1113
                  %v1115 = vld [vmem:[%s1059 + $0xd8] sm:$0xff]
                  %1116 = vst [vmem:[%s1060 + $0xd8] sm:$0xff] %v1115
                  %v1117 = vld [vmem:[%s1059 + $0xe0] sm:$0xff]
                  %1118 = vst [vmem:[%s1060 + $0xe0] sm:$0xff] %v1117
                  %v1119 = vld [vmem:[%s1059 + $0xe8] sm:$0xff]
                  %1120 = vst [vmem:[%s1060 + $0xe8] sm:$0xff] %v1119
                  %v1121 = vld [vmem:[%s1059 + $0xf0] sm:$0xff]
                  %1122 = vst [vmem:[%s1060 + $0xf0] sm:$0xff] %v1121
                  %v1123 = vld [vmem:[%s1059 + $0xf8] sm:$0xff]
                  %1124 = vst [vmem:[%s1060 + $0xf8] sm:$0xff] %v1123
                  %v1125 = vld [vmem:[%s1059 + $0x10] sm:$0xff]
                  %1126 = vst [vmem:[%s1060 + $0x24] sm:$0xff] %v1125
                  %v1127 = vld [vmem:[%s1059 + $0x18] sm:$0xff]
                  %1128 = vst [vmem:[%s1060 + $0x2c] sm:$0xff] %v1127
                  %v1129 = vld [vmem:[%s1059 + $0x20] sm:$0xff]
                  %1130 = vst [vmem:[%s1060 + $0x34] sm:$0xff] %v1129
                  %v1131 = vld [vmem:[%s1059 + $0x28] sm:$0xff]
                  %1132 = vst [vmem:[%s1060 + $0x3c] sm:$0xff] %v1131
                  %v1133 = vld [vmem:[%s1059 + $0x30] sm:$0xff]
                  %1134 = vst [vmem:[%s1060 + $0x44] sm:$0xff] %v1133
                  %v1135 = vld [vmem:[%s1059 + $0x38] sm:$0xff]
                  %1136 = vst [vmem:[%s1060 + $0x4c] sm:$0xff] %v1135
                  %v1137 = vld [vmem:[%s1059 + $0x40] sm:$0xff]
                  %1138 = vst [vmem:[%s1060 + $0x54] sm:$0xff] %v1137
                  %v1139 = vld [vmem:[%s1059 + $0x48] sm:$0xff]
                  %1140 = vst [vmem:[%s1060 + $0x5c] sm:$0xff] %v1139
                  %v1141 = vld [vmem:[%s1059 + $0x50] sm:$0xff]
                  %1142 = vst [vmem:[%s1060 + $0x64] sm:$0xff] %v1141
                  %v1143 = vld [vmem:[%s1059 + $0x58] sm:$0xff]
                  %1144 = vst [vmem:[%s1060 + $0x6c] sm:$0xff] %v1143
                  %v1145 = vld [vmem:[%s1059 + $0x60] sm:$0xff]
                  %1146 = vst [vmem:[%s1060 + $0x74] sm:$0xff] %v1145
                  %v1147 = vld [vmem:[%s1059 + $0x68] sm:$0xff]
                  %1148 = vst [vmem:[%s1060 + $0x7c] sm:$0xff] %v1147
                  %v1149 = vld [vmem:[%s1059 + $0x70] sm:$0xff]
                  %1150 = vst [vmem:[%s1060 + $0x84] sm:$0xff] %v1149
                  %v1151 = vld [vmem:[%s1059 + $0x78] sm:$0xff]
                  %1152 = vst [vmem:[%s1060 + $0x8c] sm:$0xff] %v1151
                  %v1153 = vld [vmem:[%s1059 + $0x80] sm:$0xff]
                  %1154 = vst [vmem:[%s1060 + $0x94] sm:$0xff] %v1153
                  %v1155 = vld [vmem:[%s1059 + $0x88] sm:$0xff]
                  %1156 = vst [vmem:[%s1060 + $0x9c] sm:$0xff] %v1155
                  %v1157 = vld [vmem:[%s1059 + $0x90] sm:$0xff]
                  %1158 = vst [vmem:[%s1060 + $0xa4] sm:$0xff] %v1157
                  %v1159 = vld [vmem:[%s1059 + $0x98] sm:$0xff]
                  %1160 = vst [vmem:[%s1060 + $0xac] sm:$0xff] %v1159
                  %v1161 = vld [vmem:[%s1059 + $0xa0] sm:$0xff]
                  %1162 = vst [vmem:[%s1060 + $0xb4] sm:$0xff] %v1161
                  %v1163 = vld [vmem:[%s1059 + $0xa8] sm:$0xff]
                  %1164 = vst [vmem:[%s1060 + $0xbc] sm:$0xff] %v1163
                  %v1165 = vld [vmem:[%s1059 + $0xb0] sm:$0xff]
                  %1166 = vst [vmem:[%s1060 + $0xc4] sm:$0xff] %v1165
                  %v1167 = vld [vmem:[%s1059 + $0xb8] sm:$0xff]
                  %1168 = vst [vmem:[%s1060 + $0xcc] sm:$0xff] %v1167
                  %v1169 = vld [vmem:[%s1059 + $0xc0] sm:$0xff]
                  %1170 = vst [vmem:[%s1060 + $0xd4] sm:$0xff] %v1169
                  %v1171 = vld [vmem:[%s1059 + $0xc8] sm:$0xff]
                  %1172 = vst [vmem:[%s1060 + $0xdc] sm:$0xff] %v1171
                  %v1173 = vld [vmem:[%s1059 + $0xd0] sm:$0xff]
                  %1174 = vst [vmem:[%s1060 + $0xe4] sm:$0xff] %v1173
                  %v1175 = vld [vmem:[%s1059 + $0xd8] sm:$0xff]
                  %1176 = vst [vmem:[%s1060 + $0xec] sm:$0xff] %v1175
                  %v1177 = vld [vmem:[%s1059 + $0xe0] sm:$0xff]
                  %1178 = vst [vmem:[%s1060 + $0xf4] sm:$0xff] %v1177
                  %v1179 = vld [vmem:[%s1059 + $0xe8] sm:$0xff]
                  %1180 = vst [vmem:[%s1060 + $0xfc] sm:$0xff] %v1179
                  %v1181 = vld [vmem:[%s1059 + $0xf0] sm:$0xff]
                  %1182 = vst [vmem:[%s1060 + $0x104] sm:$0xff] %v1181
                  %v1183 = vld [vmem:[%s1059 + $0xf8] sm:$0xff]
                  %1184 = vst [vmem:[%s1060 + $0x10c] sm:$0xff] %v1183
                  %v1185 = vld [vmem:[%s1059 + $0x100] sm:$0xff]
                  %1186 = vst [vmem:[%s1060 + $0x114] sm:$0xff] %v1185
                  %v1187 = vld [vmem:[%s1059 + $0x108] sm:$0xff]
                  %1188 = vst [vmem:[%s1060 + $0x11c] sm:$0xff] %v1187
                  %s1189 = sadd.s32 1, %s1058
                  %p1190 = scmp.ge.s32.totalorder %s1189, %s1049
                  %s1191 = scalar_select %p1190, 0, %s1189
                  %s1192 = smul.u32 %s1191, 256
                  %s1193 = smul.u32 %s1191, 256
                  %s1194 = scalar_lea.vmem %s819, %s1192 [#allocation3]
                  %s1195 = scalar_lea.vmem %s830, %s1193
                $region148: #{convnet_forward.4} parent=142 // loop_footer
                  %s1055 = sadd.s32 %s1053, 1
                $region149: #{convnet_forward.4} parent=142 // loop_footer_branch
                  %1052 = sbr.rel target = $region145
                $region150: #{convnet_forward.4} parent=142 // loop_exit
                  _
                %s1196 = sshrl.u32 %s1048, 5
                %s1197 = sand.u32 %s1048, 31
                %s1198 = smul.u32 %s1196, 32
                %s1199 = smul.u32 128, %s1198
                %s1200 = sshra.s32 %s1199, 4
                %s1201 = scalar_lea.vmem %s819, %s1200 [#allocation3]
                %s1202 = smul.u32 128, %s1198
                %s1203 = sshra.s32 %s1202, 4
                %s1204 = scalar_lea.vmem %s830, %s1203
                // While loop
                $region151: #{convnet_forward.4} parent=142 // loop_pre_header
                  _
                $region152: #{convnet_forward.4} parent=142 // loop_header
                  %s1208 = sphi 0, %s1210
                  %p1209 = scmp.ge.s32.totalorder %s1208, %s1197
                  %s1213 = sphi 0, %s1222
                  %s1214 = sphi %s1201, %s1225
                  %s1215 = sphi %s1204, %s1226
                $region153: #{convnet_forward.4} parent=142 // loop_header_branch
                  %1212 = sbr.rel (%p1209) target = $region157
                $region154: #{convnet_forward.4} parent=142 // loop_body
                  %v1216 = vld [vmem:[%s1214] sm:$0xff]
                  %1217 = vst [vmem:[%s1215] sm:$0xff] %v1216
                  %v1218 = vld [vmem:[%s1214 + $0x10] sm:$0xff]
                  %1219 = vst [vmem:[%s1215 + $0x24] sm:$0xff] %v1218
                  %s1220 = sadd.s32 1, %s1213
                  %p1221 = scmp.ge.s32.totalorder %s1220, %s1197
                  %s1222 = scalar_select %p1221, 0, %s1220
                  %s1223 = smul.u32 %s1222, 8
                  %s1224 = smul.u32 %s1222, 8
                  %s1225 = scalar_lea.vmem %s1201, %s1223 [#allocation3]
                  %s1226 = scalar_lea.vmem %s1204, %s1224
                $region155: #{convnet_forward.4} parent=142 // loop_footer
                  %s1210 = sadd.s32 %s1208, 1
                $region156: #{convnet_forward.4} parent=142 // loop_footer_branch
                  %1207 = sbr.rel target = $region152
                $region157: #{convnet_forward.4} parent=142 // loop_exit
                  _
                %s1227 = sshll.u32 1, %s1043
                %s1228 = ssub.s32 %s1227, 1
                loop: start=0, step=1, limit=1
                $region158: #{convnet_forward.4} parent=142 // loop_pre_header
                  _
                $region159: #{convnet_forward.4} parent=142 // loop_header
                  %s1230 = sphi 0, %s1234
                  %p1231 = scmp.ge.s32.totalorder %s1230, 1
                  %s1235 = sphi %s1045, %s1045
                  %s1236 = sphi %s1047, %s1047
                $region160: #{convnet_forward.4} parent=142 // loop_header_branch
                  %1233 = sbr.rel (%p1231) target = $region164
                $region161: #{convnet_forward.4} parent=142 // loop_body
                  %v1237 = vld [vmem:[%s1235] sm:%s1228]
                  %1238 = vst [vmem:[%s1236] sm:%s1228] %v1237
                  %v1239 = vld [vmem:[%s1235 + $0x10] sm:%s1228]
                  %1240 = vst [vmem:[%s1236 + $0x24] sm:%s1228] %v1239
                $region162: #{convnet_forward.4} parent=142 // loop_footer
                  %s1234 = sadd.s32 1, %s1230
                $region163: #{convnet_forward.4} parent=142 // loop_footer_branch
                  %1229 = sbr.rel target = $region159
                $region164: #{convnet_forward.4} parent=142 // loop_exit
                  _
              $region143: #{convnet_forward.4} parent=109 // pred_fallthru
                _
            $region110: #{convnet_forward.4} parent=105 // pred_fallthru
              _
            // Predicated region
            $region111: #{convnet_forward.4} parent=105 // pred_check
              %p839 = pneg %p835
            $region112: #{convnet_forward.4} parent=105 // pred_check_branch
              %841 = sbr.rel (%p839) target = $region114
            $region113: #{convnet_forward.4} parent=105 // pred_region
              %s842 = sshll.u32 1, %s831
              %s843 = ssub.s32 %s842, 1
              loop: start=0, step=1, limit=1
              $region115: #{convnet_forward.4} parent=113 // loop_pre_header
                _
              $region116: #{convnet_forward.4} parent=113 // loop_header
                %s845 = sphi 0, %s849
                %p846 = scmp.ge.s32.totalorder %s845, 1
                %s850 = sphi %s819, %s819
                %s851 = sphi %s830, %s830
              $region117: #{convnet_forward.4} parent=113 // loop_header_branch
                %848 = sbr.rel (%p846) target = $region121
              $region118: #{convnet_forward.4} parent=113 // loop_body
                %v852 = vld [vmem:[%s850] sm:%s843]
                %853 = vst [vmem:[%s851] sm:%s843] %v852
                %v854 = vld [vmem:[%s850 + $0x10] sm:%s843]
                %855 = vst [vmem:[%s851 + $0x24] sm:%s843] %v854
              $region119: #{convnet_forward.4} parent=113 // loop_footer
                %s849 = sadd.s32 1, %s845
              $region120: #{convnet_forward.4} parent=113 // loop_footer_branch
                %844 = sbr.rel target = $region116
              $region121: #{convnet_forward.4} parent=113 // loop_exit
                _
            $region114: #{convnet_forward.4} parent=105 // pred_fallthru
              _
          $region106: #{convnet_forward.4} parent=101 // pred_fallthru
            _
          %1241 = vnop
        $region102: #{convnet_forward.4} parent=93 // pred_fallthru
          _
      $region94: #{convnet_forward.4} parent=5 // pred_fallthru
        _
      %p1242 = scmp.le.s32.totalorder 2, %s9
      // Predicated region
      $region165: #{convnet_forward.4} parent=5 // pred_check
        %p1243 = pneg %p1242
      $region166: #{convnet_forward.4} parent=5 // pred_check_branch
        %1245 = sbr.rel (%p1243) target = $region168
      $region167: #{convnet_forward.4} parent=5 // pred_region
        %s1246 = ssub.s32 %s9, 2
        // Predicated region
        $region169: #{convnet_forward.4} parent=167 // pred_check
          %p1247 = pneg %p106
        $region170: #{convnet_forward.4} parent=167 // pred_check_branch
          %1249 = sbr.rel (%p1247) target = $region172
        $region171: #{convnet_forward.4} parent=167 // pred_region
          %s1250 = sand.u32 %s91, 1
          %s1251 = sand.u32 %s91, 1
          %s1252 = smul.addr %s1251, 32
          %s1253 = scalar_lea.vmem [#allocation3], %s1252
        $region172: #{convnet_forward.4} parent=167 // pred_fallthru
          _
      $region168: #{convnet_forward.4} parent=5 // pred_fallthru
        _
    $region6: #{convnet_forward.4} parent=1 // loop_footer
      %s13 = sadd.s32 1, %s9
    $region7: #{convnet_forward.4} parent=1 // loop_footer_branch
      %8 = sbr.rel target = $region3
    $region8: #{convnet_forward.4} parent=1 // loop_exit
      _

// kernel: convnet_forward.5
$region0: #{convnet_forward.5}
  #allocation0 [shape = 'u32[]', space=smem, size = 0x4, offset = 0x4, fixed_abs, tag = 'smem constant byte address 0x4 - core index']
  #allocation1 [shape = 'u32[144,128]{1,0:T(1,128)}', space=vmem, size = 0x12000, scoped, tag = 'internal scratch']
  %s0 = inlined_call_operand.vmem [shape: bf16[2,1440], index: 0, kind: input, shape index: {}]
  %s1 = inlined_call_operand.vmem [shape: bf16[2,1440], index: 1, kind: input, shape index: {}]
  %s2 = inlined_call_operand.vmem [shape: bf16[2,1440], index: 2, kind: input, shape index: {}]
  %s3 = inlined_call_operand.vmem [shape: bf16[2,1440], index: 3, kind: input, shape index: {}]
  %s4 = inlined_call_operand.vmem [shape: bf16[2,1440], index: 4, kind: output, shape index: {}]
  %s5 = sld [smem:[#allocation0]]
  $region26: #{convnet_forward.5} parent=0
    _
  %s7 = ssub.s32 1, %s5
  %s8 = scalar_select 0, %s7, %s5
  // Predicated region
  $region2: #{convnet_forward.5} parent=0 // pred_check
    _
  $region3: #{convnet_forward.5} parent=0 // pred_check_branch
    %10 = sbr.rel (0) target = $region5
  $region4: #{convnet_forward.5} parent=0 // pred_region
    _
  $region5: #{convnet_forward.5} parent=0 // pred_fallthru
    _
  // Predicated region
  $region6: #{convnet_forward.5} parent=0 // pred_check
    _
  $region7: #{convnet_forward.5} parent=0 // pred_check_branch
    %12 = sbr.rel (0) target = $region9
  $region8: #{convnet_forward.5} parent=0 // pred_region
    _
  $region9: #{convnet_forward.5} parent=0 // pred_fallthru
    _
  // Predicated region
  $region10: #{convnet_forward.5} parent=0 // pred_check
    _
  $region11: #{convnet_forward.5} parent=0 // pred_check_branch
    %14 = sbr.rel (0) target = $region13
  $region12: #{convnet_forward.5} parent=0 // pred_region
    _
  $region13: #{convnet_forward.5} parent=0 // pred_fallthru
    _
  // Predicated region
  $region14: #{convnet_forward.5} parent=0 // pred_check
    _
  $region15: #{convnet_forward.5} parent=0 // pred_check_branch
    %16 = sbr.rel (0) target = $region17
  $region16: #{convnet_forward.5} parent=0 // pred_region
    _
  $region17: #{convnet_forward.5} parent=0 // pred_fallthru
    _
  %v17 = vld [vmem:[%s0] sm:$0xff]
  %v18 = vld [vmem:[%s0 + $0x8] sm:$0xf]
  %v19 = vld [vmem:[%s1] sm:$0xff]
  %v20 = vld [vmem:[%s1 + $0x8] sm:$0xf]
  %v21 = vmax.bf16 %v17, %v19
  %v22 = vmax.bf16 %v18, %v20
  %v23 = vld [vmem:[%s2] sm:$0xff]
  %v24 = vld [vmem:[%s2 + $0x8] sm:$0xf]
  %v25 = vld [vmem:[%s3] sm:$0xff]
  %v26 = vld [vmem:[%s3 + $0x8] sm:$0xf]
  %v27 = vmax.bf16 %v23, %v25
  %v28 = vmax.bf16 %v24, %v26
  %v29 = vmax.bf16 %v21, %v27
  %v30 = vmax.bf16 %v22, %v28
  %31 = vst [vmem:[%s4] sm:$0xff] %v29
  %vm32 = vcmask 1040384
  %vm33 = vcmask 1041409
  %vm34 = vmor %vm33, %vm32
  %vm35 = vcmask 1042434
  %vm36 = vmor %vm35, %vm34
  %vm37 = vcmask 257027
  %vm38 = vmor %vm37, %vm36
  %39 = vst.msk [vmem:[%s4 + $0x8] sm:$0xf] %vm38, %v30
  // Predicated region
  $region18: #{convnet_forward.5} parent=0 // pred_check
    _
  $region19: #{convnet_forward.5} parent=0 // pred_check_branch
    %41 = sbr.rel (0) target = $region21
  $region20: #{convnet_forward.5} parent=0 // pred_region
    _
  $region21: #{convnet_forward.5} parent=0 // pred_fallthru
    _
  // Predicated region
  $region22: #{convnet_forward.5} parent=0 // pred_check
    _
  $region23: #{convnet_forward.5} parent=0 // pred_check_branch
    %43 = sbr.rel (0) target = $region25
  $region24: #{convnet_forward.5} parent=0 // pred_region
    _
  $region25: #{convnet_forward.5} parent=0 // pred_fallthru
    _

// kernel: convnet_forward.6
$region0: #{convnet_forward.6}
  #allocation0 [shape = 'u32[]', space=smem, size = 0x4, offset = 0x4, fixed_abs, tag = 'smem constant byte address 0x4 - core index']
  #allocation1 [shape = 'u32[144,128]{1,0:T(1,128)}', space=vmem, size = 0x12000, scoped, tag = 'internal scratch']
  %s0 = inlined_call_operand.vmem [shape: bf16[20,90], index: 0, kind: input, shape index: {}]
  %s1 = inlined_call_operand.vmem [shape: f32[20,1], index: 1, kind: input, shape index: {}]
  %s2 = inlined_call_operand.vmem [shape: bf16[90,200], index: 2, kind: input, shape index: {}]
  %s3 = inlined_call_operand.vmem [shape: bf16[20,200], index: 3, kind: output, shape index: {}]
  %s4 = sld [smem:[#allocation0]]
  $region22: #{convnet_forward.6} parent=0
    _
  %s6 = ssub.s32 1, %s4
  %s7 = scalar_select 0, %s6, %s4
  // Predicated region
  $region2: #{convnet_forward.6} parent=0 // pred_check
    _
  $region3: #{convnet_forward.6} parent=0 // pred_check_branch
    %9 = sbr.rel (0) target = $region5
  $region4: #{convnet_forward.6} parent=0 // pred_region
    _
  $region5: #{convnet_forward.6} parent=0 // pred_fallthru
    _
  // Predicated region
  $region6: #{convnet_forward.6} parent=0 // pred_check
    _
  $region7: #{convnet_forward.6} parent=0 // pred_check_branch
    %11 = sbr.rel (0) target = $region9
  $region8: #{convnet_forward.6} parent=0 // pred_region
    _
  $region9: #{convnet_forward.6} parent=0 // pred_fallthru
    _
  // Predicated region
  $region10: #{convnet_forward.6} parent=0 // pred_check
    _
  $region11: #{convnet_forward.6} parent=0 // pred_check_branch
    %13 = sbr.rel (0) target = $region13
  $region12: #{convnet_forward.6} parent=0 // pred_region
    _
  $region13: #{convnet_forward.6} parent=0 // pred_fallthru
    _
  %v15 = vld [vmem:[%s0] sm:$0xf]
  %v16 = vld [vmem:[%s0 + $0x4] sm:$0xf]
  %v17 = vld [vmem:[%s0 + $0x8] sm:$0x3]
  %v18 = vld [vmem:[%s2] sm:$0xff]
  %v19 = vld [vmem:[%s2 + $0x8] sm:$0xff]
  %v20 = vld [vmem:[%s2 + $0x10] sm:$0xff]
  %v21 = vld [vmem:[%s2 + $0x18] sm:$0xff]
  %v22 = vld [vmem:[%s2 + $0x20] sm:$0xff]
  %v23 = vld [vmem:[%s2 + $0x28] sm:$0xff]
  %v24 = vld [vmem:[%s2 + $0x30] sm:$0xff]
  %v25 = vld [vmem:[%s2 + $0x38] sm:$0xff]
  %v26 = vld [vmem:[%s2 + $0x40] sm:$0xff]
  %v27 = vld [vmem:[%s2 + $0x48] sm:$0xff]
  %v28 = vld [vmem:[%s2 + $0x50] sm:$0xff]
  %v29 = vld [vmem:[%s2 + $0x58] sm:$0x11]
  %v30 = vld [vmem:[%s1] sm:$0xff]
  %v31 = vld [vmem:[%s1 + $0x8] sm:$0xff]
  %v32 = vld [vmem:[%s1 + $0x10] sm:$0xf]
  %34 = vset.pattern.permute.xlu0 0
  %35 = vperm.xlu0 %34, %v30
  %v36 = vpop.permute.xlu0 %35
  %39 = vset.pattern.permute.xlu0 0
  %40 = vperm.xlu0 %39, %v31
  %v41 = vpop.permute.xlu0 %40
  %44 = vset.pattern.permute.xlu0 0
  %45 = vperm.xlu0 %44, %v32
  %v46 = vpop.permute.xlu0 %45
  %v51 = vunpack.c.l.b16 %v15
  %v52 = vunpack.c.l.b16 %v16
  %v53 = vunpack.c.l.b16 %v17
  %v54 = vpack.c.b16 %v52, %v51
  %v55 = vpack.c.b16 %v53, %v53
  %v68 = vunpack.c.l.b16 %v18
  %v69 = vunpack.c.h.b16 %v18
  %v70 = vunpack.c.l.b16 %v19
  %v71 = vunpack.c.h.b16 %v19
  %v72 = vunpack.c.l.b16 %v20
  %v73 = vunpack.c.h.b16 %v20
  %v74 = vunpack.c.l.b16 %v21
  %v75 = vunpack.c.h.b16 %v21
  %v76 = vunpack.c.l.b16 %v22
  %v77 = vunpack.c.h.b16 %v22
  %v78 = vunpack.c.l.b16 %v23
  %v79 = vunpack.c.h.b16 %v23
  %v80 = vunpack.c.l.b16 %v24
  %v81 = vunpack.c.h.b16 %v24
  %v82 = vunpack.c.l.b16 %v25
  %v83 = vunpack.c.h.b16 %v25
  %v84 = vunpack.c.l.b16 %v26
  %v85 = vunpack.c.h.b16 %v26
  %v86 = vunpack.c.l.b16 %v27
  %v87 = vunpack.c.h.b16 %v27
  %v88 = vunpack.c.l.b16 %v28
  %v89 = vunpack.c.h.b16 %v28
  %v90 = vunpack.c.l.b16 %v29
  %v91 = vunpack.c.h.b16 %v29
  %v92 = vpack.c.b16 %v70, %v68
  %v93 = vpack.c.b16 %v71, %v69
  %v94 = vpack.c.b16 %v74, %v72
  %v95 = vpack.c.b16 %v75, %v73
  %v96 = vpack.c.b16 %v78, %v76
  %v97 = vpack.c.b16 %v79, %v77
  %v98 = vpack.c.b16 %v82, %v80
  %v99 = vpack.c.b16 %v83, %v81
  %v100 = vpack.c.b16 %v86, %v84
  %v101 = vpack.c.b16 %v87, %v85
  %v102 = vpack.c.b16 %v90, %v88
  %v103 = vpack.c.b16 %v91, %v89
  %vm114 = vcmask 736256
  %v116 = vsel %vm114, %v54, 0
  %v119 = vsel %vm114, %v55, 0
  %vm121 = vcmask 1044480
  %v123 = vsel %vm121, %v102, 0
  %v126 = vsel %vm121, %v103, 0
  %128 = vmatprep.subr.bf16.mxu0 0
  %129 = vmatpush1.bf16.msra.mxu0 0
  %130 = vmatprep.subr.bf16.mxu0 0
  %131 = vmatpush1.bf16.msra.mxu0 0
  %132 = vmatprep.subr.bf16.mxu0 %v126
  %133 = vmatpush1.bf16.msra.mxu0 %v123
  %134 = vmatprep.subr.bf16.mxu0 %v101
  %135 = vmatpush1.bf16.msra.mxu0 %v100
  %136 = vmatprep.subr.bf16.mxu0 %v99
  %137 = vmatpush1.bf16.msra.mxu0 %v98
  %138 = vmatprep.subr.bf16.mxu0 %v97
  %139 = vmatpush1.bf16.msra.mxu0 %v96
  %140 = vmatprep.subr.bf16.mxu0 %v95
  %141 = vmatpush1.bf16.msra.mxu0 %v94
  %142 = vmatprep.subr.bf16.mxu0 %v93
  %143 = vmatpush1.bf16.msra.mxu0 %v92
  %144 = vmatprep.subr.bf16.mxu0 0
  %145 = vmatpush2.bf16.msra.mxu0 0
  %146 = vmatprep.subr.bf16.mxu0 0
  %147 = vmatpush2.bf16.msra.mxu0 0
  %148 = vmatprep.subr.bf16.mxu0 0
  %149 = vmatpush2.bf16.msra.mxu0 0
  %150 = vmatprep.subr.bf16.mxu0 0
  %151 = vmatpush2.bf16.msra.mxu0 0
  %152 = vmatprep.subr.bf16.mxu0 0
  %153 = vmatpush2.bf16.msra.mxu0 0
  %154 = vmatprep.subr.bf16.mxu0 0
  %155 = vmatpush2.bf16.msra.mxu0 0
  %156 = vmatprep.subr.bf16.mxu0 0
  %157 = vmatpush2.bf16.msra.mxu0 0
  %158 = vmatprep.subr.bf16.mxu0 0
  %159 = vmatpush2.bf16.msra.mxu0 0
  %160 = vmatprep.mubr.bf16.mxu0 0
  %161 = vmatmul.mubr.bf16.gmra.mxu0 %v116
  %v162 = vpop.f32.mrf.mxu0
  %v163 = vadd.f32 %v36, %v162
  %v164 = vpop.f32.mrf.mxu0
  %v165 = vadd.f32 %v36, %v164
  %v166 = vpop.f32.mrf.mxu0
  %v167 = vadd.f32 %v41, %v166
  %v168 = vpop.f32.mrf.mxu0
  %v169 = vadd.f32 %v41, %v168
  %170 = vmatprep.mubr.bf16.mxu0 0
  %171 = vmatmul.mubr.bf16.gmra.mxu0 %v119
  %v172 = vpop.f32.mrf.mxu0
  %v173 = vadd.f32 %v46, %v172
  %v174 = vpop.f32.mrf.mxu0
  %v175 = vadd.f32 %v46, %v174
  %v176 = vpop.f32.mrf.mxu0
  %v177 = vpop.f32.mrf.mxu0
  %178 = vdwg.mxu0
  %v179 = vmax.f32 %v163, 0.0
  %v180 = vmax.f32 %v165, 0.0
  %v181 = vmax.f32 %v167, 0.0
  %v182 = vmax.f32 %v169, 0.0
  %v183 = vmax.f32 %v173, 0.0
  %v184 = vmax.f32 %v175, 0.0
  %v185 = vpack.c.bf16 %v181, %v179
  %v186 = vpack.c.bf16 %v182, %v180
  %v187 = vpack.c.bf16 %v183, %v183
  %v188 = vpack.c.bf16 %v184, %v184
  %v193 = vunpack.c.l.b16 %v185
  %v194 = vunpack.c.l.b16 %v186
  %v195 = vunpack.c.h.b16 %v185
  %v196 = vunpack.c.h.b16 %v186
  %v197 = vunpack.c.l.b16 %v187
  %v198 = vunpack.c.l.b16 %v188
  %v199 = vpack.c.b16 %v194, %v193
  %v200 = vpack.c.b16 %v196, %v195
  %v201 = vpack.c.b16 %v198, %v197
  %vm205 = vcmask 1043456
  %vm206 = vcmask 588804
  %vm207 = vmor %vm206, %vm205
  %208 = vst.msk [vmem:[%s3] sm:$0xff] %vm207, %v199
  %209 = vst.msk [vmem:[%s3 + $0x8] sm:$0xff] %vm207, %v200
  %vm210 = vcmask 1041408
  %vm211 = vcmask 586756
  %vm212 = vmor %vm211, %vm210
  %213 = vst.msk [vmem:[%s3 + $0x10] sm:$0x33] %vm212, %v201
  // Predicated region
  $region14: #{convnet_forward.6} parent=0 // pred_check
    _
  $region15: #{convnet_forward.6} parent=0 // pred_check_branch
    %215 = sbr.rel (0) target = $region17
  $region16: #{convnet_forward.6} parent=0 // pred_region
    _
  $region17: #{convnet_forward.6} parent=0 // pred_fallthru
    _
  // Predicated region
  $region18: #{convnet_forward.6} parent=0 // pred_check
    _
  $region19: #{convnet_forward.6} parent=0 // pred_check_branch
    %217 = sbr.rel (0) target = $region21
  $region20: #{convnet_forward.6} parent=0 // pred_region
    _
  $region21: #{convnet_forward.6} parent=0 // pred_fallthru
    _

// kernel: convnet_forward.7
$region0: #{convnet_forward.7}
  #allocation0 [shape = 'u32[]', space=smem, size = 0x4, offset = 0x4, fixed_abs, tag = 'smem constant byte address 0x4 - core index']
  #allocation1 [shape = 'u32[144,128]{1,0:T(1,128)}', space=vmem, size = 0x12000, scoped, tag = 'internal scratch']
  %s0 = inlined_call_operand.vmem [shape: bf16[2,2000], index: 0, kind: input, shape index: {}]
  %s1 = inlined_call_operand.vmem [shape: bf16[2000,500], index: 1, kind: input, shape index: {}]
  %s2 = inlined_call_operand.vmem [shape: f32[1,500], index: 2, kind: input, shape index: {}]
  %s3 = inlined_call_operand.vmem [shape: bf16[500,10], index: 3, kind: input, shape index: {}]
  %s4 = inlined_call_operand.vmem [shape: f32[1,10], index: 4, kind: input, shape index: {}]
  %s5 = inlined_call_operand.hbm [shape: f32[2,10], index: 5, kind: output, shape index: {}]
  %s6 = sld [smem:[#allocation0]]
  $region30: #{convnet_forward.7} parent=0
    _
  %s8 = ssub.s32 1, %s6
  %s9 = scalar_select 0, %s8, %s6
  $region1: #{convnet_forward.7} parent=0
    #allocation2 [shape = 'u8[1024]{0}', space=vmem, size = 0x400, scoped, tag = 'output window, operand 0, single buffered']
    #allocation3 [shape = 's32[1]{0}', space=sflag, size = 0x4, scoped, tag = 'scoped memory for convnet_forward.7']
    %10 = vsyncpa [#allocation3], 0
    // Predicated region
    $region2: #{convnet_forward.7} parent=1 // pred_check
      _
    $region3: #{convnet_forward.7} parent=1 // pred_check_branch
      %12 = sbr.rel (0) target = $region5
    $region4: #{convnet_forward.7} parent=1 // pred_region
      _
    $region5: #{convnet_forward.7} parent=1 // pred_fallthru
      _
    // Predicated region
    $region6: #{convnet_forward.7} parent=1 // pred_check
      _
    $region7: #{convnet_forward.7} parent=1 // pred_check_branch
      %14 = sbr.rel (0) target = $region9
    $region8: #{convnet_forward.7} parent=1 // pred_region
      _
    $region9: #{convnet_forward.7} parent=1 // pred_fallthru
      _
    // Predicated region
    $region10: #{convnet_forward.7} parent=1 // pred_check
      _
    $region11: #{convnet_forward.7} parent=1 // pred_check_branch
      %16 = sbr.rel (0) target = $region13
    $region12: #{convnet_forward.7} parent=1 // pred_region
      _
    $region13: #{convnet_forward.7} parent=1 // pred_fallthru
      _
    // Predicated region
    $region14: #{convnet_forward.7} parent=1 // pred_check
      _
    $region15: #{convnet_forward.7} parent=1 // pred_check_branch
      %18 = sbr.rel (0) target = $region17
    $region16: #{convnet_forward.7} parent=1 // pred_region
      _
    $region17: #{convnet_forward.7} parent=1 // pred_fallthru
      _
    // Predicated region
    $region18: #{convnet_forward.7} parent=1 // pred_check
      _
    $region19: #{convnet_forward.7} parent=1 // pred_check_branch
      %20 = sbr.rel (0) target = $region21
    $region20: #{convnet_forward.7} parent=1 // pred_region
      _
    $region21: #{convnet_forward.7} parent=1 // pred_fallthru
      _
    %v22 = vld [vmem:[%s0] sm:$0xff]
    %v23 = vld [vmem:[%s0 + $0x8] sm:$0xff]
    %v24 = vld [vmem:[%s1] sm:$0xff]
    %v25 = vld [vmem:[%s1 + $0x8] sm:$0xff]
    %v26 = vld [vmem:[%s1 + $0x10] sm:$0xff]
    %v27 = vld [vmem:[%s1 + $0x18] sm:$0xff]
    %v28 = vld [vmem:[%s1 + $0x20] sm:$0xff]
    %v29 = vld [vmem:[%s1 + $0x28] sm:$0xff]
    %v30 = vld [vmem:[%s1 + $0x30] sm:$0xff]
    %v31 = vld [vmem:[%s1 + $0x38] sm:$0xff]
    %v32 = vld [vmem:[%s1 + $0x40] sm:$0xff]
    %v33 = vld [vmem:[%s1 + $0x48] sm:$0xff]
    %v34 = vld [vmem:[%s1 + $0x50] sm:$0xff]
    %v35 = vld [vmem:[%s1 + $0x58] sm:$0xff]
    %v36 = vld [vmem:[%s1 + $0x60] sm:$0xff]
    %v37 = vld [vmem:[%s1 + $0x68] sm:$0xff]
    %v38 = vld [vmem:[%s1 + $0x70] sm:$0xff]
    %v39 = vld [vmem:[%s1 + $0x78] sm:$0xff]
    %v40 = vld [vmem:[%s1 + $0x80] sm:$0xff]
    %v41 = vld [vmem:[%s1 + $0x88] sm:$0xff]
    %v42 = vld [vmem:[%s1 + $0x90] sm:$0xff]
    %v43 = vld [vmem:[%s1 + $0x98] sm:$0xff]
    %v44 = vld [vmem:[%s1 + $0xa0] sm:$0xff]
    %v45 = vld [vmem:[%s1 + $0xa8] sm:$0xff]
    %v46 = vld [vmem:[%s1 + $0xb0] sm:$0xff]
    %v47 = vld [vmem:[%s1 + $0xb8] sm:$0xff]
    %v48 = vld [vmem:[%s1 + $0xc0] sm:$0xff]
    %v49 = vld [vmem:[%s1 + $0xc8] sm:$0xff]
    %v50 = vld [vmem:[%s1 + $0xd0] sm:$0xff]
    %v51 = vld [vmem:[%s1 + $0xd8] sm:$0xff]
    %v52 = vld [vmem:[%s1 + $0xe0] sm:$0xff]
    %v53 = vld [vmem:[%s1 + $0xe8] sm:$0xff]
    %v54 = vld [vmem:[%s1 + $0xf0] sm:$0xff]
    %v55 = vld [vmem:[%s1 + $0xf8] sm:$0xff]
    %v56 = vld [vmem:[%s1 + $0x100] sm:$0xff]
    %v57 = vld [vmem:[%s1 + $0x108] sm:$0xff]
    %v58 = vld [vmem:[%s1 + $0x110] sm:$0xff]
    %v59 = vld [vmem:[%s1 + $0x118] sm:$0xff]
    %v60 = vld [vmem:[%s1 + $0x120] sm:$0xff]
    %v61 = vld [vmem:[%s1 + $0x128] sm:$0xff]
    %v62 = vld [vmem:[%s1 + $0x130] sm:$0xff]
    %v63 = vld [vmem:[%s1 + $0x138] sm:$0xff]
    %v64 = vld [vmem:[%s1 + $0x140] sm:$0xff]
    %v65 = vld [vmem:[%s1 + $0x148] sm:$0xff]
    %v66 = vld [vmem:[%s1 + $0x150] sm:$0xff]
    %v67 = vld [vmem:[%s1 + $0x158] sm:$0xff]
    %v68 = vld [vmem:[%s1 + $0x160] sm:$0xff]
    %v69 = vld [vmem:[%s1 + $0x168] sm:$0xff]
    %v70 = vld [vmem:[%s1 + $0x170] sm:$0xff]
    %v71 = vld [vmem:[%s1 + $0x178] sm:$0xff]
    %v72 = vld [vmem:[%s1 + $0x180] sm:$0xff]
    %v73 = vld [vmem:[%s1 + $0x188] sm:$0xff]
    %v74 = vld [vmem:[%s1 + $0x190] sm:$0xff]
    %v75 = vld [vmem:[%s1 + $0x198] sm:$0xff]
    %v76 = vld [vmem:[%s1 + $0x1a0] sm:$0xff]
    %v77 = vld [vmem:[%s1 + $0x1a8] sm:$0xff]
    %v78 = vld [vmem:[%s1 + $0x1b0] sm:$0xff]
    %v79 = vld [vmem:[%s1 + $0x1b8] sm:$0xff]
    %v80 = vld [vmem:[%s1 + $0x1c0] sm:$0xff]
    %v81 = vld [vmem:[%s1 + $0x1c8] sm:$0xff]
    %v82 = vld [vmem:[%s1 + $0x1d0] sm:$0xff]
    %v83 = vld [vmem:[%s1 + $0x1d8] sm:$0xff]
    %v84 = vld [vmem:[%s1 + $0x1e0] sm:$0xff]
    %v85 = vld [vmem:[%s1 + $0x1e8] sm:$0xff]
    %v86 = vld [vmem:[%s1 + $0x1f0] sm:$0xff]
    %v87 = vld [vmem:[%s1 + $0x1f8] sm:$0xff]
    %v88 = vld [vmem:[%s1 + $0x200] sm:$0xff]
    %v89 = vld [vmem:[%s1 + $0x208] sm:$0xff]
    %v90 = vld [vmem:[%s1 + $0x210] sm:$0xff]
    %v91 = vld [vmem:[%s1 + $0x218] sm:$0xff]
    %v92 = vld [vmem:[%s1 + $0x220] sm:$0xff]
    %v93 = vld [vmem:[%s1 + $0x228] sm:$0xff]
    %v94 = vld [vmem:[%s1 + $0x230] sm:$0xff]
    %v95 = vld [vmem:[%s1 + $0x238] sm:$0xff]
    %v96 = vld [vmem:[%s1 + $0x240] sm:$0xff]
    %v97 = vld [vmem:[%s1 + $0x248] sm:$0xff]
    %v98 = vld [vmem:[%s1 + $0x250] sm:$0xff]
    %v99 = vld [vmem:[%s1 + $0x258] sm:$0xff]
    %v100 = vld [vmem:[%s1 + $0x260] sm:$0xff]
    %v101 = vld [vmem:[%s1 + $0x268] sm:$0xff]
    %v102 = vld [vmem:[%s1 + $0x270] sm:$0xff]
    %v103 = vld [vmem:[%s1 + $0x278] sm:$0xff]
    %v104 = vld [vmem:[%s1 + $0x280] sm:$0xff]
    %v105 = vld [vmem:[%s1 + $0x288] sm:$0xff]
    %v106 = vld [vmem:[%s1 + $0x290] sm:$0xff]
    %v107 = vld [vmem:[%s1 + $0x298] sm:$0xff]
    %v108 = vld [vmem:[%s1 + $0x2a0] sm:$0xff]
    %v109 = vld [vmem:[%s1 + $0x2a8] sm:$0xff]
    %v110 = vld [vmem:[%s1 + $0x2b0] sm:$0xff]
    %v111 = vld [vmem:[%s1 + $0x2b8] sm:$0xff]
    %v112 = vld [vmem:[%s1 + $0x2c0] sm:$0xff]
    %v113 = vld [vmem:[%s1 + $0x2c8] sm:$0xff]
    %v114 = vld [vmem:[%s1 + $0x2d0] sm:$0xff]
    %v115 = vld [vmem:[%s1 + $0x2d8] sm:$0xff]
    %v116 = vld [vmem:[%s1 + $0x2e0] sm:$0xff]
    %v117 = vld [vmem:[%s1 + $0x2e8] sm:$0xff]
    %v118 = vld [vmem:[%s1 + $0x2f0] sm:$0xff]
    %v119 = vld [vmem:[%s1 + $0x2f8] sm:$0xff]
    %v120 = vld [vmem:[%s1 + $0x300] sm:$0xff]
    %v121 = vld [vmem:[%s1 + $0x308] sm:$0xff]
    %v122 = vld [vmem:[%s1 + $0x310] sm:$0xff]
    %v123 = vld [vmem:[%s1 + $0x318] sm:$0xff]
    %v124 = vld [vmem:[%s1 + $0x320] sm:$0xff]
    %v125 = vld [vmem:[%s1 + $0x328] sm:$0xff]
    %v126 = vld [vmem:[%s1 + $0x330] sm:$0xff]
    %v127 = vld [vmem:[%s1 + $0x338] sm:$0xff]
    %v128 = vld [vmem:[%s1 + $0x340] sm:$0xff]
    %v129 = vld [vmem:[%s1 + $0x348] sm:$0xff]
    %v130 = vld [vmem:[%s1 + $0x350] sm:$0xff]
    %v131 = vld [vmem:[%s1 + $0x358] sm:$0xff]
    %v132 = vld [vmem:[%s1 + $0x360] sm:$0xff]
    %v133 = vld [vmem:[%s1 + $0x368] sm:$0xff]
    %v134 = vld [vmem:[%s1 + $0x370] sm:$0xff]
    %v135 = vld [vmem:[%s1 + $0x378] sm:$0xff]
    %v136 = vld [vmem:[%s1 + $0x380] sm:$0xff]
    %v137 = vld [vmem:[%s1 + $0x388] sm:$0xff]
    %v138 = vld [vmem:[%s1 + $0x390] sm:$0xff]
    %v139 = vld [vmem:[%s1 + $0x398] sm:$0xff]
    %v140 = vld [vmem:[%s1 + $0x3a0] sm:$0xff]
    %v141 = vld [vmem:[%s1 + $0x3a8] sm:$0xff]
    %v142 = vld [vmem:[%s1 + $0x3b0] sm:$0xff]
    %v143 = vld [vmem:[%s1 + $0x3b8] sm:$0xff]
    %v144 = vld [vmem:[%s1 + $0x3c0] sm:$0xff]
    %v145 = vld [vmem:[%s1 + $0x3c8] sm:$0xff]
    %v146 = vld [vmem:[%s1 + $0x3d0] sm:$0xff]
    %v147 = vld [vmem:[%s1 + $0x3d8] sm:$0xff]
    %v148 = vld [vmem:[%s1 + $0x3e0] sm:$0xff]
    %v149 = vld [vmem:[%s1 + $0x3e8] sm:$0xff]
    %v150 = vld [vmem:[%s1 + $0x3f0] sm:$0xff]
    %v151 = vld [vmem:[%s1 + $0x3f8] sm:$0xff]
    %v152 = vld [vmem:[%s1 + $0x400] sm:$0xff]
    %v153 = vld [vmem:[%s1 + $0x408] sm:$0xff]
    %v154 = vld [vmem:[%s1 + $0x410] sm:$0xff]
    %v155 = vld [vmem:[%s1 + $0x418] sm:$0xff]
    %v156 = vld [vmem:[%s1 + $0x420] sm:$0xff]
    %v157 = vld [vmem:[%s1 + $0x428] sm:$0xff]
    %v158 = vld [vmem:[%s1 + $0x430] sm:$0xff]
    %v159 = vld [vmem:[%s1 + $0x438] sm:$0xff]
    %v160 = vld [vmem:[%s1 + $0x440] sm:$0xff]
    %v161 = vld [vmem:[%s1 + $0x448] sm:$0xff]
    %v162 = vld [vmem:[%s1 + $0x450] sm:$0xff]
    %v163 = vld [vmem:[%s1 + $0x458] sm:$0xff]
    %v164 = vld [vmem:[%s1 + $0x460] sm:$0xff]
    %v165 = vld [vmem:[%s1 + $0x468] sm:$0xff]
    %v166 = vld [vmem:[%s1 + $0x470] sm:$0xff]
    %v167 = vld [vmem:[%s1 + $0x478] sm:$0xff]
    %v168 = vld [vmem:[%s1 + $0x480] sm:$0xff]
    %v169 = vld [vmem:[%s1 + $0x488] sm:$0xff]
    %v170 = vld [vmem:[%s1 + $0x490] sm:$0xff]
    %v171 = vld [vmem:[%s1 + $0x498] sm:$0xff]
    %v172 = vld [vmem:[%s1 + $0x4a0] sm:$0xff]
    %v173 = vld [vmem:[%s1 + $0x4a8] sm:$0xff]
    %v174 = vld [vmem:[%s1 + $0x4b0] sm:$0xff]
    %v175 = vld [vmem:[%s1 + $0x4b8] sm:$0xff]
    %v176 = vld [vmem:[%s1 + $0x4c0] sm:$0xff]
    %v177 = vld [vmem:[%s1 + $0x4c8] sm:$0xff]
    %v178 = vld [vmem:[%s1 + $0x4d0] sm:$0xff]
    %v179 = vld [vmem:[%s1 + $0x4d8] sm:$0xff]
    %v180 = vld [vmem:[%s1 + $0x4e0] sm:$0xff]
    %v181 = vld [vmem:[%s1 + $0x4e8] sm:$0xff]
    %v182 = vld [vmem:[%s1 + $0x4f0] sm:$0xff]
    %v183 = vld [vmem:[%s1 + $0x4f8] sm:$0xff]
    %v184 = vld [vmem:[%s1 + $0x500] sm:$0xff]
    %v185 = vld [vmem:[%s1 + $0x508] sm:$0xff]
    %v186 = vld [vmem:[%s1 + $0x510] sm:$0xff]
    %v187 = vld [vmem:[%s1 + $0x518] sm:$0xff]
    %v188 = vld [vmem:[%s1 + $0x520] sm:$0xff]
    %v189 = vld [vmem:[%s1 + $0x528] sm:$0xff]
    %v190 = vld [vmem:[%s1 + $0x530] sm:$0xff]
    %v191 = vld [vmem:[%s1 + $0x538] sm:$0xff]
    %v192 = vld [vmem:[%s1 + $0x540] sm:$0xff]
    %v193 = vld [vmem:[%s1 + $0x548] sm:$0xff]
    %v194 = vld [vmem:[%s1 + $0x550] sm:$0xff]
    %v195 = vld [vmem:[%s1 + $0x558] sm:$0xff]
    %v196 = vld [vmem:[%s1 + $0x560] sm:$0xff]
    %v197 = vld [vmem:[%s1 + $0x568] sm:$0xff]
    %v198 = vld [vmem:[%s1 + $0x570] sm:$0xff]
    %v199 = vld [vmem:[%s1 + $0x578] sm:$0xff]
    %v200 = vld [vmem:[%s1 + $0x580] sm:$0xff]
    %v201 = vld [vmem:[%s1 + $0x588] sm:$0xff]
    %v202 = vld [vmem:[%s1 + $0x590] sm:$0xff]
    %v203 = vld [vmem:[%s1 + $0x598] sm:$0xff]
    %v204 = vld [vmem:[%s1 + $0x5a0] sm:$0xff]
    %v205 = vld [vmem:[%s1 + $0x5a8] sm:$0xff]
    %v206 = vld [vmem:[%s1 + $0x5b0] sm:$0xff]
    %v207 = vld [vmem:[%s1 + $0x5b8] sm:$0xff]
    %v208 = vld [vmem:[%s1 + $0x5c0] sm:$0xff]
    %v209 = vld [vmem:[%s1 + $0x5c8] sm:$0xff]
    %v210 = vld [vmem:[%s1 + $0x5d0] sm:$0xff]
    %v211 = vld [vmem:[%s1 + $0x5d8] sm:$0xff]
    %v212 = vld [vmem:[%s1 + $0x5e0] sm:$0xff]
    %v213 = vld [vmem:[%s1 + $0x5e8] sm:$0xff]
    %v214 = vld [vmem:[%s1 + $0x5f0] sm:$0xff]
    %v215 = vld [vmem:[%s1 + $0x5f8] sm:$0xff]
    %v216 = vld [vmem:[%s1 + $0x600] sm:$0xff]
    %v217 = vld [vmem:[%s1 + $0x608] sm:$0xff]
    %v218 = vld [vmem:[%s1 + $0x610] sm:$0xff]
    %v219 = vld [vmem:[%s1 + $0x618] sm:$0xff]
    %v220 = vld [vmem:[%s1 + $0x620] sm:$0xff]
    %v221 = vld [vmem:[%s1 + $0x628] sm:$0xff]
    %v222 = vld [vmem:[%s1 + $0x630] sm:$0xff]
    %v223 = vld [vmem:[%s1 + $0x638] sm:$0xff]
    %v224 = vld [vmem:[%s1 + $0x640] sm:$0xff]
    %v225 = vld [vmem:[%s1 + $0x648] sm:$0xff]
    %v226 = vld [vmem:[%s1 + $0x650] sm:$0xff]
    %v227 = vld [vmem:[%s1 + $0x658] sm:$0xff]
    %v228 = vld [vmem:[%s1 + $0x660] sm:$0xff]
    %v229 = vld [vmem:[%s1 + $0x668] sm:$0xff]
    %v230 = vld [vmem:[%s1 + $0x670] sm:$0xff]
    %v231 = vld [vmem:[%s1 + $0x678] sm:$0xff]
    %v232 = vld [vmem:[%s1 + $0x680] sm:$0xff]
    %v233 = vld [vmem:[%s1 + $0x688] sm:$0xff]
    %v234 = vld [vmem:[%s1 + $0x690] sm:$0xff]
    %v235 = vld [vmem:[%s1 + $0x698] sm:$0xff]
    %v236 = vld [vmem:[%s1 + $0x6a0] sm:$0xff]
    %v237 = vld [vmem:[%s1 + $0x6a8] sm:$0xff]
    %v238 = vld [vmem:[%s1 + $0x6b0] sm:$0xff]
    %v239 = vld [vmem:[%s1 + $0x6b8] sm:$0xff]
    %v240 = vld [vmem:[%s1 + $0x6c0] sm:$0xff]
    %v241 = vld [vmem:[%s1 + $0x6c8] sm:$0xff]
    %v242 = vld [vmem:[%s1 + $0x6d0] sm:$0xff]
    %v243 = vld [vmem:[%s1 + $0x6d8] sm:$0xff]
    %v244 = vld [vmem:[%s1 + $0x6e0] sm:$0xff]
    %v245 = vld [vmem:[%s1 + $0x6e8] sm:$0xff]
    %v246 = vld [vmem:[%s1 + $0x6f0] sm:$0xff]
    %v247 = vld [vmem:[%s1 + $0x6f8] sm:$0xff]
    %v248 = vld [vmem:[%s1 + $0x700] sm:$0xff]
    %v249 = vld [vmem:[%s1 + $0x708] sm:$0xff]
    %v250 = vld [vmem:[%s1 + $0x710] sm:$0xff]
    %v251 = vld [vmem:[%s1 + $0x718] sm:$0xff]
    %v252 = vld [vmem:[%s1 + $0x720] sm:$0xff]
    %v253 = vld [vmem:[%s1 + $0x728] sm:$0xff]
    %v254 = vld [vmem:[%s1 + $0x730] sm:$0xff]
    %v255 = vld [vmem:[%s1 + $0x738] sm:$0xff]
    %v256 = vld [vmem:[%s1 + $0x740] sm:$0xff]
    %v257 = vld [vmem:[%s1 + $0x748] sm:$0xff]
    %v258 = vld [vmem:[%s1 + $0x750] sm:$0xff]
    %v259 = vld [vmem:[%s1 + $0x758] sm:$0xff]
    %v260 = vld [vmem:[%s1 + $0x760] sm:$0xff]
    %v261 = vld [vmem:[%s1 + $0x768] sm:$0xff]
    %v262 = vld [vmem:[%s1 + $0x770] sm:$0xff]
    %v263 = vld [vmem:[%s1 + $0x778] sm:$0xff]
    %v264 = vld [vmem:[%s1 + $0x780] sm:$0xff]
    %v265 = vld [vmem:[%s1 + $0x788] sm:$0xff]
    %v266 = vld [vmem:[%s1 + $0x790] sm:$0xff]
    %v267 = vld [vmem:[%s1 + $0x798] sm:$0xff]
    %v268 = vld [vmem:[%s1 + $0x7a0] sm:$0xff]
    %v269 = vld [vmem:[%s1 + $0x7a8] sm:$0xff]
    %v270 = vld [vmem:[%s1 + $0x7b0] sm:$0xff]
    %v271 = vld [vmem:[%s1 + $0x7b8] sm:$0xff]
    %v272 = vld [vmem:[%s1 + $0x7c0] sm:$0xff]
    %v273 = vld [vmem:[%s1 + $0x7c8] sm:$0xff]
    %v274 = vld [vmem:[%s1 + $0x7d0] sm:$0xff]
    %v275 = vld [vmem:[%s1 + $0x7d8] sm:$0xff]
    %v276 = vld [vmem:[%s1 + $0x7e0] sm:$0xff]
    %v277 = vld [vmem:[%s1 + $0x7e8] sm:$0xff]
    %v278 = vld [vmem:[%s1 + $0x7f0] sm:$0xff]
    %v279 = vld [vmem:[%s1 + $0x7f8] sm:$0xff]
    %v280 = vld [vmem:[%s1 + $0x800] sm:$0xff]
    %v281 = vld [vmem:[%s1 + $0x808] sm:$0xff]
    %v282 = vld [vmem:[%s1 + $0x810] sm:$0xff]
    %v283 = vld [vmem:[%s1 + $0x818] sm:$0xff]
    %v284 = vld [vmem:[%s1 + $0x820] sm:$0xff]
    %v285 = vld [vmem:[%s1 + $0x828] sm:$0xff]
    %v286 = vld [vmem:[%s1 + $0x830] sm:$0xff]
    %v287 = vld [vmem:[%s1 + $0x838] sm:$0xff]
    %v288 = vld [vmem:[%s1 + $0x840] sm:$0xff]
    %v289 = vld [vmem:[%s1 + $0x848] sm:$0xff]
    %v290 = vld [vmem:[%s1 + $0x850] sm:$0xff]
    %v291 = vld [vmem:[%s1 + $0x858] sm:$0xff]
    %v292 = vld [vmem:[%s1 + $0x860] sm:$0xff]
    %v293 = vld [vmem:[%s1 + $0x868] sm:$0xff]
    %v294 = vld [vmem:[%s1 + $0x870] sm:$0xff]
    %v295 = vld [vmem:[%s1 + $0x878] sm:$0xff]
    %v296 = vld [vmem:[%s1 + $0x880] sm:$0xff]
    %v297 = vld [vmem:[%s1 + $0x888] sm:$0xff]
    %v298 = vld [vmem:[%s1 + $0x890] sm:$0xff]
    %v299 = vld [vmem:[%s1 + $0x898] sm:$0xff]
    %v300 = vld [vmem:[%s1 + $0x8a0] sm:$0xff]
    %v301 = vld [vmem:[%s1 + $0x8a8] sm:$0xff]
    %v302 = vld [vmem:[%s1 + $0x8b0] sm:$0xff]
    %v303 = vld [vmem:[%s1 + $0x8b8] sm:$0xff]
    %v304 = vld [vmem:[%s1 + $0x8c0] sm:$0xff]
    %v305 = vld [vmem:[%s1 + $0x8c8] sm:$0xff]
    %v306 = vld [vmem:[%s1 + $0x8d0] sm:$0xff]
    %v307 = vld [vmem:[%s1 + $0x8d8] sm:$0xff]
    %v308 = vld [vmem:[%s1 + $0x8e0] sm:$0xff]
    %v309 = vld [vmem:[%s1 + $0x8e8] sm:$0xff]
    %v310 = vld [vmem:[%s1 + $0x8f0] sm:$0xff]
    %v311 = vld [vmem:[%s1 + $0x8f8] sm:$0xff]
    %v312 = vld [vmem:[%s1 + $0x900] sm:$0xff]
    %v313 = vld [vmem:[%s1 + $0x908] sm:$0xff]
    %v314 = vld [vmem:[%s1 + $0x910] sm:$0xff]
    %v315 = vld [vmem:[%s1 + $0x918] sm:$0xff]
    %v316 = vld [vmem:[%s1 + $0x920] sm:$0xff]
    %v317 = vld [vmem:[%s1 + $0x928] sm:$0xff]
    %v318 = vld [vmem:[%s1 + $0x930] sm:$0xff]
    %v319 = vld [vmem:[%s1 + $0x938] sm:$0xff]
    %v320 = vld [vmem:[%s1 + $0x940] sm:$0xff]
    %v321 = vld [vmem:[%s1 + $0x948] sm:$0xff]
    %v322 = vld [vmem:[%s1 + $0x950] sm:$0xff]
    %v323 = vld [vmem:[%s1 + $0x958] sm:$0xff]
    %v324 = vld [vmem:[%s1 + $0x960] sm:$0xff]
    %v325 = vld [vmem:[%s1 + $0x968] sm:$0xff]
    %v326 = vld [vmem:[%s1 + $0x970] sm:$0xff]
    %v327 = vld [vmem:[%s1 + $0x978] sm:$0xff]
    %v328 = vld [vmem:[%s1 + $0x980] sm:$0xff]
    %v329 = vld [vmem:[%s1 + $0x988] sm:$0xff]
    %v330 = vld [vmem:[%s1 + $0x990] sm:$0xff]
    %v331 = vld [vmem:[%s1 + $0x998] sm:$0xff]
    %v332 = vld [vmem:[%s1 + $0x9a0] sm:$0xff]
    %v333 = vld [vmem:[%s1 + $0x9a8] sm:$0xff]
    %v334 = vld [vmem:[%s1 + $0x9b0] sm:$0xff]
    %v335 = vld [vmem:[%s1 + $0x9b8] sm:$0xff]
    %v336 = vld [vmem:[%s1 + $0x9c0] sm:$0xff]
    %v337 = vld [vmem:[%s1 + $0x9c8] sm:$0xff]
    %v338 = vld [vmem:[%s1 + $0x9d0] sm:$0xff]
    %v339 = vld [vmem:[%s1 + $0x9d8] sm:$0xff]
    %v340 = vld [vmem:[%s1 + $0x9e0] sm:$0xff]
    %v341 = vld [vmem:[%s1 + $0x9e8] sm:$0xff]
    %v342 = vld [vmem:[%s1 + $0x9f0] sm:$0xff]
    %v343 = vld [vmem:[%s1 + $0x9f8] sm:$0xff]
    %v344 = vld [vmem:[%s1 + $0xa00] sm:$0xff]
    %v345 = vld [vmem:[%s1 + $0xa08] sm:$0xff]
    %v346 = vld [vmem:[%s1 + $0xa10] sm:$0xff]
    %v347 = vld [vmem:[%s1 + $0xa18] sm:$0xff]
    %v348 = vld [vmem:[%s1 + $0xa20] sm:$0xff]
    %v349 = vld [vmem:[%s1 + $0xa28] sm:$0xff]
    %v350 = vld [vmem:[%s1 + $0xa30] sm:$0xff]
    %v351 = vld [vmem:[%s1 + $0xa38] sm:$0xff]
    %v352 = vld [vmem:[%s1 + $0xa40] sm:$0xff]
    %v353 = vld [vmem:[%s1 + $0xa48] sm:$0xff]
    %v354 = vld [vmem:[%s1 + $0xa50] sm:$0xff]
    %v355 = vld [vmem:[%s1 + $0xa58] sm:$0xff]
    %v356 = vld [vmem:[%s1 + $0xa60] sm:$0xff]
    %v357 = vld [vmem:[%s1 + $0xa68] sm:$0xff]
    %v358 = vld [vmem:[%s1 + $0xa70] sm:$0xff]
    %v359 = vld [vmem:[%s1 + $0xa78] sm:$0xff]
    %v360 = vld [vmem:[%s1 + $0xa80] sm:$0xff]
    %v361 = vld [vmem:[%s1 + $0xa88] sm:$0xff]
    %v362 = vld [vmem:[%s1 + $0xa90] sm:$0xff]
    %v363 = vld [vmem:[%s1 + $0xa98] sm:$0xff]
    %v364 = vld [vmem:[%s1 + $0xaa0] sm:$0xff]
    %v365 = vld [vmem:[%s1 + $0xaa8] sm:$0xff]
    %v366 = vld [vmem:[%s1 + $0xab0] sm:$0xff]
    %v367 = vld [vmem:[%s1 + $0xab8] sm:$0xff]
    %v368 = vld [vmem:[%s1 + $0xac0] sm:$0xff]
    %v369 = vld [vmem:[%s1 + $0xac8] sm:$0xff]
    %v370 = vld [vmem:[%s1 + $0xad0] sm:$0xff]
    %v371 = vld [vmem:[%s1 + $0xad8] sm:$0xff]
    %v372 = vld [vmem:[%s1 + $0xae0] sm:$0xff]
    %v373 = vld [vmem:[%s1 + $0xae8] sm:$0xff]
    %v374 = vld [vmem:[%s1 + $0xaf0] sm:$0xff]
    %v375 = vld [vmem:[%s1 + $0xaf8] sm:$0xff]
    %v376 = vld [vmem:[%s1 + $0xb00] sm:$0xff]
    %v377 = vld [vmem:[%s1 + $0xb08] sm:$0xff]
    %v378 = vld [vmem:[%s1 + $0xb10] sm:$0xff]
    %v379 = vld [vmem:[%s1 + $0xb18] sm:$0xff]
    %v380 = vld [vmem:[%s1 + $0xb20] sm:$0xff]
    %v381 = vld [vmem:[%s1 + $0xb28] sm:$0xff]
    %v382 = vld [vmem:[%s1 + $0xb30] sm:$0xff]
    %v383 = vld [vmem:[%s1 + $0xb38] sm:$0xff]
    %v384 = vld [vmem:[%s1 + $0xb40] sm:$0xff]
    %v385 = vld [vmem:[%s1 + $0xb48] sm:$0xff]
    %v386 = vld [vmem:[%s1 + $0xb50] sm:$0xff]
    %v387 = vld [vmem:[%s1 + $0xb58] sm:$0xff]
    %v388 = vld [vmem:[%s1 + $0xb60] sm:$0xff]
    %v389 = vld [vmem:[%s1 + $0xb68] sm:$0xff]
    %v390 = vld [vmem:[%s1 + $0xb70] sm:$0xff]
    %v391 = vld [vmem:[%s1 + $0xb78] sm:$0xff]
    %v392 = vld [vmem:[%s1 + $0xb80] sm:$0xff]
    %v393 = vld [vmem:[%s1 + $0xb88] sm:$0xff]
    %v394 = vld [vmem:[%s1 + $0xb90] sm:$0xff]
    %v395 = vld [vmem:[%s1 + $0xb98] sm:$0xff]
    %v396 = vld [vmem:[%s1 + $0xba0] sm:$0xff]
    %v397 = vld [vmem:[%s1 + $0xba8] sm:$0xff]
    %v398 = vld [vmem:[%s1 + $0xbb0] sm:$0xff]
    %v399 = vld [vmem:[%s1 + $0xbb8] sm:$0xff]
    %v400 = vld [vmem:[%s1 + $0xbc0] sm:$0xff]
    %v401 = vld [vmem:[%s1 + $0xbc8] sm:$0xff]
    %v402 = vld [vmem:[%s1 + $0xbd0] sm:$0xff]
    %v403 = vld [vmem:[%s1 + $0xbd8] sm:$0xff]
    %v404 = vld [vmem:[%s1 + $0xbe0] sm:$0xff]
    %v405 = vld [vmem:[%s1 + $0xbe8] sm:$0xff]
    %v406 = vld [vmem:[%s1 + $0xbf0] sm:$0xff]
    %v407 = vld [vmem:[%s1 + $0xbf8] sm:$0xff]
    %v408 = vld [vmem:[%s1 + $0xc00] sm:$0xff]
    %v409 = vld [vmem:[%s1 + $0xc08] sm:$0xff]
    %v410 = vld [vmem:[%s1 + $0xc10] sm:$0xff]
    %v411 = vld [vmem:[%s1 + $0xc18] sm:$0xff]
    %v412 = vld [vmem:[%s1 + $0xc20] sm:$0xff]
    %v413 = vld [vmem:[%s1 + $0xc28] sm:$0xff]
    %v414 = vld [vmem:[%s1 + $0xc30] sm:$0xff]
    %v415 = vld [vmem:[%s1 + $0xc38] sm:$0xff]
    %v416 = vld [vmem:[%s1 + $0xc40] sm:$0xff]
    %v417 = vld [vmem:[%s1 + $0xc48] sm:$0xff]
    %v418 = vld [vmem:[%s1 + $0xc50] sm:$0xff]
    %v419 = vld [vmem:[%s1 + $0xc58] sm:$0xff]
    %v420 = vld [vmem:[%s1 + $0xc60] sm:$0xff]
    %v421 = vld [vmem:[%s1 + $0xc68] sm:$0xff]
    %v422 = vld [vmem:[%s1 + $0xc70] sm:$0xff]
    %v423 = vld [vmem:[%s1 + $0xc78] sm:$0xff]
    %v424 = vld [vmem:[%s1 + $0xc80] sm:$0xff]
    %v425 = vld [vmem:[%s1 + $0xc88] sm:$0xff]
    %v426 = vld [vmem:[%s1 + $0xc90] sm:$0xff]
    %v427 = vld [vmem:[%s1 + $0xc98] sm:$0xff]
    %v428 = vld [vmem:[%s1 + $0xca0] sm:$0xff]
    %v429 = vld [vmem:[%s1 + $0xca8] sm:$0xff]
    %v430 = vld [vmem:[%s1 + $0xcb0] sm:$0xff]
    %v431 = vld [vmem:[%s1 + $0xcb8] sm:$0xff]
    %v432 = vld [vmem:[%s1 + $0xcc0] sm:$0xff]
    %v433 = vld [vmem:[%s1 + $0xcc8] sm:$0xff]
    %v434 = vld [vmem:[%s1 + $0xcd0] sm:$0xff]
    %v435 = vld [vmem:[%s1 + $0xcd8] sm:$0xff]
    %v436 = vld [vmem:[%s1 + $0xce0] sm:$0xff]
    %v437 = vld [vmem:[%s1 + $0xce8] sm:$0xff]
    %v438 = vld [vmem:[%s1 + $0xcf0] sm:$0xff]
    %v439 = vld [vmem:[%s1 + $0xcf8] sm:$0xff]
    %v440 = vld [vmem:[%s1 + $0xd00] sm:$0xff]
    %v441 = vld [vmem:[%s1 + $0xd08] sm:$0xff]
    %v442 = vld [vmem:[%s1 + $0xd10] sm:$0xff]
    %v443 = vld [vmem:[%s1 + $0xd18] sm:$0xff]
    %v444 = vld [vmem:[%s1 + $0xd20] sm:$0xff]
    %v445 = vld [vmem:[%s1 + $0xd28] sm:$0xff]
    %v446 = vld [vmem:[%s1 + $0xd30] sm:$0xff]
    %v447 = vld [vmem:[%s1 + $0xd38] sm:$0xff]
    %v448 = vld [vmem:[%s1 + $0xd40] sm:$0xff]
    %v449 = vld [vmem:[%s1 + $0xd48] sm:$0xff]
    %v450 = vld [vmem:[%s1 + $0xd50] sm:$0xff]
    %v451 = vld [vmem:[%s1 + $0xd58] sm:$0xff]
    %v452 = vld [vmem:[%s1 + $0xd60] sm:$0xff]
    %v453 = vld [vmem:[%s1 + $0xd68] sm:$0xff]
    %v454 = vld [vmem:[%s1 + $0xd70] sm:$0xff]
    %v455 = vld [vmem:[%s1 + $0xd78] sm:$0xff]
    %v456 = vld [vmem:[%s1 + $0xd80] sm:$0xff]
    %v457 = vld [vmem:[%s1 + $0xd88] sm:$0xff]
    %v458 = vld [vmem:[%s1 + $0xd90] sm:$0xff]
    %v459 = vld [vmem:[%s1 + $0xd98] sm:$0xff]
    %v460 = vld [vmem:[%s1 + $0xda0] sm:$0xff]
    %v461 = vld [vmem:[%s1 + $0xda8] sm:$0xff]
    %v462 = vld [vmem:[%s1 + $0xdb0] sm:$0xff]
    %v463 = vld [vmem:[%s1 + $0xdb8] sm:$0xff]
    %v464 = vld [vmem:[%s1 + $0xdc0] sm:$0xff]
    %v465 = vld [vmem:[%s1 + $0xdc8] sm:$0xff]
    %v466 = vld [vmem:[%s1 + $0xdd0] sm:$0xff]
    %v467 = vld [vmem:[%s1 + $0xdd8] sm:$0xff]
    %v468 = vld [vmem:[%s1 + $0xde0] sm:$0xff]
    %v469 = vld [vmem:[%s1 + $0xde8] sm:$0xff]
    %v470 = vld [vmem:[%s1 + $0xdf0] sm:$0xff]
    %v471 = vld [vmem:[%s1 + $0xdf8] sm:$0xff]
    %v472 = vld [vmem:[%s1 + $0xe00] sm:$0xff]
    %v473 = vld [vmem:[%s1 + $0xe08] sm:$0xff]
    %v474 = vld [vmem:[%s1 + $0xe10] sm:$0xff]
    %v475 = vld [vmem:[%s1 + $0xe18] sm:$0xff]
    %v476 = vld [vmem:[%s1 + $0xe20] sm:$0xff]
    %v477 = vld [vmem:[%s1 + $0xe28] sm:$0xff]
    %v478 = vld [vmem:[%s1 + $0xe30] sm:$0xff]
    %v479 = vld [vmem:[%s1 + $0xe38] sm:$0xff]
    %v480 = vld [vmem:[%s1 + $0xe40] sm:$0xff]
    %v481 = vld [vmem:[%s1 + $0xe48] sm:$0xff]
    %v482 = vld [vmem:[%s1 + $0xe50] sm:$0xff]
    %v483 = vld [vmem:[%s1 + $0xe58] sm:$0xff]
    %v484 = vld [vmem:[%s1 + $0xe60] sm:$0xff]
    %v485 = vld [vmem:[%s1 + $0xe68] sm:$0xff]
    %v486 = vld [vmem:[%s1 + $0xe70] sm:$0xff]
    %v487 = vld [vmem:[%s1 + $0xe78] sm:$0xff]
    %v488 = vld [vmem:[%s1 + $0xe80] sm:$0xff]
    %v489 = vld [vmem:[%s1 + $0xe88] sm:$0xff]
    %v490 = vld [vmem:[%s1 + $0xe90] sm:$0xff]
    %v491 = vld [vmem:[%s1 + $0xe98] sm:$0xff]
    %v492 = vld [vmem:[%s1 + $0xea0] sm:$0xff]
    %v493 = vld [vmem:[%s1 + $0xea8] sm:$0xff]
    %v494 = vld [vmem:[%s1 + $0xeb0] sm:$0xff]
    %v495 = vld [vmem:[%s1 + $0xeb8] sm:$0xff]
    %v496 = vld [vmem:[%s1 + $0xec0] sm:$0xff]
    %v497 = vld [vmem:[%s1 + $0xec8] sm:$0xff]
    %v498 = vld [vmem:[%s1 + $0xed0] sm:$0xff]
    %v499 = vld [vmem:[%s1 + $0xed8] sm:$0xff]
    %v500 = vld [vmem:[%s1 + $0xee0] sm:$0xff]
    %v501 = vld [vmem:[%s1 + $0xee8] sm:$0xff]
    %v502 = vld [vmem:[%s1 + $0xef0] sm:$0xff]
    %v503 = vld [vmem:[%s1 + $0xef8] sm:$0xff]
    %v504 = vld [vmem:[%s1 + $0xf00] sm:$0xff]
    %v505 = vld [vmem:[%s1 + $0xf08] sm:$0xff]
    %v506 = vld [vmem:[%s1 + $0xf10] sm:$0xff]
    %v507 = vld [vmem:[%s1 + $0xf18] sm:$0xff]
    %v508 = vld [vmem:[%s1 + $0xf20] sm:$0xff]
    %v509 = vld [vmem:[%s1 + $0xf28] sm:$0xff]
    %v510 = vld [vmem:[%s1 + $0xf30] sm:$0xff]
    %v511 = vld [vmem:[%s1 + $0xf38] sm:$0xff]
    %v512 = vld [vmem:[%s1 + $0xf40] sm:$0xff]
    %v513 = vld [vmem:[%s1 + $0xf48] sm:$0xff]
    %v514 = vld [vmem:[%s1 + $0xf50] sm:$0xff]
    %v515 = vld [vmem:[%s1 + $0xf58] sm:$0xff]
    %v516 = vld [vmem:[%s1 + $0xf60] sm:$0xff]
    %v517 = vld [vmem:[%s1 + $0xf68] sm:$0xff]
    %v518 = vld [vmem:[%s1 + $0xf70] sm:$0xff]
    %v519 = vld [vmem:[%s1 + $0xf78] sm:$0xff]
    %v520 = vld [vmem:[%s1 + $0xf80] sm:$0xff]
    %v521 = vld [vmem:[%s1 + $0xf88] sm:$0xff]
    %v522 = vld [vmem:[%s1 + $0xf90] sm:$0xff]
    %v523 = vld [vmem:[%s1 + $0xf98] sm:$0xff]
    %v524 = vld [vmem:[%s2] sm:$0xf]
    %v526 = vlaneseq
    %v527 = vshrl.u32 %v526, 7
    %v528 = vsub.s32 0, %v527
    %v529 = vrot.slane %v524, %v528
    %v530 = vlaneseq
    %v531 = vshrl.u32 %v530, 7
    %v532 = vsub.s32 1, %v531
    %v533 = vrot.slane %v524, %v532
    %v534 = vlaneseq
    %v535 = vshrl.u32 %v534, 7
    %v536 = vsub.s32 2, %v535
    %v537 = vrot.slane %v524, %v536
    %v538 = vlaneseq
    %v539 = vshrl.u32 %v538, 7
    %v540 = vsub.s32 3, %v539
    %v541 = vrot.slane %v524, %v540
    %v548 = vcombine.high %v22, %v22
    %v550 = vunpack.c.l.s4 1966171168
    %v551 = vunpack.c.0.s8 %v550
    %v552 = vlaneseq
    %v553 = vshrl.u32 %v552, 7
    %v554 = vsub.s32 %v551, %v553
    %v555 = vrot.slane %v22, %v554
    %v557 = vunpack.c.l.s4 1966171168
    %v558 = vunpack.c.0.s8 %v557
    %v559 = vlaneseq
    %v560 = vshrl.u32 %v559, 7
    %v561 = vsub.s32 %v558, %v560
    %v562 = vrot.slane %v548, %v561
    %v563 = vcombine.high %v555, %v555
    %v564 = vcombine.high %v562, %v562
    %v566 = vunpack.c.l.s4 1966171168
    %v567 = vunpack.c.0.s8 %v566
    %v568 = vlaneseq
    %v569 = vshrl.u32 %v568, 7
    %v570 = vsub.s32 %v567, %v569
    %v571 = vrot.slane %v555, %v570
    %v573 = vunpack.c.l.s4 1966171168
    %v574 = vunpack.c.0.s8 %v573
    %v575 = vlaneseq
    %v576 = vshrl.u32 %v575, 7
    %v577 = vsub.s32 %v574, %v576
    %v578 = vrot.slane %v562, %v577
    %v580 = vunpack.c.l.s4 1966171168
    %v581 = vunpack.c.0.s8 %v580
    %v582 = vlaneseq
    %v583 = vshrl.u32 %v582, 7
    %v584 = vsub.s32 %v581, %v583
    %v585 = vrot.slane %v563, %v584
    %v587 = vunpack.c.l.s4 1966171168
    %v588 = vunpack.c.0.s8 %v587
    %v589 = vlaneseq
    %v590 = vshrl.u32 %v589, 7
    %v591 = vsub.s32 %v588, %v590
    %v592 = vrot.slane %v564, %v591
    %v593 = vcombine.high %v571, %v571
    %v594 = vcombine.high %v578, %v578
    %v595 = vcombine.high %v585, %v585
    %v596 = vcombine.high %v592, %v592
    %v597 = vcombine.high %v23, %v23
    %v599 = vunpack.c.l.s4 1966171168
    %v600 = vunpack.c.0.s8 %v599
    %v601 = vlaneseq
    %v602 = vshrl.u32 %v601, 7
    %v603 = vsub.s32 %v600, %v602
    %v604 = vrot.slane %v23, %v603
    %v606 = vunpack.c.l.s4 1966171168
    %v607 = vunpack.c.0.s8 %v606
    %v608 = vlaneseq
    %v609 = vshrl.u32 %v608, 7
    %v610 = vsub.s32 %v607, %v609
    %v611 = vrot.slane %v597, %v610
    %v612 = vcombine.high %v604, %v604
    %v613 = vcombine.high %v611, %v611
    %v615 = vunpack.c.l.s4 1966171168
    %v616 = vunpack.c.0.s8 %v615
    %v617 = vlaneseq
    %v618 = vshrl.u32 %v617, 7
    %v619 = vsub.s32 %v616, %v618
    %v620 = vrot.slane %v604, %v619
    %v622 = vunpack.c.l.s4 1966171168
    %v623 = vunpack.c.0.s8 %v622
    %v624 = vlaneseq
    %v625 = vshrl.u32 %v624, 7
    %v626 = vsub.s32 %v623, %v625
    %v627 = vrot.slane %v611, %v626
    %v629 = vunpack.c.l.s4 1966171168
    %v630 = vunpack.c.0.s8 %v629
    %v631 = vlaneseq
    %v632 = vshrl.u32 %v631, 7
    %v633 = vsub.s32 %v630, %v632
    %v634 = vrot.slane %v612, %v633
    %v636 = vunpack.c.l.s4 1966171168
    %v637 = vunpack.c.0.s8 %v636
    %v638 = vlaneseq
    %v639 = vshrl.u32 %v638, 7
    %v640 = vsub.s32 %v637, %v639
    %v641 = vrot.slane %v613, %v640
    %v642 = vcombine.high %v620, %v620
    %v643 = vcombine.high %v627, %v627
    %v644 = vcombine.high %v634, %v634
    %v645 = vcombine.high %v641, %v641
    %v1161 = vunpack.c.l.b16 %v24
    %v1162 = vunpack.c.h.b16 %v24
    %v1163 = vunpack.c.l.b16 %v25
    %v1164 = vunpack.c.h.b16 %v25
    %v1165 = vunpack.c.l.b16 %v26
    %v1166 = vunpack.c.h.b16 %v26
    %v1167 = vunpack.c.l.b16 %v27
    %v1168 = vunpack.c.h.b16 %v27
    %v1169 = vunpack.c.l.b16 %v28
    %v1170 = vunpack.c.h.b16 %v28
    %v1171 = vunpack.c.l.b16 %v29
    %v1172 = vunpack.c.h.b16 %v29
    %v1173 = vunpack.c.l.b16 %v30
    %v1174 = vunpack.c.h.b16 %v30
    %v1175 = vunpack.c.l.b16 %v31
    %v1176 = vunpack.c.h.b16 %v31
    %v1177 = vunpack.c.l.b16 %v32
    %v1178 = vunpack.c.h.b16 %v32
    %v1179 = vunpack.c.l.b16 %v33
    %v1180 = vunpack.c.h.b16 %v33
    %v1181 = vunpack.c.l.b16 %v34
    %v1182 = vunpack.c.h.b16 %v34
    %v1183 = vunpack.c.l.b16 %v35
    %v1184 = vunpack.c.h.b16 %v35
    %v1185 = vunpack.c.l.b16 %v36
    %v1186 = vunpack.c.h.b16 %v36
    %v1187 = vunpack.c.l.b16 %v37
    %v1188 = vunpack.c.h.b16 %v37
    %v1189 = vunpack.c.l.b16 %v38
    %v1190 = vunpack.c.h.b16 %v38
    %v1191 = vunpack.c.l.b16 %v39
    %v1192 = vunpack.c.h.b16 %v39
    %v1193 = vunpack.c.l.b16 %v40
    %v1194 = vunpack.c.h.b16 %v40
    %v1195 = vunpack.c.l.b16 %v41
    %v1196 = vunpack.c.h.b16 %v41
    %v1197 = vunpack.c.l.b16 %v42
    %v1198 = vunpack.c.h.b16 %v42
    %v1199 = vunpack.c.l.b16 %v43
    %v1200 = vunpack.c.h.b16 %v43
    %v1201 = vunpack.c.l.b16 %v44
    %v1202 = vunpack.c.h.b16 %v44
    %v1203 = vunpack.c.l.b16 %v45
    %v1204 = vunpack.c.h.b16 %v45
    %v1205 = vunpack.c.l.b16 %v46
    %v1206 = vunpack.c.h.b16 %v46
    %v1207 = vunpack.c.l.b16 %v47
    %v1208 = vunpack.c.h.b16 %v47
    %v1209 = vunpack.c.l.b16 %v48
    %v1210 = vunpack.c.h.b16 %v48
    %v1211 = vunpack.c.l.b16 %v49
    %v1212 = vunpack.c.h.b16 %v49
    %v1213 = vunpack.c.l.b16 %v50
    %v1214 = vunpack.c.h.b16 %v50
    %v1215 = vunpack.c.l.b16 %v51
    %v1216 = vunpack.c.h.b16 %v51
    %v1217 = vunpack.c.l.b16 %v52
    %v1218 = vunpack.c.h.b16 %v52
    %v1219 = vunpack.c.l.b16 %v53
    %v1220 = vunpack.c.h.b16 %v53
    %v1221 = vunpack.c.l.b16 %v54
    %v1222 = vunpack.c.h.b16 %v54
    %v1223 = vunpack.c.l.b16 %v55
    %v1224 = vunpack.c.h.b16 %v55
    %v1225 = vunpack.c.l.b16 %v56
    %v1226 = vunpack.c.h.b16 %v56
    %v1227 = vunpack.c.l.b16 %v57
    %v1228 = vunpack.c.h.b16 %v57
    %v1229 = vunpack.c.l.b16 %v58
    %v1230 = vunpack.c.h.b16 %v58
    %v1231 = vunpack.c.l.b16 %v59
    %v1232 = vunpack.c.h.b16 %v59
    %v1233 = vunpack.c.l.b16 %v60
    %v1234 = vunpack.c.h.b16 %v60
    %v1235 = vunpack.c.l.b16 %v61
    %v1236 = vunpack.c.h.b16 %v61
    %v1237 = vunpack.c.l.b16 %v62
    %v1238 = vunpack.c.h.b16 %v62
    %v1239 = vunpack.c.l.b16 %v63
    %v1240 = vunpack.c.h.b16 %v63
    %v1241 = vunpack.c.l.b16 %v64
    %v1242 = vunpack.c.h.b16 %v64
    %v1243 = vunpack.c.l.b16 %v65
    %v1244 = vunpack.c.h.b16 %v65
    %v1245 = vunpack.c.l.b16 %v66
    %v1246 = vunpack.c.h.b16 %v66
    %v1247 = vunpack.c.l.b16 %v67
    %v1248 = vunpack.c.h.b16 %v67
    %v1249 = vunpack.c.l.b16 %v68
    %v1250 = vunpack.c.h.b16 %v68
    %v1251 = vunpack.c.l.b16 %v69
    %v1252 = vunpack.c.h.b16 %v69
    %v1253 = vunpack.c.l.b16 %v70
    %v1254 = vunpack.c.h.b16 %v70
    %v1255 = vunpack.c.l.b16 %v71
    %v1256 = vunpack.c.h.b16 %v71
    %v1257 = vunpack.c.l.b16 %v72
    %v1258 = vunpack.c.h.b16 %v72
    %v1259 = vunpack.c.l.b16 %v73
    %v1260 = vunpack.c.h.b16 %v73
    %v1261 = vunpack.c.l.b16 %v74
    %v1262 = vunpack.c.h.b16 %v74
    %v1263 = vunpack.c.l.b16 %v75
    %v1264 = vunpack.c.h.b16 %v75
    %v1265 = vunpack.c.l.b16 %v76
    %v1266 = vunpack.c.h.b16 %v76
    %v1267 = vunpack.c.l.b16 %v77
    %v1268 = vunpack.c.h.b16 %v77
    %v1269 = vunpack.c.l.b16 %v78
    %v1270 = vunpack.c.h.b16 %v78
    %v1271 = vunpack.c.l.b16 %v79
    %v1272 = vunpack.c.h.b16 %v79
    %v1273 = vunpack.c.l.b16 %v80
    %v1274 = vunpack.c.h.b16 %v80
    %v1275 = vunpack.c.l.b16 %v81
    %v1276 = vunpack.c.h.b16 %v81
    %v1277 = vunpack.c.l.b16 %v82
    %v1278 = vunpack.c.h.b16 %v82
    %v1279 = vunpack.c.l.b16 %v83
    %v1280 = vunpack.c.h.b16 %v83
    %v1281 = vunpack.c.l.b16 %v84
    %v1282 = vunpack.c.h.b16 %v84
    %v1283 = vunpack.c.l.b16 %v85
    %v1284 = vunpack.c.h.b16 %v85
    %v1285 = vunpack.c.l.b16 %v86
    %v1286 = vunpack.c.h.b16 %v86
    %v1287 = vunpack.c.l.b16 %v87
    %v1288 = vunpack.c.h.b16 %v87
    %v1289 = vunpack.c.l.b16 %v88
    %v1290 = vunpack.c.h.b16 %v88
    %v1291 = vunpack.c.l.b16 %v89
    %v1292 = vunpack.c.h.b16 %v89
    %v1293 = vunpack.c.l.b16 %v90
    %v1294 = vunpack.c.h.b16 %v90
    %v1295 = vunpack.c.l.b16 %v91
    %v1296 = vunpack.c.h.b16 %v91
    %v1297 = vunpack.c.l.b16 %v92
    %v1298 = vunpack.c.h.b16 %v92
    %v1299 = vunpack.c.l.b16 %v93
    %v1300 = vunpack.c.h.b16 %v93
    %v1301 = vunpack.c.l.b16 %v94
    %v1302 = vunpack.c.h.b16 %v94
    %v1303 = vunpack.c.l.b16 %v95
    %v1304 = vunpack.c.h.b16 %v95
    %v1305 = vunpack.c.l.b16 %v96
    %v1306 = vunpack.c.h.b16 %v96
    %v1307 = vunpack.c.l.b16 %v97
    %v1308 = vunpack.c.h.b16 %v97
    %v1309 = vunpack.c.l.b16 %v98
    %v1310 = vunpack.c.h.b16 %v98
    %v1311 = vunpack.c.l.b16 %v99
    %v1312 = vunpack.c.h.b16 %v99
    %v1313 = vunpack.c.l.b16 %v100
    %v1314 = vunpack.c.h.b16 %v100
    %v1315 = vunpack.c.l.b16 %v101
    %v1316 = vunpack.c.h.b16 %v101
    %v1317 = vunpack.c.l.b16 %v102
    %v1318 = vunpack.c.h.b16 %v102
    %v1319 = vunpack.c.l.b16 %v103
    %v1320 = vunpack.c.h.b16 %v103
    %v1321 = vunpack.c.l.b16 %v104
    %v1322 = vunpack.c.h.b16 %v104
    %v1323 = vunpack.c.l.b16 %v105
    %v1324 = vunpack.c.h.b16 %v105
    %v1325 = vunpack.c.l.b16 %v106
    %v1326 = vunpack.c.h.b16 %v106
    %v1327 = vunpack.c.l.b16 %v107
    %v1328 = vunpack.c.h.b16 %v107
    %v1329 = vunpack.c.l.b16 %v108
    %v1330 = vunpack.c.h.b16 %v108
    %v1331 = vunpack.c.l.b16 %v109
    %v1332 = vunpack.c.h.b16 %v109
    %v1333 = vunpack.c.l.b16 %v110
    %v1334 = vunpack.c.h.b16 %v110
    %v1335 = vunpack.c.l.b16 %v111
    %v1336 = vunpack.c.h.b16 %v111
    %v1337 = vunpack.c.l.b16 %v112
    %v1338 = vunpack.c.h.b16 %v112
    %v1339 = vunpack.c.l.b16 %v113
    %v1340 = vunpack.c.h.b16 %v113
    %v1341 = vunpack.c.l.b16 %v114
    %v1342 = vunpack.c.h.b16 %v114
    %v1343 = vunpack.c.l.b16 %v115
    %v1344 = vunpack.c.h.b16 %v115
    %v1345 = vunpack.c.l.b16 %v116
    %v1346 = vunpack.c.h.b16 %v116
    %v1347 = vunpack.c.l.b16 %v117
    %v1348 = vunpack.c.h.b16 %v117
    %v1349 = vunpack.c.l.b16 %v118
    %v1350 = vunpack.c.h.b16 %v118
    %v1351 = vunpack.c.l.b16 %v119
    %v1352 = vunpack.c.h.b16 %v119
    %v1353 = vunpack.c.l.b16 %v120
    %v1354 = vunpack.c.h.b16 %v120
    %v1355 = vunpack.c.l.b16 %v121
    %v1356 = vunpack.c.h.b16 %v121
    %v1357 = vunpack.c.l.b16 %v122
    %v1358 = vunpack.c.h.b16 %v122
    %v1359 = vunpack.c.l.b16 %v123
    %v1360 = vunpack.c.h.b16 %v123
    %v1361 = vunpack.c.l.b16 %v124
    %v1362 = vunpack.c.h.b16 %v124
    %v1363 = vunpack.c.l.b16 %v125
    %v1364 = vunpack.c.h.b16 %v125
    %v1365 = vunpack.c.l.b16 %v126
    %v1366 = vunpack.c.h.b16 %v126
    %v1367 = vunpack.c.l.b16 %v127
    %v1368 = vunpack.c.h.b16 %v127
    %v1369 = vunpack.c.l.b16 %v128
    %v1370 = vunpack.c.h.b16 %v128
    %v1371 = vunpack.c.l.b16 %v129
    %v1372 = vunpack.c.h.b16 %v129
    %v1373 = vunpack.c.l.b16 %v130
    %v1374 = vunpack.c.h.b16 %v130
    %v1375 = vunpack.c.l.b16 %v131
    %v1376 = vunpack.c.h.b16 %v131
    %v1377 = vunpack.c.l.b16 %v132
    %v1378 = vunpack.c.h.b16 %v132
    %v1379 = vunpack.c.l.b16 %v133
    %v1380 = vunpack.c.h.b16 %v133
    %v1381 = vunpack.c.l.b16 %v134
    %v1382 = vunpack.c.h.b16 %v134
    %v1383 = vunpack.c.l.b16 %v135
    %v1384 = vunpack.c.h.b16 %v135
    %v1385 = vunpack.c.l.b16 %v136
    %v1386 = vunpack.c.h.b16 %v136
    %v1387 = vunpack.c.l.b16 %v137
    %v1388 = vunpack.c.h.b16 %v137
    %v1389 = vunpack.c.l.b16 %v138
    %v1390 = vunpack.c.h.b16 %v138
    %v1391 = vunpack.c.l.b16 %v139
    %v1392 = vunpack.c.h.b16 %v139
    %v1393 = vunpack.c.l.b16 %v140
    %v1394 = vunpack.c.h.b16 %v140
    %v1395 = vunpack.c.l.b16 %v141
    %v1396 = vunpack.c.h.b16 %v141
    %v1397 = vunpack.c.l.b16 %v142
    %v1398 = vunpack.c.h.b16 %v142
    %v1399 = vunpack.c.l.b16 %v143
    %v1400 = vunpack.c.h.b16 %v143
    %v1401 = vunpack.c.l.b16 %v144
    %v1402 = vunpack.c.h.b16 %v144
    %v1403 = vunpack.c.l.b16 %v145
    %v1404 = vunpack.c.h.b16 %v145
    %v1405 = vunpack.c.l.b16 %v146
    %v1406 = vunpack.c.h.b16 %v146
    %v1407 = vunpack.c.l.b16 %v147
    %v1408 = vunpack.c.h.b16 %v147
    %v1409 = vunpack.c.l.b16 %v148
    %v1410 = vunpack.c.h.b16 %v148
    %v1411 = vunpack.c.l.b16 %v149
    %v1412 = vunpack.c.h.b16 %v149
    %v1413 = vunpack.c.l.b16 %v150
    %v1414 = vunpack.c.h.b16 %v150
    %v1415 = vunpack.c.l.b16 %v151
    %v1416 = vunpack.c.h.b16 %v151
    %v1417 = vunpack.c.l.b16 %v152
    %v1418 = vunpack.c.h.b16 %v152
    %v1419 = vunpack.c.l.b16 %v153
    %v1420 = vunpack.c.h.b16 %v153
    %v1421 = vunpack.c.l.b16 %v154
    %v1422 = vunpack.c.h.b16 %v154
    %v1423 = vunpack.c.l.b16 %v155
    %v1424 = vunpack.c.h.b16 %v155
    %v1425 = vunpack.c.l.b16 %v156
    %v1426 = vunpack.c.h.b16 %v156
    %v1427 = vunpack.c.l.b16 %v157
    %v1428 = vunpack.c.h.b16 %v157
    %v1429 = vunpack.c.l.b16 %v158
    %v1430 = vunpack.c.h.b16 %v158
    %v1431 = vunpack.c.l.b16 %v159
    %v1432 = vunpack.c.h.b16 %v159
    %v1433 = vunpack.c.l.b16 %v160
    %v1434 = vunpack.c.h.b16 %v160
    %v1435 = vunpack.c.l.b16 %v161
    %v1436 = vunpack.c.h.b16 %v161
    %v1437 = vunpack.c.l.b16 %v162
    %v1438 = vunpack.c.h.b16 %v162
    %v1439 = vunpack.c.l.b16 %v163
    %v1440 = vunpack.c.h.b16 %v163
    %v1441 = vunpack.c.l.b16 %v164
    %v1442 = vunpack.c.h.b16 %v164
    %v1443 = vunpack.c.l.b16 %v165
    %v1444 = vunpack.c.h.b16 %v165
    %v1445 = vunpack.c.l.b16 %v166
    %v1446 = vunpack.c.h.b16 %v166
    %v1447 = vunpack.c.l.b16 %v167
    %v1448 = vunpack.c.h.b16 %v167
    %v1449 = vunpack.c.l.b16 %v168
    %v1450 = vunpack.c.h.b16 %v168
    %v1451 = vunpack.c.l.b16 %v169
    %v1452 = vunpack.c.h.b16 %v169
    %v1453 = vunpack.c.l.b16 %v170
    %v1454 = vunpack.c.h.b16 %v170
    %v1455 = vunpack.c.l.b16 %v171
    %v1456 = vunpack.c.h.b16 %v171
    %v1457 = vunpack.c.l.b16 %v172
    %v1458 = vunpack.c.h.b16 %v172
    %v1459 = vunpack.c.l.b16 %v173
    %v1460 = vunpack.c.h.b16 %v173
    %v1461 = vunpack.c.l.b16 %v174
    %v1462 = vunpack.c.h.b16 %v174
    %v1463 = vunpack.c.l.b16 %v175
    %v1464 = vunpack.c.h.b16 %v175
    %v1465 = vunpack.c.l.b16 %v176
    %v1466 = vunpack.c.h.b16 %v176
    %v1467 = vunpack.c.l.b16 %v177
    %v1468 = vunpack.c.h.b16 %v177
    %v1469 = vunpack.c.l.b16 %v178
    %v1470 = vunpack.c.h.b16 %v178
    %v1471 = vunpack.c.l.b16 %v179
    %v1472 = vunpack.c.h.b16 %v179
    %v1473 = vunpack.c.l.b16 %v180
    %v1474 = vunpack.c.h.b16 %v180
    %v1475 = vunpack.c.l.b16 %v181
    %v1476 = vunpack.c.h.b16 %v181
    %v1477 = vunpack.c.l.b16 %v182
    %v1478 = vunpack.c.h.b16 %v182
    %v1479 = vunpack.c.l.b16 %v183
    %v1480 = vunpack.c.h.b16 %v183
    %v1481 = vunpack.c.l.b16 %v184
    %v1482 = vunpack.c.h.b16 %v184
    %v1483 = vunpack.c.l.b16 %v185
    %v1484 = vunpack.c.h.b16 %v185
    %v1485 = vunpack.c.l.b16 %v186
    %v1486 = vunpack.c.h.b16 %v186
    %v1487 = vunpack.c.l.b16 %v187
    %v1488 = vunpack.c.h.b16 %v187
    %v1489 = vunpack.c.l.b16 %v188
    %v1490 = vunpack.c.h.b16 %v188
    %v1491 = vunpack.c.l.b16 %v189
    %v1492 = vunpack.c.h.b16 %v189
    %v1493 = vunpack.c.l.b16 %v190
    %v1494 = vunpack.c.h.b16 %v190
    %v1495 = vunpack.c.l.b16 %v191
    %v1496 = vunpack.c.h.b16 %v191
    %v1497 = vunpack.c.l.b16 %v192
    %v1498 = vunpack.c.h.b16 %v192
    %v1499 = vunpack.c.l.b16 %v193
    %v1500 = vunpack.c.h.b16 %v193
    %v1501 = vunpack.c.l.b16 %v194
    %v1502 = vunpack.c.h.b16 %v194
    %v1503 = vunpack.c.l.b16 %v195
    %v1504 = vunpack.c.h.b16 %v195
    %v1505 = vunpack.c.l.b16 %v196
    %v1506 = vunpack.c.h.b16 %v196
    %v1507 = vunpack.c.l.b16 %v197
    %v1508 = vunpack.c.h.b16 %v197
    %v1509 = vunpack.c.l.b16 %v198
    %v1510 = vunpack.c.h.b16 %v198
    %v1511 = vunpack.c.l.b16 %v199
    %v1512 = vunpack.c.h.b16 %v199
    %v1513 = vunpack.c.l.b16 %v200
    %v1514 = vunpack.c.h.b16 %v200
    %v1515 = vunpack.c.l.b16 %v201
    %v1516 = vunpack.c.h.b16 %v201
    %v1517 = vunpack.c.l.b16 %v202
    %v1518 = vunpack.c.h.b16 %v202
    %v1519 = vunpack.c.l.b16 %v203
    %v1520 = vunpack.c.h.b16 %v203
    %v1521 = vunpack.c.l.b16 %v204
    %v1522 = vunpack.c.h.b16 %v204
    %v1523 = vunpack.c.l.b16 %v205
    %v1524 = vunpack.c.h.b16 %v205
    %v1525 = vunpack.c.l.b16 %v206
    %v1526 = vunpack.c.h.b16 %v206
    %v1527 = vunpack.c.l.b16 %v207
    %v1528 = vunpack.c.h.b16 %v207
    %v1529 = vunpack.c.l.b16 %v208
    %v1530 = vunpack.c.h.b16 %v208
    %v1531 = vunpack.c.l.b16 %v209
    %v1532 = vunpack.c.h.b16 %v209
    %v1533 = vunpack.c.l.b16 %v210
    %v1534 = vunpack.c.h.b16 %v210
    %v1535 = vunpack.c.l.b16 %v211
    %v1536 = vunpack.c.h.b16 %v211
    %v1537 = vunpack.c.l.b16 %v212
    %v1538 = vunpack.c.h.b16 %v212
    %v1539 = vunpack.c.l.b16 %v213
    %v1540 = vunpack.c.h.b16 %v213
    %v1541 = vunpack.c.l.b16 %v214
    %v1542 = vunpack.c.h.b16 %v214
    %v1543 = vunpack.c.l.b16 %v215
    %v1544 = vunpack.c.h.b16 %v215
    %v1545 = vunpack.c.l.b16 %v216
    %v1546 = vunpack.c.h.b16 %v216
    %v1547 = vunpack.c.l.b16 %v217
    %v1548 = vunpack.c.h.b16 %v217
    %v1549 = vunpack.c.l.b16 %v218
    %v1550 = vunpack.c.h.b16 %v218
    %v1551 = vunpack.c.l.b16 %v219
    %v1552 = vunpack.c.h.b16 %v219
    %v1553 = vunpack.c.l.b16 %v220
    %v1554 = vunpack.c.h.b16 %v220
    %v1555 = vunpack.c.l.b16 %v221
    %v1556 = vunpack.c.h.b16 %v221
    %v1557 = vunpack.c.l.b16 %v222
    %v1558 = vunpack.c.h.b16 %v222
    %v1559 = vunpack.c.l.b16 %v223
    %v1560 = vunpack.c.h.b16 %v223
    %v1561 = vunpack.c.l.b16 %v224
    %v1562 = vunpack.c.h.b16 %v224
    %v1563 = vunpack.c.l.b16 %v225
    %v1564 = vunpack.c.h.b16 %v225
    %v1565 = vunpack.c.l.b16 %v226
    %v1566 = vunpack.c.h.b16 %v226
    %v1567 = vunpack.c.l.b16 %v227
    %v1568 = vunpack.c.h.b16 %v227
    %v1569 = vunpack.c.l.b16 %v228
    %v1570 = vunpack.c.h.b16 %v228
    %v1571 = vunpack.c.l.b16 %v229
    %v1572 = vunpack.c.h.b16 %v229
    %v1573 = vunpack.c.l.b16 %v230
    %v1574 = vunpack.c.h.b16 %v230
    %v1575 = vunpack.c.l.b16 %v231
    %v1576 = vunpack.c.h.b16 %v231
    %v1577 = vunpack.c.l.b16 %v232
    %v1578 = vunpack.c.h.b16 %v232
    %v1579 = vunpack.c.l.b16 %v233
    %v1580 = vunpack.c.h.b16 %v233
    %v1581 = vunpack.c.l.b16 %v234
    %v1582 = vunpack.c.h.b16 %v234
    %v1583 = vunpack.c.l.b16 %v235
    %v1584 = vunpack.c.h.b16 %v235
    %v1585 = vunpack.c.l.b16 %v236
    %v1586 = vunpack.c.h.b16 %v236
    %v1587 = vunpack.c.l.b16 %v237
    %v1588 = vunpack.c.h.b16 %v237
    %v1589 = vunpack.c.l.b16 %v238
    %v1590 = vunpack.c.h.b16 %v238
    %v1591 = vunpack.c.l.b16 %v239
    %v1592 = vunpack.c.h.b16 %v239
    %v1593 = vunpack.c.l.b16 %v240
    %v1594 = vunpack.c.h.b16 %v240
    %v1595 = vunpack.c.l.b16 %v241
    %v1596 = vunpack.c.h.b16 %v241
    %v1597 = vunpack.c.l.b16 %v242
    %v1598 = vunpack.c.h.b16 %v242
    %v1599 = vunpack.c.l.b16 %v243
    %v1600 = vunpack.c.h.b16 %v243
    %v1601 = vunpack.c.l.b16 %v244
    %v1602 = vunpack.c.h.b16 %v244
    %v1603 = vunpack.c.l.b16 %v245
    %v1604 = vunpack.c.h.b16 %v245
    %v1605 = vunpack.c.l.b16 %v246
    %v1606 = vunpack.c.h.b16 %v246
    %v1607 = vunpack.c.l.b16 %v247
    %v1608 = vunpack.c.h.b16 %v247
    %v1609 = vunpack.c.l.b16 %v248
    %v1610 = vunpack.c.h.b16 %v248
    %v1611 = vunpack.c.l.b16 %v249
    %v1612 = vunpack.c.h.b16 %v249
    %v1613 = vunpack.c.l.b16 %v250
    %v1614 = vunpack.c.h.b16 %v250
    %v1615 = vunpack.c.l.b16 %v251
    %v1616 = vunpack.c.h.b16 %v251
    %v1617 = vunpack.c.l.b16 %v252
    %v1618 = vunpack.c.h.b16 %v252
    %v1619 = vunpack.c.l.b16 %v253
    %v1620 = vunpack.c.h.b16 %v253
    %v1621 = vunpack.c.l.b16 %v254
    %v1622 = vunpack.c.h.b16 %v254
    %v1623 = vunpack.c.l.b16 %v255
    %v1624 = vunpack.c.h.b16 %v255
    %v1625 = vunpack.c.l.b16 %v256
    %v1626 = vunpack.c.h.b16 %v256
    %v1627 = vunpack.c.l.b16 %v257
    %v1628 = vunpack.c.h.b16 %v257
    %v1629 = vunpack.c.l.b16 %v258
    %v1630 = vunpack.c.h.b16 %v258
    %v1631 = vunpack.c.l.b16 %v259
    %v1632 = vunpack.c.h.b16 %v259
    %v1633 = vunpack.c.l.b16 %v260
    %v1634 = vunpack.c.h.b16 %v260
    %v1635 = vunpack.c.l.b16 %v261
    %v1636 = vunpack.c.h.b16 %v261
    %v1637 = vunpack.c.l.b16 %v262
    %v1638 = vunpack.c.h.b16 %v262
    %v1639 = vunpack.c.l.b16 %v263
    %v1640 = vunpack.c.h.b16 %v263
    %v1641 = vunpack.c.l.b16 %v264
    %v1642 = vunpack.c.h.b16 %v264
    %v1643 = vunpack.c.l.b16 %v265
    %v1644 = vunpack.c.h.b16 %v265
    %v1645 = vunpack.c.l.b16 %v266
    %v1646 = vunpack.c.h.b16 %v266
    %v1647 = vunpack.c.l.b16 %v267
    %v1648 = vunpack.c.h.b16 %v267
    %v1649 = vunpack.c.l.b16 %v268
    %v1650 = vunpack.c.h.b16 %v268
    %v1651 = vunpack.c.l.b16 %v269
    %v1652 = vunpack.c.h.b16 %v269
    %v1653 = vunpack.c.l.b16 %v270
    %v1654 = vunpack.c.h.b16 %v270
    %v1655 = vunpack.c.l.b16 %v271
    %v1656 = vunpack.c.h.b16 %v271
    %v1657 = vunpack.c.l.b16 %v272
    %v1658 = vunpack.c.h.b16 %v272
    %v1659 = vunpack.c.l.b16 %v273
    %v1660 = vunpack.c.h.b16 %v273
    %v1661 = vunpack.c.l.b16 %v274
    %v1662 = vunpack.c.h.b16 %v274
    %v1663 = vunpack.c.l.b16 %v275
    %v1664 = vunpack.c.h.b16 %v275
    %v1665 = vunpack.c.l.b16 %v276
    %v1666 = vunpack.c.h.b16 %v276
    %v1667 = vunpack.c.l.b16 %v277
    %v1668 = vunpack.c.h.b16 %v277
    %v1669 = vunpack.c.l.b16 %v278
    %v1670 = vunpack.c.h.b16 %v278
    %v1671 = vunpack.c.l.b16 %v279
    %v1672 = vunpack.c.h.b16 %v279
    %v1673 = vunpack.c.l.b16 %v280
    %v1674 = vunpack.c.h.b16 %v280
    %v1675 = vunpack.c.l.b16 %v281
    %v1676 = vunpack.c.h.b16 %v281
    %v1677 = vunpack.c.l.b16 %v282
    %v1678 = vunpack.c.h.b16 %v282
    %v1679 = vunpack.c.l.b16 %v283
    %v1680 = vunpack.c.h.b16 %v283
    %v1681 = vunpack.c.l.b16 %v284
    %v1682 = vunpack.c.h.b16 %v284
    %v1683 = vunpack.c.l.b16 %v285
    %v1684 = vunpack.c.h.b16 %v285
    %v1685 = vunpack.c.l.b16 %v286
    %v1686 = vunpack.c.h.b16 %v286
    %v1687 = vunpack.c.l.b16 %v287
    %v1688 = vunpack.c.h.b16 %v287
    %v1689 = vunpack.c.l.b16 %v288
    %v1690 = vunpack.c.h.b16 %v288
    %v1691 = vunpack.c.l.b16 %v289
    %v1692 = vunpack.c.h.b16 %v289
    %v1693 = vunpack.c.l.b16 %v290
    %v1694 = vunpack.c.h.b16 %v290
    %v1695 = vunpack.c.l.b16 %v291
    %v1696 = vunpack.c.h.b16 %v291
    %v1697 = vunpack.c.l.b16 %v292
    %v1698 = vunpack.c.h.b16 %v292
    %v1699 = vunpack.c.l.b16 %v293
    %v1700 = vunpack.c.h.b16 %v293
    %v1701 = vunpack.c.l.b16 %v294
    %v1702 = vunpack.c.h.b16 %v294
    %v1703 = vunpack.c.l.b16 %v295
    %v1704 = vunpack.c.h.b16 %v295
    %v1705 = vunpack.c.l.b16 %v296
    %v1706 = vunpack.c.h.b16 %v296
    %v1707 = vunpack.c.l.b16 %v297
    %v1708 = vunpack.c.h.b16 %v297
    %v1709 = vunpack.c.l.b16 %v298
    %v1710 = vunpack.c.h.b16 %v298
    %v1711 = vunpack.c.l.b16 %v299
    %v1712 = vunpack.c.h.b16 %v299
    %v1713 = vunpack.c.l.b16 %v300
    %v1714 = vunpack.c.h.b16 %v300
    %v1715 = vunpack.c.l.b16 %v301
    %v1716 = vunpack.c.h.b16 %v301
    %v1717 = vunpack.c.l.b16 %v302
    %v1718 = vunpack.c.h.b16 %v302
    %v1719 = vunpack.c.l.b16 %v303
    %v1720 = vunpack.c.h.b16 %v303
    %v1721 = vunpack.c.l.b16 %v304
    %v1722 = vunpack.c.h.b16 %v304
    %v1723 = vunpack.c.l.b16 %v305
    %v1724 = vunpack.c.h.b16 %v305
    %v1725 = vunpack.c.l.b16 %v306
    %v1726 = vunpack.c.h.b16 %v306
    %v1727 = vunpack.c.l.b16 %v307
    %v1728 = vunpack.c.h.b16 %v307
    %v1729 = vunpack.c.l.b16 %v308
    %v1730 = vunpack.c.h.b16 %v308
    %v1731 = vunpack.c.l.b16 %v309
    %v1732 = vunpack.c.h.b16 %v309
    %v1733 = vunpack.c.l.b16 %v310
    %v1734 = vunpack.c.h.b16 %v310
    %v1735 = vunpack.c.l.b16 %v311
    %v1736 = vunpack.c.h.b16 %v311
    %v1737 = vunpack.c.l.b16 %v312
    %v1738 = vunpack.c.h.b16 %v312
    %v1739 = vunpack.c.l.b16 %v313
    %v1740 = vunpack.c.h.b16 %v313
    %v1741 = vunpack.c.l.b16 %v314
    %v1742 = vunpack.c.h.b16 %v314
    %v1743 = vunpack.c.l.b16 %v315
    %v1744 = vunpack.c.h.b16 %v315
    %v1745 = vunpack.c.l.b16 %v316
    %v1746 = vunpack.c.h.b16 %v316
    %v1747 = vunpack.c.l.b16 %v317
    %v1748 = vunpack.c.h.b16 %v317
    %v1749 = vunpack.c.l.b16 %v318
    %v1750 = vunpack.c.h.b16 %v318
    %v1751 = vunpack.c.l.b16 %v319
    %v1752 = vunpack.c.h.b16 %v319
    %v1753 = vunpack.c.l.b16 %v320
    %v1754 = vunpack.c.h.b16 %v320
    %v1755 = vunpack.c.l.b16 %v321
    %v1756 = vunpack.c.h.b16 %v321
    %v1757 = vunpack.c.l.b16 %v322
    %v1758 = vunpack.c.h.b16 %v322
    %v1759 = vunpack.c.l.b16 %v323
    %v1760 = vunpack.c.h.b16 %v323
    %v1761 = vunpack.c.l.b16 %v324
    %v1762 = vunpack.c.h.b16 %v324
    %v1763 = vunpack.c.l.b16 %v325
    %v1764 = vunpack.c.h.b16 %v325
    %v1765 = vunpack.c.l.b16 %v326
    %v1766 = vunpack.c.h.b16 %v326
    %v1767 = vunpack.c.l.b16 %v327
    %v1768 = vunpack.c.h.b16 %v327
    %v1769 = vunpack.c.l.b16 %v328
    %v1770 = vunpack.c.h.b16 %v328
    %v1771 = vunpack.c.l.b16 %v329
    %v1772 = vunpack.c.h.b16 %v329
    %v1773 = vunpack.c.l.b16 %v330
    %v1774 = vunpack.c.h.b16 %v330
    %v1775 = vunpack.c.l.b16 %v331
    %v1776 = vunpack.c.h.b16 %v331
    %v1777 = vunpack.c.l.b16 %v332
    %v1778 = vunpack.c.h.b16 %v332
    %v1779 = vunpack.c.l.b16 %v333
    %v1780 = vunpack.c.h.b16 %v333
    %v1781 = vunpack.c.l.b16 %v334
    %v1782 = vunpack.c.h.b16 %v334
    %v1783 = vunpack.c.l.b16 %v335
    %v1784 = vunpack.c.h.b16 %v335
    %v1785 = vunpack.c.l.b16 %v336
    %v1786 = vunpack.c.h.b16 %v336
    %v1787 = vunpack.c.l.b16 %v337
    %v1788 = vunpack.c.h.b16 %v337
    %v1789 = vunpack.c.l.b16 %v338
    %v1790 = vunpack.c.h.b16 %v338
    %v1791 = vunpack.c.l.b16 %v339
    %v1792 = vunpack.c.h.b16 %v339
    %v1793 = vunpack.c.l.b16 %v340
    %v1794 = vunpack.c.h.b16 %v340
    %v1795 = vunpack.c.l.b16 %v341
    %v1796 = vunpack.c.h.b16 %v341
    %v1797 = vunpack.c.l.b16 %v342
    %v1798 = vunpack.c.h.b16 %v342
    %v1799 = vunpack.c.l.b16 %v343
    %v1800 = vunpack.c.h.b16 %v343
    %v1801 = vunpack.c.l.b16 %v344
    %v1802 = vunpack.c.h.b16 %v344
    %v1803 = vunpack.c.l.b16 %v345
    %v1804 = vunpack.c.h.b16 %v345
    %v1805 = vunpack.c.l.b16 %v346
    %v1806 = vunpack.c.h.b16 %v346
    %v1807 = vunpack.c.l.b16 %v347
    %v1808 = vunpack.c.h.b16 %v347
    %v1809 = vunpack.c.l.b16 %v348
    %v1810 = vunpack.c.h.b16 %v348
    %v1811 = vunpack.c.l.b16 %v349
    %v1812 = vunpack.c.h.b16 %v349
    %v1813 = vunpack.c.l.b16 %v350
    %v1814 = vunpack.c.h.b16 %v350
    %v1815 = vunpack.c.l.b16 %v351
    %v1816 = vunpack.c.h.b16 %v351
    %v1817 = vunpack.c.l.b16 %v352
    %v1818 = vunpack.c.h.b16 %v352
    %v1819 = vunpack.c.l.b16 %v353
    %v1820 = vunpack.c.h.b16 %v353
    %v1821 = vunpack.c.l.b16 %v354
    %v1822 = vunpack.c.h.b16 %v354
    %v1823 = vunpack.c.l.b16 %v355
    %v1824 = vunpack.c.h.b16 %v355
    %v1825 = vunpack.c.l.b16 %v356
    %v1826 = vunpack.c.h.b16 %v356
    %v1827 = vunpack.c.l.b16 %v357
    %v1828 = vunpack.c.h.b16 %v357
    %v1829 = vunpack.c.l.b16 %v358
    %v1830 = vunpack.c.h.b16 %v358
    %v1831 = vunpack.c.l.b16 %v359
    %v1832 = vunpack.c.h.b16 %v359
    %v1833 = vunpack.c.l.b16 %v360
    %v1834 = vunpack.c.h.b16 %v360
    %v1835 = vunpack.c.l.b16 %v361
    %v1836 = vunpack.c.h.b16 %v361
    %v1837 = vunpack.c.l.b16 %v362
    %v1838 = vunpack.c.h.b16 %v362
    %v1839 = vunpack.c.l.b16 %v363
    %v1840 = vunpack.c.h.b16 %v363
    %v1841 = vunpack.c.l.b16 %v364
    %v1842 = vunpack.c.h.b16 %v364
    %v1843 = vunpack.c.l.b16 %v365
    %v1844 = vunpack.c.h.b16 %v365
    %v1845 = vunpack.c.l.b16 %v366
    %v1846 = vunpack.c.h.b16 %v366
    %v1847 = vunpack.c.l.b16 %v367
    %v1848 = vunpack.c.h.b16 %v367
    %v1849 = vunpack.c.l.b16 %v368
    %v1850 = vunpack.c.h.b16 %v368
    %v1851 = vunpack.c.l.b16 %v369
    %v1852 = vunpack.c.h.b16 %v369
    %v1853 = vunpack.c.l.b16 %v370
    %v1854 = vunpack.c.h.b16 %v370
    %v1855 = vunpack.c.l.b16 %v371
    %v1856 = vunpack.c.h.b16 %v371
    %v1857 = vunpack.c.l.b16 %v372
    %v1858 = vunpack.c.h.b16 %v372
    %v1859 = vunpack.c.l.b16 %v373
    %v1860 = vunpack.c.h.b16 %v373
    %v1861 = vunpack.c.l.b16 %v374
    %v1862 = vunpack.c.h.b16 %v374
    %v1863 = vunpack.c.l.b16 %v375
    %v1864 = vunpack.c.h.b16 %v375
    %v1865 = vunpack.c.l.b16 %v376
    %v1866 = vunpack.c.h.b16 %v376
    %v1867 = vunpack.c.l.b16 %v377
    %v1868 = vunpack.c.h.b16 %v377
    %v1869 = vunpack.c.l.b16 %v378
    %v1870 = vunpack.c.h.b16 %v378
    %v1871 = vunpack.c.l.b16 %v379
    %v1872 = vunpack.c.h.b16 %v379
    %v1873 = vunpack.c.l.b16 %v380
    %v1874 = vunpack.c.h.b16 %v380
    %v1875 = vunpack.c.l.b16 %v381
    %v1876 = vunpack.c.h.b16 %v381
    %v1877 = vunpack.c.l.b16 %v382
    %v1878 = vunpack.c.h.b16 %v382
    %v1879 = vunpack.c.l.b16 %v383
    %v1880 = vunpack.c.h.b16 %v383
    %v1881 = vunpack.c.l.b16 %v384
    %v1882 = vunpack.c.h.b16 %v384
    %v1883 = vunpack.c.l.b16 %v385
    %v1884 = vunpack.c.h.b16 %v385
    %v1885 = vunpack.c.l.b16 %v386
    %v1886 = vunpack.c.h.b16 %v386
    %v1887 = vunpack.c.l.b16 %v387
    %v1888 = vunpack.c.h.b16 %v387
    %v1889 = vunpack.c.l.b16 %v388
    %v1890 = vunpack.c.h.b16 %v388
    %v1891 = vunpack.c.l.b16 %v389
    %v1892 = vunpack.c.h.b16 %v389
    %v1893 = vunpack.c.l.b16 %v390
    %v1894 = vunpack.c.h.b16 %v390
    %v1895 = vunpack.c.l.b16 %v391
    %v1896 = vunpack.c.h.b16 %v391
    %v1897 = vunpack.c.l.b16 %v392
    %v1898 = vunpack.c.h.b16 %v392
    %v1899 = vunpack.c.l.b16 %v393
    %v1900 = vunpack.c.h.b16 %v393
    %v1901 = vunpack.c.l.b16 %v394
    %v1902 = vunpack.c.h.b16 %v394
    %v1903 = vunpack.c.l.b16 %v395
    %v1904 = vunpack.c.h.b16 %v395
    %v1905 = vunpack.c.l.b16 %v396
    %v1906 = vunpack.c.h.b16 %v396
    %v1907 = vunpack.c.l.b16 %v397
    %v1908 = vunpack.c.h.b16 %v397
    %v1909 = vunpack.c.l.b16 %v398
    %v1910 = vunpack.c.h.b16 %v398
    %v1911 = vunpack.c.l.b16 %v399
    %v1912 = vunpack.c.h.b16 %v399
    %v1913 = vunpack.c.l.b16 %v400
    %v1914 = vunpack.c.h.b16 %v400
    %v1915 = vunpack.c.l.b16 %v401
    %v1916 = vunpack.c.h.b16 %v401
    %v1917 = vunpack.c.l.b16 %v402
    %v1918 = vunpack.c.h.b16 %v402
    %v1919 = vunpack.c.l.b16 %v403
    %v1920 = vunpack.c.h.b16 %v403
    %v1921 = vunpack.c.l.b16 %v404
    %v1922 = vunpack.c.h.b16 %v404
    %v1923 = vunpack.c.l.b16 %v405
    %v1924 = vunpack.c.h.b16 %v405
    %v1925 = vunpack.c.l.b16 %v406
    %v1926 = vunpack.c.h.b16 %v406
    %v1927 = vunpack.c.l.b16 %v407
    %v1928 = vunpack.c.h.b16 %v407
    %v1929 = vunpack.c.l.b16 %v408
    %v1930 = vunpack.c.h.b16 %v408
    %v1931 = vunpack.c.l.b16 %v409
    %v1932 = vunpack.c.h.b16 %v409
    %v1933 = vunpack.c.l.b16 %v410
    %v1934 = vunpack.c.h.b16 %v410
    %v1935 = vunpack.c.l.b16 %v411
    %v1936 = vunpack.c.h.b16 %v411
    %v1937 = vunpack.c.l.b16 %v412
    %v1938 = vunpack.c.h.b16 %v412
    %v1939 = vunpack.c.l.b16 %v413
    %v1940 = vunpack.c.h.b16 %v413
    %v1941 = vunpack.c.l.b16 %v414
    %v1942 = vunpack.c.h.b16 %v414
    %v1943 = vunpack.c.l.b16 %v415
    %v1944 = vunpack.c.h.b16 %v415
    %v1945 = vunpack.c.l.b16 %v416
    %v1946 = vunpack.c.h.b16 %v416
    %v1947 = vunpack.c.l.b16 %v417
    %v1948 = vunpack.c.h.b16 %v417
    %v1949 = vunpack.c.l.b16 %v418
    %v1950 = vunpack.c.h.b16 %v418
    %v1951 = vunpack.c.l.b16 %v419
    %v1952 = vunpack.c.h.b16 %v419
    %v1953 = vunpack.c.l.b16 %v420
    %v1954 = vunpack.c.h.b16 %v420
    %v1955 = vunpack.c.l.b16 %v421
    %v1956 = vunpack.c.h.b16 %v421
    %v1957 = vunpack.c.l.b16 %v422
    %v1958 = vunpack.c.h.b16 %v422
    %v1959 = vunpack.c.l.b16 %v423
    %v1960 = vunpack.c.h.b16 %v423
    %v1961 = vunpack.c.l.b16 %v424
    %v1962 = vunpack.c.h.b16 %v424
    %v1963 = vunpack.c.l.b16 %v425
    %v1964 = vunpack.c.h.b16 %v425
    %v1965 = vunpack.c.l.b16 %v426
    %v1966 = vunpack.c.h.b16 %v426
    %v1967 = vunpack.c.l.b16 %v427
    %v1968 = vunpack.c.h.b16 %v427
    %v1969 = vunpack.c.l.b16 %v428
    %v1970 = vunpack.c.h.b16 %v428
    %v1971 = vunpack.c.l.b16 %v429
    %v1972 = vunpack.c.h.b16 %v429
    %v1973 = vunpack.c.l.b16 %v430
    %v1974 = vunpack.c.h.b16 %v430
    %v1975 = vunpack.c.l.b16 %v431
    %v1976 = vunpack.c.h.b16 %v431
    %v1977 = vunpack.c.l.b16 %v432
    %v1978 = vunpack.c.h.b16 %v432
    %v1979 = vunpack.c.l.b16 %v433
    %v1980 = vunpack.c.h.b16 %v433
    %v1981 = vunpack.c.l.b16 %v434
    %v1982 = vunpack.c.h.b16 %v434
    %v1983 = vunpack.c.l.b16 %v435
    %v1984 = vunpack.c.h.b16 %v435
    %v1985 = vunpack.c.l.b16 %v436
    %v1986 = vunpack.c.h.b16 %v436
    %v1987 = vunpack.c.l.b16 %v437
    %v1988 = vunpack.c.h.b16 %v437
    %v1989 = vunpack.c.l.b16 %v438
    %v1990 = vunpack.c.h.b16 %v438
    %v1991 = vunpack.c.l.b16 %v439
    %v1992 = vunpack.c.h.b16 %v439
    %v1993 = vunpack.c.l.b16 %v440
    %v1994 = vunpack.c.h.b16 %v440
    %v1995 = vunpack.c.l.b16 %v441
    %v1996 = vunpack.c.h.b16 %v441
    %v1997 = vunpack.c.l.b16 %v442
    %v1998 = vunpack.c.h.b16 %v442
    %v1999 = vunpack.c.l.b16 %v443
    %v2000 = vunpack.c.h.b16 %v443
    %v2001 = vunpack.c.l.b16 %v444
    %v2002 = vunpack.c.h.b16 %v444
    %v2003 = vunpack.c.l.b16 %v445
    %v2004 = vunpack.c.h.b16 %v445
    %v2005 = vunpack.c.l.b16 %v446
    %v2006 = vunpack.c.h.b16 %v446
    %v2007 = vunpack.c.l.b16 %v447
    %v2008 = vunpack.c.h.b16 %v447
    %v2009 = vunpack.c.l.b16 %v448
    %v2010 = vunpack.c.h.b16 %v448
    %v2011 = vunpack.c.l.b16 %v449
    %v2012 = vunpack.c.h.b16 %v449
    %v2013 = vunpack.c.l.b16 %v450
    %v2014 = vunpack.c.h.b16 %v450
    %v2015 = vunpack.c.l.b16 %v451
    %v2016 = vunpack.c.h.b16 %v451
    %v2017 = vunpack.c.l.b16 %v452
    %v2018 = vunpack.c.h.b16 %v452
    %v2019 = vunpack.c.l.b16 %v453
    %v2020 = vunpack.c.h.b16 %v453
    %v2021 = vunpack.c.l.b16 %v454
    %v2022 = vunpack.c.h.b16 %v454
    %v2023 = vunpack.c.l.b16 %v455
    %v2024 = vunpack.c.h.b16 %v455
    %v2025 = vunpack.c.l.b16 %v456
    %v2026 = vunpack.c.h.b16 %v456
    %v2027 = vunpack.c.l.b16 %v457
    %v2028 = vunpack.c.h.b16 %v457
    %v2029 = vunpack.c.l.b16 %v458
    %v2030 = vunpack.c.h.b16 %v458
    %v2031 = vunpack.c.l.b16 %v459
    %v2032 = vunpack.c.h.b16 %v459
    %v2033 = vunpack.c.l.b16 %v460
    %v2034 = vunpack.c.h.b16 %v460
    %v2035 = vunpack.c.l.b16 %v461
    %v2036 = vunpack.c.h.b16 %v461
    %v2037 = vunpack.c.l.b16 %v462
    %v2038 = vunpack.c.h.b16 %v462
    %v2039 = vunpack.c.l.b16 %v463
    %v2040 = vunpack.c.h.b16 %v463
    %v2041 = vunpack.c.l.b16 %v464
    %v2042 = vunpack.c.h.b16 %v464
    %v2043 = vunpack.c.l.b16 %v465
    %v2044 = vunpack.c.h.b16 %v465
    %v2045 = vunpack.c.l.b16 %v466
    %v2046 = vunpack.c.h.b16 %v466
    %v2047 = vunpack.c.l.b16 %v467
    %v2048 = vunpack.c.h.b16 %v467
    %v2049 = vunpack.c.l.b16 %v468
    %v2050 = vunpack.c.h.b16 %v468
    %v2051 = vunpack.c.l.b16 %v469
    %v2052 = vunpack.c.h.b16 %v469
    %v2053 = vunpack.c.l.b16 %v470
    %v2054 = vunpack.c.h.b16 %v470
    %v2055 = vunpack.c.l.b16 %v471
    %v2056 = vunpack.c.h.b16 %v471
    %v2057 = vunpack.c.l.b16 %v472
    %v2058 = vunpack.c.h.b16 %v472
    %v2059 = vunpack.c.l.b16 %v473
    %v2060 = vunpack.c.h.b16 %v473
    %v2061 = vunpack.c.l.b16 %v474
    %v2062 = vunpack.c.h.b16 %v474
    %v2063 = vunpack.c.l.b16 %v475
    %v2064 = vunpack.c.h.b16 %v475
    %v2065 = vunpack.c.l.b16 %v476
    %v2066 = vunpack.c.h.b16 %v476
    %v2067 = vunpack.c.l.b16 %v477
    %v2068 = vunpack.c.h.b16 %v477
    %v2069 = vunpack.c.l.b16 %v478
    %v2070 = vunpack.c.h.b16 %v478
    %v2071 = vunpack.c.l.b16 %v479
    %v2072 = vunpack.c.h.b16 %v479
    %v2073 = vunpack.c.l.b16 %v480
    %v2074 = vunpack.c.h.b16 %v480
    %v2075 = vunpack.c.l.b16 %v481
    %v2076 = vunpack.c.h.b16 %v481
    %v2077 = vunpack.c.l.b16 %v482
    %v2078 = vunpack.c.h.b16 %v482
    %v2079 = vunpack.c.l.b16 %v483
    %v2080 = vunpack.c.h.b16 %v483
    %v2081 = vunpack.c.l.b16 %v484
    %v2082 = vunpack.c.h.b16 %v484
    %v2083 = vunpack.c.l.b16 %v485
    %v2084 = vunpack.c.h.b16 %v485
    %v2085 = vunpack.c.l.b16 %v486
    %v2086 = vunpack.c.h.b16 %v486
    %v2087 = vunpack.c.l.b16 %v487
    %v2088 = vunpack.c.h.b16 %v487
    %v2089 = vunpack.c.l.b16 %v488
    %v2090 = vunpack.c.h.b16 %v488
    %v2091 = vunpack.c.l.b16 %v489
    %v2092 = vunpack.c.h.b16 %v489
    %v2093 = vunpack.c.l.b16 %v490
    %v2094 = vunpack.c.h.b16 %v490
    %v2095 = vunpack.c.l.b16 %v491
    %v2096 = vunpack.c.h.b16 %v491
    %v2097 = vunpack.c.l.b16 %v492
    %v2098 = vunpack.c.h.b16 %v492
    %v2099 = vunpack.c.l.b16 %v493
    %v2100 = vunpack.c.h.b16 %v493
    %v2101 = vunpack.c.l.b16 %v494
    %v2102 = vunpack.c.h.b16 %v494
    %v2103 = vunpack.c.l.b16 %v495
    %v2104 = vunpack.c.h.b16 %v495
    %v2105 = vunpack.c.l.b16 %v496
    %v2106 = vunpack.c.h.b16 %v496
    %v2107 = vunpack.c.l.b16 %v497
    %v2108 = vunpack.c.h.b16 %v497
    %v2109 = vunpack.c.l.b16 %v498
    %v2110 = vunpack.c.h.b16 %v498
    %v2111 = vunpack.c.l.b16 %v499
    %v2112 = vunpack.c.h.b16 %v499
    %v2113 = vunpack.c.l.b16 %v500
    %v2114 = vunpack.c.h.b16 %v500
    %v2115 = vunpack.c.l.b16 %v501
    %v2116 = vunpack.c.h.b16 %v501
    %v2117 = vunpack.c.l.b16 %v502
    %v2118 = vunpack.c.h.b16 %v502
    %v2119 = vunpack.c.l.b16 %v503
    %v2120 = vunpack.c.h.b16 %v503
    %v2121 = vunpack.c.l.b16 %v504
    %v2122 = vunpack.c.h.b16 %v504
    %v2123 = vunpack.c.l.b16 %v505
    %v2124 = vunpack.c.h.b16 %v505
    %v2125 = vunpack.c.l.b16 %v506
    %v2126 = vunpack.c.h.b16 %v506
    %v2127 = vunpack.c.l.b16 %v507
    %v2128 = vunpack.c.h.b16 %v507
    %v2129 = vunpack.c.l.b16 %v508
    %v2130 = vunpack.c.h.b16 %v508
    %v2131 = vunpack.c.l.b16 %v509
    %v2132 = vunpack.c.h.b16 %v509
    %v2133 = vunpack.c.l.b16 %v510
    %v2134 = vunpack.c.h.b16 %v510
    %v2135 = vunpack.c.l.b16 %v511
    %v2136 = vunpack.c.h.b16 %v511
    %v2137 = vunpack.c.l.b16 %v512
    %v2138 = vunpack.c.h.b16 %v512
    %v2139 = vunpack.c.l.b16 %v513
    %v2140 = vunpack.c.h.b16 %v513
    %v2141 = vunpack.c.l.b16 %v514
    %v2142 = vunpack.c.h.b16 %v514
    %v2143 = vunpack.c.l.b16 %v515
    %v2144 = vunpack.c.h.b16 %v515
    %v2145 = vunpack.c.l.b16 %v516
    %v2146 = vunpack.c.h.b16 %v516
    %v2147 = vunpack.c.l.b16 %v517
    %v2148 = vunpack.c.h.b16 %v517
    %v2149 = vunpack.c.l.b16 %v518
    %v2150 = vunpack.c.h.b16 %v518
    %v2151 = vunpack.c.l.b16 %v519
    %v2152 = vunpack.c.h.b16 %v519
    %v2153 = vunpack.c.l.b16 %v520
    %v2154 = vunpack.c.h.b16 %v520
    %v2155 = vunpack.c.l.b16 %v521
    %v2156 = vunpack.c.h.b16 %v521
    %v2157 = vunpack.c.l.b16 %v522
    %v2158 = vunpack.c.h.b16 %v522
    %v2159 = vunpack.c.l.b16 %v523
    %v2160 = vunpack.c.h.b16 %v523
    %v2161 = vpack.c.b16 %v1165, %v1161
    %v2162 = vpack.c.b16 %v1166, %v1162
    %v2163 = vpack.c.b16 %v1167, %v1163
    %v2164 = vpack.c.b16 %v1168, %v1164
    %v2165 = vpack.c.b16 %v1173, %v1169
    %v2166 = vpack.c.b16 %v1174, %v1170
    %v2167 = vpack.c.b16 %v1175, %v1171
    %v2168 = vpack.c.b16 %v1176, %v1172
    %v2169 = vpack.c.b16 %v1181, %v1177
    %v2170 = vpack.c.b16 %v1182, %v1178
    %v2171 = vpack.c.b16 %v1183, %v1179
    %v2172 = vpack.c.b16 %v1184, %v1180
    %v2173 = vpack.c.b16 %v1189, %v1185
    %v2174 = vpack.c.b16 %v1190, %v1186
    %v2175 = vpack.c.b16 %v1191, %v1187
    %v2176 = vpack.c.b16 %v1192, %v1188
    %v2177 = vpack.c.b16 %v1197, %v1193
    %v2178 = vpack.c.b16 %v1198, %v1194
    %v2179 = vpack.c.b16 %v1199, %v1195
    %v2180 = vpack.c.b16 %v1200, %v1196
    %v2181 = vpack.c.b16 %v1205, %v1201
    %v2182 = vpack.c.b16 %v1206, %v1202
    %v2183 = vpack.c.b16 %v1207, %v1203
    %v2184 = vpack.c.b16 %v1208, %v1204
    %v2185 = vpack.c.b16 %v1213, %v1209
    %v2186 = vpack.c.b16 %v1214, %v1210
    %v2187 = vpack.c.b16 %v1215, %v1211
    %v2188 = vpack.c.b16 %v1216, %v1212
    %v2189 = vpack.c.b16 %v1221, %v1217
    %v2190 = vpack.c.b16 %v1222, %v1218
    %v2191 = vpack.c.b16 %v1223, %v1219
    %v2192 = vpack.c.b16 %v1224, %v1220
    %v2193 = vpack.c.b16 %v1229, %v1225
    %v2194 = vpack.c.b16 %v1230, %v1226
    %v2195 = vpack.c.b16 %v1231, %v1227
    %v2196 = vpack.c.b16 %v1232, %v1228
    %v2197 = vpack.c.b16 %v1237, %v1233
    %v2198 = vpack.c.b16 %v1238, %v1234
    %v2199 = vpack.c.b16 %v1239, %v1235
    %v2200 = vpack.c.b16 %v1240, %v1236
    %v2201 = vpack.c.b16 %v1245, %v1241
    %v2202 = vpack.c.b16 %v1246, %v1242
    %v2203 = vpack.c.b16 %v1247, %v1243
    %v2204 = vpack.c.b16 %v1248, %v1244
    %v2205 = vpack.c.b16 %v1253, %v1249
    %v2206 = vpack.c.b16 %v1254, %v1250
    %v2207 = vpack.c.b16 %v1255, %v1251
    %v2208 = vpack.c.b16 %v1256, %v1252
    %v2209 = vpack.c.b16 %v1261, %v1257
    %v2210 = vpack.c.b16 %v1262, %v1258
    %v2211 = vpack.c.b16 %v1263, %v1259
    %v2212 = vpack.c.b16 %v1264, %v1260
    %v2213 = vpack.c.b16 %v1269, %v1265
    %v2214 = vpack.c.b16 %v1270, %v1266
    %v2215 = vpack.c.b16 %v1271, %v1267
    %v2216 = vpack.c.b16 %v1272, %v1268
    %v2217 = vpack.c.b16 %v1277, %v1273
    %v2218 = vpack.c.b16 %v1278, %v1274
    %v2219 = vpack.c.b16 %v1279, %v1275
    %v2220 = vpack.c.b16 %v1280, %v1276
    %v2221 = vpack.c.b16 %v1285, %v1281
    %v2222 = vpack.c.b16 %v1286, %v1282
    %v2223 = vpack.c.b16 %v1287, %v1283
    %v2224 = vpack.c.b16 %v1288, %v1284
    %v2225 = vpack.c.b16 %v1293, %v1289
    %v2226 = vpack.c.b16 %v1294, %v1290
    %v2227 = vpack.c.b16 %v1295, %v1291
    %v2228 = vpack.c.b16 %v1296, %v1292
    %v2229 = vpack.c.b16 %v1301, %v1297
    %v2230 = vpack.c.b16 %v1302, %v1298
    %v2231 = vpack.c.b16 %v1303, %v1299
    %v2232 = vpack.c.b16 %v1304, %v1300
    %v2233 = vpack.c.b16 %v1309, %v1305
    %v2234 = vpack.c.b16 %v1310, %v1306
    %v2235 = vpack.c.b16 %v1311, %v1307
    %v2236 = vpack.c.b16 %v1312, %v1308
    %v2237 = vpack.c.b16 %v1317, %v1313
    %v2238 = vpack.c.b16 %v1318, %v1314
    %v2239 = vpack.c.b16 %v1319, %v1315
    %v2240 = vpack.c.b16 %v1320, %v1316
    %v2241 = vpack.c.b16 %v1325, %v1321
    %v2242 = vpack.c.b16 %v1326, %v1322
    %v2243 = vpack.c.b16 %v1327, %v1323
    %v2244 = vpack.c.b16 %v1328, %v1324
    %v2245 = vpack.c.b16 %v1333, %v1329
    %v2246 = vpack.c.b16 %v1334, %v1330
    %v2247 = vpack.c.b16 %v1335, %v1331
    %v2248 = vpack.c.b16 %v1336, %v1332
    %v2249 = vpack.c.b16 %v1341, %v1337
    %v2250 = vpack.c.b16 %v1342, %v1338
    %v2251 = vpack.c.b16 %v1343, %v1339
    %v2252 = vpack.c.b16 %v1344, %v1340
    %v2253 = vpack.c.b16 %v1349, %v1345
    %v2254 = vpack.c.b16 %v1350, %v1346
    %v2255 = vpack.c.b16 %v1351, %v1347
    %v2256 = vpack.c.b16 %v1352, %v1348
    %v2257 = vpack.c.b16 %v1357, %v1353
    %v2258 = vpack.c.b16 %v1358, %v1354
    %v2259 = vpack.c.b16 %v1359, %v1355
    %v2260 = vpack.c.b16 %v1360, %v1356
    %v2261 = vpack.c.b16 %v1365, %v1361
    %v2262 = vpack.c.b16 %v1366, %v1362
    %v2263 = vpack.c.b16 %v1367, %v1363
    %v2264 = vpack.c.b16 %v1368, %v1364
    %v2265 = vpack.c.b16 %v1373, %v1369
    %v2266 = vpack.c.b16 %v1374, %v1370
    %v2267 = vpack.c.b16 %v1375, %v1371
    %v2268 = vpack.c.b16 %v1376, %v1372
    %v2269 = vpack.c.b16 %v1381, %v1377
    %v2270 = vpack.c.b16 %v1382, %v1378
    %v2271 = vpack.c.b16 %v1383, %v1379
    %v2272 = vpack.c.b16 %v1384, %v1380
    %v2273 = vpack.c.b16 %v1389, %v1385
    %v2274 = vpack.c.b16 %v1390, %v1386
    %v2275 = vpack.c.b16 %v1391, %v1387
    %v2276 = vpack.c.b16 %v1392, %v1388
    %v2277 = vpack.c.b16 %v1397, %v1393
    %v2278 = vpack.c.b16 %v1398, %v1394
    %v2279 = vpack.c.b16 %v1399, %v1395
    %v2280 = vpack.c.b16 %v1400, %v1396
    %v2281 = vpack.c.b16 %v1405, %v1401
    %v2282 = vpack.c.b16 %v1406, %v1402
    %v2283 = vpack.c.b16 %v1407, %v1403
    %v2284 = vpack.c.b16 %v1408, %v1404
    %v2285 = vpack.c.b16 %v1413, %v1409
    %v2286 = vpack.c.b16 %v1414, %v1410
    %v2287 = vpack.c.b16 %v1415, %v1411
    %v2288 = vpack.c.b16 %v1416, %v1412
    %v2289 = vpack.c.b16 %v1421, %v1417
    %v2290 = vpack.c.b16 %v1422, %v1418
    %v2291 = vpack.c.b16 %v1423, %v1419
    %v2292 = vpack.c.b16 %v1424, %v1420
    %v2293 = vpack.c.b16 %v1429, %v1425
    %v2294 = vpack.c.b16 %v1430, %v1426
    %v2295 = vpack.c.b16 %v1431, %v1427
    %v2296 = vpack.c.b16 %v1432, %v1428
    %v2297 = vpack.c.b16 %v1437, %v1433
    %v2298 = vpack.c.b16 %v1438, %v1434
    %v2299 = vpack.c.b16 %v1439, %v1435
    %v2300 = vpack.c.b16 %v1440, %v1436
    %v2301 = vpack.c.b16 %v1445, %v1441
    %v2302 = vpack.c.b16 %v1446, %v1442
    %v2303 = vpack.c.b16 %v1447, %v1443
    %v2304 = vpack.c.b16 %v1448, %v1444
    %v2305 = vpack.c.b16 %v1453, %v1449
    %v2306 = vpack.c.b16 %v1454, %v1450
    %v2307 = vpack.c.b16 %v1455, %v1451
    %v2308 = vpack.c.b16 %v1456, %v1452
    %v2309 = vpack.c.b16 %v1461, %v1457
    %v2310 = vpack.c.b16 %v1462, %v1458
    %v2311 = vpack.c.b16 %v1463, %v1459
    %v2312 = vpack.c.b16 %v1464, %v1460
    %v2313 = vpack.c.b16 %v1469, %v1465
    %v2314 = vpack.c.b16 %v1470, %v1466
    %v2315 = vpack.c.b16 %v1471, %v1467
    %v2316 = vpack.c.b16 %v1472, %v1468
    %v2317 = vpack.c.b16 %v1477, %v1473
    %v2318 = vpack.c.b16 %v1478, %v1474
    %v2319 = vpack.c.b16 %v1479, %v1475
    %v2320 = vpack.c.b16 %v1480, %v1476
    %v2321 = vpack.c.b16 %v1485, %v1481
    %v2322 = vpack.c.b16 %v1486, %v1482
    %v2323 = vpack.c.b16 %v1487, %v1483
    %v2324 = vpack.c.b16 %v1488, %v1484
    %v2325 = vpack.c.b16 %v1493, %v1489
    %v2326 = vpack.c.b16 %v1494, %v1490
    %v2327 = vpack.c.b16 %v1495, %v1491
    %v2328 = vpack.c.b16 %v1496, %v1492
    %v2329 = vpack.c.b16 %v1501, %v1497
    %v2330 = vpack.c.b16 %v1502, %v1498
    %v2331 = vpack.c.b16 %v1503, %v1499
    %v2332 = vpack.c.b16 %v1504, %v1500
    %v2333 = vpack.c.b16 %v1509, %v1505
    %v2334 = vpack.c.b16 %v1510, %v1506
    %v2335 = vpack.c.b16 %v1511, %v1507
    %v2336 = vpack.c.b16 %v1512, %v1508
    %v2337 = vpack.c.b16 %v1517, %v1513
    %v2338 = vpack.c.b16 %v1518, %v1514
    %v2339 = vpack.c.b16 %v1519, %v1515
    %v2340 = vpack.c.b16 %v1520, %v1516
    %v2341 = vpack.c.b16 %v1525, %v1521
    %v2342 = vpack.c.b16 %v1526, %v1522
    %v2343 = vpack.c.b16 %v1527, %v1523
    %v2344 = vpack.c.b16 %v1528, %v1524
    %v2345 = vpack.c.b16 %v1533, %v1529
    %v2346 = vpack.c.b16 %v1534, %v1530
    %v2347 = vpack.c.b16 %v1535, %v1531
    %v2348 = vpack.c.b16 %v1536, %v1532
    %v2349 = vpack.c.b16 %v1541, %v1537
    %v2350 = vpack.c.b16 %v1542, %v1538
    %v2351 = vpack.c.b16 %v1543, %v1539
    %v2352 = vpack.c.b16 %v1544, %v1540
    %v2353 = vpack.c.b16 %v1549, %v1545
    %v2354 = vpack.c.b16 %v1550, %v1546
    %v2355 = vpack.c.b16 %v1551, %v1547
    %v2356 = vpack.c.b16 %v1552, %v1548
    %v2357 = vpack.c.b16 %v1557, %v1553
    %v2358 = vpack.c.b16 %v1558, %v1554
    %v2359 = vpack.c.b16 %v1559, %v1555
    %v2360 = vpack.c.b16 %v1560, %v1556
    %v2361 = vpack.c.b16 %v1565, %v1561
    %v2362 = vpack.c.b16 %v1566, %v1562
    %v2363 = vpack.c.b16 %v1567, %v1563
    %v2364 = vpack.c.b16 %v1568, %v1564
    %v2365 = vpack.c.b16 %v1573, %v1569
    %v2366 = vpack.c.b16 %v1574, %v1570
    %v2367 = vpack.c.b16 %v1575, %v1571
    %v2368 = vpack.c.b16 %v1576, %v1572
    %v2369 = vpack.c.b16 %v1581, %v1577
    %v2370 = vpack.c.b16 %v1582, %v1578
    %v2371 = vpack.c.b16 %v1583, %v1579
    %v2372 = vpack.c.b16 %v1584, %v1580
    %v2373 = vpack.c.b16 %v1589, %v1585
    %v2374 = vpack.c.b16 %v1590, %v1586
    %v2375 = vpack.c.b16 %v1591, %v1587
    %v2376 = vpack.c.b16 %v1592, %v1588
    %v2377 = vpack.c.b16 %v1597, %v1593
    %v2378 = vpack.c.b16 %v1598, %v1594
    %v2379 = vpack.c.b16 %v1599, %v1595
    %v2380 = vpack.c.b16 %v1600, %v1596
    %v2381 = vpack.c.b16 %v1605, %v1601
    %v2382 = vpack.c.b16 %v1606, %v1602
    %v2383 = vpack.c.b16 %v1607, %v1603
    %v2384 = vpack.c.b16 %v1608, %v1604
    %v2385 = vpack.c.b16 %v1613, %v1609
    %v2386 = vpack.c.b16 %v1614, %v1610
    %v2387 = vpack.c.b16 %v1615, %v1611
    %v2388 = vpack.c.b16 %v1616, %v1612
    %v2389 = vpack.c.b16 %v1621, %v1617
    %v2390 = vpack.c.b16 %v1622, %v1618
    %v2391 = vpack.c.b16 %v1623, %v1619
    %v2392 = vpack.c.b16 %v1624, %v1620
    %v2393 = vpack.c.b16 %v1629, %v1625
    %v2394 = vpack.c.b16 %v1630, %v1626
    %v2395 = vpack.c.b16 %v1631, %v1627
    %v2396 = vpack.c.b16 %v1632, %v1628
    %v2397 = vpack.c.b16 %v1637, %v1633
    %v2398 = vpack.c.b16 %v1638, %v1634
    %v2399 = vpack.c.b16 %v1639, %v1635
    %v2400 = vpack.c.b16 %v1640, %v1636
    %v2401 = vpack.c.b16 %v1645, %v1641
    %v2402 = vpack.c.b16 %v1646, %v1642
    %v2403 = vpack.c.b16 %v1647, %v1643
    %v2404 = vpack.c.b16 %v1648, %v1644
    %v2405 = vpack.c.b16 %v1653, %v1649
    %v2406 = vpack.c.b16 %v1654, %v1650
    %v2407 = vpack.c.b16 %v1655, %v1651
    %v2408 = vpack.c.b16 %v1656, %v1652
    %v2409 = vpack.c.b16 %v1661, %v1657
    %v2410 = vpack.c.b16 %v1662, %v1658
    %v2411 = vpack.c.b16 %v1663, %v1659
    %v2412 = vpack.c.b16 %v1664, %v1660
    %v2413 = vpack.c.b16 %v1669, %v1665
    %v2414 = vpack.c.b16 %v1670, %v1666
    %v2415 = vpack.c.b16 %v1671, %v1667
    %v2416 = vpack.c.b16 %v1672, %v1668
    %v2417 = vpack.c.b16 %v1677, %v1673
    %v2418 = vpack.c.b16 %v1678, %v1674
    %v2419 = vpack.c.b16 %v1679, %v1675
    %v2420 = vpack.c.b16 %v1680, %v1676
    %v2421 = vpack.c.b16 %v1685, %v1681
    %v2422 = vpack.c.b16 %v1686, %v1682
    %v2423 = vpack.c.b16 %v1687, %v1683
    %v2424 = vpack.c.b16 %v1688, %v1684
    %v2425 = vpack.c.b16 %v1693, %v1689
    %v2426 = vpack.c.b16 %v1694, %v1690
    %v2427 = vpack.c.b16 %v1695, %v1691
    %v2428 = vpack.c.b16 %v1696, %v1692
    %v2429 = vpack.c.b16 %v1701, %v1697
    %v2430 = vpack.c.b16 %v1702, %v1698
    %v2431 = vpack.c.b16 %v1703, %v1699
    %v2432 = vpack.c.b16 %v1704, %v1700
    %v2433 = vpack.c.b16 %v1709, %v1705
    %v2434 = vpack.c.b16 %v1710, %v1706
    %v2435 = vpack.c.b16 %v1711, %v1707
    %v2436 = vpack.c.b16 %v1712, %v1708
    %v2437 = vpack.c.b16 %v1717, %v1713
    %v2438 = vpack.c.b16 %v1718, %v1714
    %v2439 = vpack.c.b16 %v1719, %v1715
    %v2440 = vpack.c.b16 %v1720, %v1716
    %v2441 = vpack.c.b16 %v1725, %v1721
    %v2442 = vpack.c.b16 %v1726, %v1722
    %v2443 = vpack.c.b16 %v1727, %v1723
    %v2444 = vpack.c.b16 %v1728, %v1724
    %v2445 = vpack.c.b16 %v1733, %v1729
    %v2446 = vpack.c.b16 %v1734, %v1730
    %v2447 = vpack.c.b16 %v1735, %v1731
    %v2448 = vpack.c.b16 %v1736, %v1732
    %v2449 = vpack.c.b16 %v1741, %v1737
    %v2450 = vpack.c.b16 %v1742, %v1738
    %v2451 = vpack.c.b16 %v1743, %v1739
    %v2452 = vpack.c.b16 %v1744, %v1740
    %v2453 = vpack.c.b16 %v1749, %v1745
    %v2454 = vpack.c.b16 %v1750, %v1746
    %v2455 = vpack.c.b16 %v1751, %v1747
    %v2456 = vpack.c.b16 %v1752, %v1748
    %v2457 = vpack.c.b16 %v1757, %v1753
    %v2458 = vpack.c.b16 %v1758, %v1754
    %v2459 = vpack.c.b16 %v1759, %v1755
    %v2460 = vpack.c.b16 %v1760, %v1756
    %v2461 = vpack.c.b16 %v1765, %v1761
    %v2462 = vpack.c.b16 %v1766, %v1762
    %v2463 = vpack.c.b16 %v1767, %v1763
    %v2464 = vpack.c.b16 %v1768, %v1764
    %v2465 = vpack.c.b16 %v1773, %v1769
    %v2466 = vpack.c.b16 %v1774, %v1770
    %v2467 = vpack.c.b16 %v1775, %v1771
    %v2468 = vpack.c.b16 %v1776, %v1772
    %v2469 = vpack.c.b16 %v1781, %v1777
    %v2470 = vpack.c.b16 %v1782, %v1778
    %v2471 = vpack.c.b16 %v1783, %v1779
    %v2472 = vpack.c.b16 %v1784, %v1780
    %v2473 = vpack.c.b16 %v1789, %v1785
    %v2474 = vpack.c.b16 %v1790, %v1786
    %v2475 = vpack.c.b16 %v1791, %v1787
    %v2476 = vpack.c.b16 %v1792, %v1788
    %v2477 = vpack.c.b16 %v1797, %v1793
    %v2478 = vpack.c.b16 %v1798, %v1794
    %v2479 = vpack.c.b16 %v1799, %v1795
    %v2480 = vpack.c.b16 %v1800, %v1796
    %v2481 = vpack.c.b16 %v1805, %v1801
    %v2482 = vpack.c.b16 %v1806, %v1802
    %v2483 = vpack.c.b16 %v1807, %v1803
    %v2484 = vpack.c.b16 %v1808, %v1804
    %v2485 = vpack.c.b16 %v1813, %v1809
    %v2486 = vpack.c.b16 %v1814, %v1810
    %v2487 = vpack.c.b16 %v1815, %v1811
    %v2488 = vpack.c.b16 %v1816, %v1812
    %v2489 = vpack.c.b16 %v1821, %v1817
    %v2490 = vpack.c.b16 %v1822, %v1818
    %v2491 = vpack.c.b16 %v1823, %v1819
    %v2492 = vpack.c.b16 %v1824, %v1820
    %v2493 = vpack.c.b16 %v1829, %v1825
    %v2494 = vpack.c.b16 %v1830, %v1826
    %v2495 = vpack.c.b16 %v1831, %v1827
    %v2496 = vpack.c.b16 %v1832, %v1828
    %v2497 = vpack.c.b16 %v1837, %v1833
    %v2498 = vpack.c.b16 %v1838, %v1834
    %v2499 = vpack.c.b16 %v1839, %v1835
    %v2500 = vpack.c.b16 %v1840, %v1836
    %v2501 = vpack.c.b16 %v1845, %v1841
    %v2502 = vpack.c.b16 %v1846, %v1842
    %v2503 = vpack.c.b16 %v1847, %v1843
    %v2504 = vpack.c.b16 %v1848, %v1844
    %v2505 = vpack.c.b16 %v1853, %v1849
    %v2506 = vpack.c.b16 %v1854, %v1850
    %v2507 = vpack.c.b16 %v1855, %v1851
    %v2508 = vpack.c.b16 %v1856, %v1852
    %v2509 = vpack.c.b16 %v1861, %v1857
    %v2510 = vpack.c.b16 %v1862, %v1858
    %v2511 = vpack.c.b16 %v1863, %v1859
    %v2512 = vpack.c.b16 %v1864, %v1860
    %v2513 = vpack.c.b16 %v1869, %v1865
    %v2514 = vpack.c.b16 %v1870, %v1866
    %v2515 = vpack.c.b16 %v1871, %v1867
    %v2516 = vpack.c.b16 %v1872, %v1868
    %v2517 = vpack.c.b16 %v1877, %v1873
    %v2518 = vpack.c.b16 %v1878, %v1874
    %v2519 = vpack.c.b16 %v1879, %v1875
    %v2520 = vpack.c.b16 %v1880, %v1876
    %v2521 = vpack.c.b16 %v1885, %v1881
    %v2522 = vpack.c.b16 %v1886, %v1882
    %v2523 = vpack.c.b16 %v1887, %v1883
    %v2524 = vpack.c.b16 %v1888, %v1884
    %v2525 = vpack.c.b16 %v1893, %v1889
    %v2526 = vpack.c.b16 %v1894, %v1890
    %v2527 = vpack.c.b16 %v1895, %v1891
    %v2528 = vpack.c.b16 %v1896, %v1892
    %v2529 = vpack.c.b16 %v1901, %v1897
    %v2530 = vpack.c.b16 %v1902, %v1898
    %v2531 = vpack.c.b16 %v1903, %v1899
    %v2532 = vpack.c.b16 %v1904, %v1900
    %v2533 = vpack.c.b16 %v1909, %v1905
    %v2534 = vpack.c.b16 %v1910, %v1906
    %v2535 = vpack.c.b16 %v1911, %v1907
    %v2536 = vpack.c.b16 %v1912, %v1908
    %v2537 = vpack.c.b16 %v1917, %v1913
    %v2538 = vpack.c.b16 %v1918, %v1914
    %v2539 = vpack.c.b16 %v1919, %v1915
    %v2540 = vpack.c.b16 %v1920, %v1916
    %v2541 = vpack.c.b16 %v1925, %v1921
    %v2542 = vpack.c.b16 %v1926, %v1922
    %v2543 = vpack.c.b16 %v1927, %v1923
    %v2544 = vpack.c.b16 %v1928, %v1924
    %v2545 = vpack.c.b16 %v1933, %v1929
    %v2546 = vpack.c.b16 %v1934, %v1930
    %v2547 = vpack.c.b16 %v1935, %v1931
    %v2548 = vpack.c.b16 %v1936, %v1932
    %v2549 = vpack.c.b16 %v1941, %v1937
    %v2550 = vpack.c.b16 %v1942, %v1938
    %v2551 = vpack.c.b16 %v1943, %v1939
    %v2552 = vpack.c.b16 %v1944, %v1940
    %v2553 = vpack.c.b16 %v1949, %v1945
    %v2554 = vpack.c.b16 %v1950, %v1946
    %v2555 = vpack.c.b16 %v1951, %v1947
    %v2556 = vpack.c.b16 %v1952, %v1948
    %v2557 = vpack.c.b16 %v1957, %v1953
    %v2558 = vpack.c.b16 %v1958, %v1954
    %v2559 = vpack.c.b16 %v1959, %v1955
    %v2560 = vpack.c.b16 %v1960, %v1956
    %v2561 = vpack.c.b16 %v1965, %v1961
    %v2562 = vpack.c.b16 %v1966, %v1962
    %v2563 = vpack.c.b16 %v1967, %v1963
    %v2564 = vpack.c.b16 %v1968, %v1964
    %v2565 = vpack.c.b16 %v1973, %v1969
    %v2566 = vpack.c.b16 %v1974, %v1970
    %v2567 = vpack.c.b16 %v1975, %v1971
    %v2568 = vpack.c.b16 %v1976, %v1972
    %v2569 = vpack.c.b16 %v1981, %v1977
    %v2570 = vpack.c.b16 %v1982, %v1978
    %v2571 = vpack.c.b16 %v1983, %v1979
    %v2572 = vpack.c.b16 %v1984, %v1980
    %v2573 = vpack.c.b16 %v1989, %v1985
    %v2574 = vpack.c.b16 %v1990, %v1986
    %v2575 = vpack.c.b16 %v1991, %v1987
    %v2576 = vpack.c.b16 %v1992, %v1988
    %v2577 = vpack.c.b16 %v1997, %v1993
    %v2578 = vpack.c.b16 %v1998, %v1994
    %v2579 = vpack.c.b16 %v1999, %v1995
    %v2580 = vpack.c.b16 %v2000, %v1996
    %v2581 = vpack.c.b16 %v2005, %v2001
    %v2582 = vpack.c.b16 %v2006, %v2002
    %v2583 = vpack.c.b16 %v2007, %v2003
    %v2584 = vpack.c.b16 %v2008, %v2004
    %v2585 = vpack.c.b16 %v2013, %v2009
    %v2586 = vpack.c.b16 %v2014, %v2010
    %v2587 = vpack.c.b16 %v2015, %v2011
    %v2588 = vpack.c.b16 %v2016, %v2012
    %v2589 = vpack.c.b16 %v2021, %v2017
    %v2590 = vpack.c.b16 %v2022, %v2018
    %v2591 = vpack.c.b16 %v2023, %v2019
    %v2592 = vpack.c.b16 %v2024, %v2020
    %v2593 = vpack.c.b16 %v2029, %v2025
    %v2594 = vpack.c.b16 %v2030, %v2026
    %v2595 = vpack.c.b16 %v2031, %v2027
    %v2596 = vpack.c.b16 %v2032, %v2028
    %v2597 = vpack.c.b16 %v2037, %v2033
    %v2598 = vpack.c.b16 %v2038, %v2034
    %v2599 = vpack.c.b16 %v2039, %v2035
    %v2600 = vpack.c.b16 %v2040, %v2036
    %v2601 = vpack.c.b16 %v2045, %v2041
    %v2602 = vpack.c.b16 %v2046, %v2042
    %v2603 = vpack.c.b16 %v2047, %v2043
    %v2604 = vpack.c.b16 %v2048, %v2044
    %v2605 = vpack.c.b16 %v2053, %v2049
    %v2606 = vpack.c.b16 %v2054, %v2050
    %v2607 = vpack.c.b16 %v2055, %v2051
    %v2608 = vpack.c.b16 %v2056, %v2052
    %v2609 = vpack.c.b16 %v2061, %v2057
    %v2610 = vpack.c.b16 %v2062, %v2058
    %v2611 = vpack.c.b16 %v2063, %v2059
    %v2612 = vpack.c.b16 %v2064, %v2060
    %v2613 = vpack.c.b16 %v2069, %v2065
    %v2614 = vpack.c.b16 %v2070, %v2066
    %v2615 = vpack.c.b16 %v2071, %v2067
    %v2616 = vpack.c.b16 %v2072, %v2068
    %v2617 = vpack.c.b16 %v2077, %v2073
    %v2618 = vpack.c.b16 %v2078, %v2074
    %v2619 = vpack.c.b16 %v2079, %v2075
    %v2620 = vpack.c.b16 %v2080, %v2076
    %v2621 = vpack.c.b16 %v2085, %v2081
    %v2622 = vpack.c.b16 %v2086, %v2082
    %v2623 = vpack.c.b16 %v2087, %v2083
    %v2624 = vpack.c.b16 %v2088, %v2084
    %v2625 = vpack.c.b16 %v2093, %v2089
    %v2626 = vpack.c.b16 %v2094, %v2090
    %v2627 = vpack.c.b16 %v2095, %v2091
    %v2628 = vpack.c.b16 %v2096, %v2092
    %v2629 = vpack.c.b16 %v2101, %v2097
    %v2630 = vpack.c.b16 %v2102, %v2098
    %v2631 = vpack.c.b16 %v2103, %v2099
    %v2632 = vpack.c.b16 %v2104, %v2100
    %v2633 = vpack.c.b16 %v2109, %v2105
    %v2634 = vpack.c.b16 %v2110, %v2106
    %v2635 = vpack.c.b16 %v2111, %v2107
    %v2636 = vpack.c.b16 %v2112, %v2108
    %v2637 = vpack.c.b16 %v2117, %v2113
    %v2638 = vpack.c.b16 %v2118, %v2114
    %v2639 = vpack.c.b16 %v2119, %v2115
    %v2640 = vpack.c.b16 %v2120, %v2116
    %v2641 = vpack.c.b16 %v2125, %v2121
    %v2642 = vpack.c.b16 %v2126, %v2122
    %v2643 = vpack.c.b16 %v2127, %v2123
    %v2644 = vpack.c.b16 %v2128, %v2124
    %v2645 = vpack.c.b16 %v2133, %v2129
    %v2646 = vpack.c.b16 %v2134, %v2130
    %v2647 = vpack.c.b16 %v2135, %v2131
    %v2648 = vpack.c.b16 %v2136, %v2132
    %v2649 = vpack.c.b16 %v2141, %v2137
    %v2650 = vpack.c.b16 %v2142, %v2138
    %v2651 = vpack.c.b16 %v2143, %v2139
    %v2652 = vpack.c.b16 %v2144, %v2140
    %v2653 = vpack.c.b16 %v2149, %v2145
    %v2654 = vpack.c.b16 %v2150, %v2146
    %v2655 = vpack.c.b16 %v2151, %v2147
    %v2656 = vpack.c.b16 %v2152, %v2148
    %v2657 = vpack.c.b16 %v2157, %v2153
    %v2658 = vpack.c.b16 %v2158, %v2154
    %v2659 = vpack.c.b16 %v2159, %v2155
    %v2660 = vpack.c.b16 %v2160, %v2156
    %vm3161 = vcmask 654336
    %v3163 = vsel %vm3161, %v645, 0
    %3165 = vmatprep.subr.bf16.mxu0 %v2190
    %3166 = vmatpush1.bf16.msra.mxu0 %v2189
    %3167 = vmatprep.subr.bf16.mxu0 %v2186
    %3168 = vmatpush1.bf16.msra.mxu0 %v2185
    %3169 = vmatprep.subr.bf16.mxu0 %v2182
    %3170 = vmatpush1.bf16.msra.mxu0 %v2181
    %3171 = vmatprep.subr.bf16.mxu0 %v2178
    %3172 = vmatpush1.bf16.msra.mxu0 %v2177
    %3173 = vmatprep.subr.bf16.mxu0 %v2174
    %3174 = vmatpush1.bf16.msra.mxu0 %v2173
    %3175 = vmatprep.subr.bf16.mxu0 %v2170
    %3176 = vmatpush1.bf16.msra.mxu0 %v2169
    %3177 = vmatprep.subr.bf16.mxu0 %v2166
    %3178 = vmatpush1.bf16.msra.mxu0 %v2165
    %3179 = vmatprep.subr.bf16.mxu0 %v2162
    %3180 = vmatpush1.bf16.msra.mxu0 %v2161
    %3181 = vmatprep.subr.bf16.mxu0 %v2222
    %3182 = vmatpush2.bf16.msra.mxu0 %v2221
    %3183 = vmatprep.subr.bf16.mxu0 %v2218
    %3184 = vmatpush2.bf16.msra.mxu0 %v2217
    %3185 = vmatprep.subr.bf16.mxu0 %v2214
    %3186 = vmatpush2.bf16.msra.mxu0 %v2213
    %3187 = vmatprep.subr.bf16.mxu0 %v2210
    %3188 = vmatpush2.bf16.msra.mxu0 %v2209
    %3189 = vmatprep.subr.bf16.mxu0 %v2206
    %3190 = vmatpush2.bf16.msra.mxu0 %v2205
    %3191 = vmatprep.subr.bf16.mxu0 %v2202
    %3192 = vmatpush2.bf16.msra.mxu0 %v2201
    %3193 = vmatprep.subr.bf16.mxu0 %v2198
    %3194 = vmatpush2.bf16.msra.mxu0 %v2197
    %3195 = vmatprep.subr.bf16.mxu0 %v2194
    %3196 = vmatpush2.bf16.msra.mxu0 %v2193
    %3197 = vmatprep.mubr.bf16.mxu0 %v585
    %3198 = vmatmul.mubr.bf16.gmra.mxu0 %v571
    %v3199 = vpop.f32.mrf.mxu0
    %v3200 = vadd.f32 %v529, %v3199
    %v3201 = vpop.f32.mrf.mxu0
    %v3202 = vadd.f32 %v533, %v3201
    %v3203 = vpop.f32.mrf.mxu0
    %v3204 = vpop.f32.mrf.mxu0
    %3205 = vdwg.mxu0
    %3206 = vmatprep.subr.bf16.mxu0 %v2254
    %3207 = vmatpush1.bf16.msra.mxu0 %v2253
    %3208 = vmatprep.subr.bf16.mxu0 %v2250
    %3209 = vmatpush1.bf16.msra.mxu0 %v2249
    %3210 = vmatprep.subr.bf16.mxu0 %v2246
    %3211 = vmatpush1.bf16.msra.mxu0 %v2245
    %3212 = vmatprep.subr.bf16.mxu0 %v2242
    %3213 = vmatpush1.bf16.msra.mxu0 %v2241
    %3214 = vmatprep.subr.bf16.mxu0 %v2238
    %3215 = vmatpush1.bf16.msra.mxu0 %v2237
    %3216 = vmatprep.subr.bf16.mxu0 %v2234
    %3217 = vmatpush1.bf16.msra.mxu0 %v2233
    %3218 = vmatprep.subr.bf16.mxu0 %v2230
    %3219 = vmatpush1.bf16.msra.mxu0 %v2229
    %3220 = vmatprep.subr.bf16.mxu0 %v2226
    %3221 = vmatpush1.bf16.msra.mxu0 %v2225
    %3222 = vmatprep.subr.bf16.mxu0 %v2286
    %3223 = vmatpush2.bf16.msra.mxu0 %v2285
    %3224 = vmatprep.subr.bf16.mxu0 %v2282
    %3225 = vmatpush2.bf16.msra.mxu0 %v2281
    %3226 = vmatprep.subr.bf16.mxu0 %v2278
    %3227 = vmatpush2.bf16.msra.mxu0 %v2277
    %3228 = vmatprep.subr.bf16.mxu0 %v2274
    %3229 = vmatpush2.bf16.msra.mxu0 %v2273
    %3230 = vmatprep.subr.bf16.mxu0 %v2270
    %3231 = vmatpush2.bf16.msra.mxu0 %v2269
    %3232 = vmatprep.subr.bf16.mxu0 %v2266
    %3233 = vmatpush2.bf16.msra.mxu0 %v2265
    %3234 = vmatprep.subr.bf16.mxu0 %v2262
    %3235 = vmatpush2.bf16.msra.mxu0 %v2261
    %3236 = vmatprep.subr.bf16.mxu0 %v2258
    %3237 = vmatpush2.bf16.msra.mxu0 %v2257
    %3238 = vmatprep.mubr.bf16.mxu0 %v595
    %3239 = vmatmul.mubr.bf16.gmra.mxu0 %v593
    %v3240 = vpop.f32.mrf.mxu0
    %v3241 = vadd.f32 %v3200, %v3240
    %v3242 = vpop.f32.mrf.mxu0
    %v3243 = vadd.f32 %v3202, %v3242
    %v3244 = vpop.f32.mrf.mxu0
    %v3245 = vpop.f32.mrf.mxu0
    %3246 = vdwg.mxu0
    %3247 = vmatprep.subr.bf16.mxu0 %v2318
    %3248 = vmatpush1.bf16.msra.mxu0 %v2317
    %3249 = vmatprep.subr.bf16.mxu0 %v2314
    %3250 = vmatpush1.bf16.msra.mxu0 %v2313
    %3251 = vmatprep.subr.bf16.mxu0 %v2310
    %3252 = vmatpush1.bf16.msra.mxu0 %v2309
    %3253 = vmatprep.subr.bf16.mxu0 %v2306
    %3254 = vmatpush1.bf16.msra.mxu0 %v2305
    %3255 = vmatprep.subr.bf16.mxu0 %v2302
    %3256 = vmatpush1.bf16.msra.mxu0 %v2301
    %3257 = vmatprep.subr.bf16.mxu0 %v2298
    %3258 = vmatpush1.bf16.msra.mxu0 %v2297
    %3259 = vmatprep.subr.bf16.mxu0 %v2294
    %3260 = vmatpush1.bf16.msra.mxu0 %v2293
    %3261 = vmatprep.subr.bf16.mxu0 %v2290
    %3262 = vmatpush1.bf16.msra.mxu0 %v2289
    %3263 = vmatprep.subr.bf16.mxu0 %v2350
    %3264 = vmatpush2.bf16.msra.mxu0 %v2349
    %3265 = vmatprep.subr.bf16.mxu0 %v2346
    %3266 = vmatpush2.bf16.msra.mxu0 %v2345
    %3267 = vmatprep.subr.bf16.mxu0 %v2342
    %3268 = vmatpush2.bf16.msra.mxu0 %v2341
    %3269 = vmatprep.subr.bf16.mxu0 %v2338
    %3270 = vmatpush2.bf16.msra.mxu0 %v2337
    %3271 = vmatprep.subr.bf16.mxu0 %v2334
    %3272 = vmatpush2.bf16.msra.mxu0 %v2333
    %3273 = vmatprep.subr.bf16.mxu0 %v2330
    %3274 = vmatpush2.bf16.msra.mxu0 %v2329
    %3275 = vmatprep.subr.bf16.mxu0 %v2326
    %3276 = vmatpush2.bf16.msra.mxu0 %v2325
    %3277 = vmatprep.subr.bf16.mxu0 %v2322
    %3278 = vmatpush2.bf16.msra.mxu0 %v2321
    %3279 = vmatprep.mubr.bf16.mxu0 %v592
    %3280 = vmatmul.mubr.bf16.gmra.mxu0 %v578
    %v3281 = vpop.f32.mrf.mxu0
    %v3282 = vadd.f32 %v3241, %v3281
    %v3283 = vpop.f32.mrf.mxu0
    %v3284 = vadd.f32 %v3243, %v3283
    %v3285 = vpop.f32.mrf.mxu0
    %v3286 = vpop.f32.mrf.mxu0
    %3287 = vdwg.mxu0
    %3288 = vmatprep.subr.bf16.mxu0 %v2382
    %3289 = vmatpush1.bf16.msra.mxu0 %v2381
    %3290 = vmatprep.subr.bf16.mxu0 %v2378
    %3291 = vmatpush1.bf16.msra.mxu0 %v2377
    %3292 = vmatprep.subr.bf16.mxu0 %v2374
    %3293 = vmatpush1.bf16.msra.mxu0 %v2373
    %3294 = vmatprep.subr.bf16.mxu0 %v2370
    %3295 = vmatpush1.bf16.msra.mxu0 %v2369
    %3296 = vmatprep.subr.bf16.mxu0 %v2366
    %3297 = vmatpush1.bf16.msra.mxu0 %v2365
    %3298 = vmatprep.subr.bf16.mxu0 %v2362
    %3299 = vmatpush1.bf16.msra.mxu0 %v2361
    %3300 = vmatprep.subr.bf16.mxu0 %v2358
    %3301 = vmatpush1.bf16.msra.mxu0 %v2357
    %3302 = vmatprep.subr.bf16.mxu0 %v2354
    %3303 = vmatpush1.bf16.msra.mxu0 %v2353
    %3304 = vmatprep.subr.bf16.mxu0 %v2414
    %3305 = vmatpush2.bf16.msra.mxu0 %v2413
    %3306 = vmatprep.subr.bf16.mxu0 %v2410
    %3307 = vmatpush2.bf16.msra.mxu0 %v2409
    %3308 = vmatprep.subr.bf16.mxu0 %v2406
    %3309 = vmatpush2.bf16.msra.mxu0 %v2405
    %3310 = vmatprep.subr.bf16.mxu0 %v2402
    %3311 = vmatpush2.bf16.msra.mxu0 %v2401
    %3312 = vmatprep.subr.bf16.mxu0 %v2398
    %3313 = vmatpush2.bf16.msra.mxu0 %v2397
    %3314 = vmatprep.subr.bf16.mxu0 %v2394
    %3315 = vmatpush2.bf16.msra.mxu0 %v2393
    %3316 = vmatprep.subr.bf16.mxu0 %v2390
    %3317 = vmatpush2.bf16.msra.mxu0 %v2389
    %3318 = vmatprep.subr.bf16.mxu0 %v2386
    %3319 = vmatpush2.bf16.msra.mxu0 %v2385
    %3320 = vmatprep.mubr.bf16.mxu0 %v596
    %3321 = vmatmul.mubr.bf16.gmra.mxu0 %v594
    %v3322 = vpop.f32.mrf.mxu0
    %v3323 = vadd.f32 %v3282, %v3322
    %v3324 = vpop.f32.mrf.mxu0
    %v3325 = vadd.f32 %v3284, %v3324
    %v3326 = vpop.f32.mrf.mxu0
    %v3327 = vpop.f32.mrf.mxu0
    %3328 = vdwg.mxu0
    %3329 = vmatprep.subr.bf16.mxu0 %v2446
    %3330 = vmatpush1.bf16.msra.mxu0 %v2445
    %3331 = vmatprep.subr.bf16.mxu0 %v2442
    %3332 = vmatpush1.bf16.msra.mxu0 %v2441
    %3333 = vmatprep.subr.bf16.mxu0 %v2438
    %3334 = vmatpush1.bf16.msra.mxu0 %v2437
    %3335 = vmatprep.subr.bf16.mxu0 %v2434
    %3336 = vmatpush1.bf16.msra.mxu0 %v2433
    %3337 = vmatprep.subr.bf16.mxu0 %v2430
    %3338 = vmatpush1.bf16.msra.mxu0 %v2429
    %3339 = vmatprep.subr.bf16.mxu0 %v2426
    %3340 = vmatpush1.bf16.msra.mxu0 %v2425
    %3341 = vmatprep.subr.bf16.mxu0 %v2422
    %3342 = vmatpush1.bf16.msra.mxu0 %v2421
    %3343 = vmatprep.subr.bf16.mxu0 %v2418
    %3344 = vmatpush1.bf16.msra.mxu0 %v2417
    %3345 = vmatprep.subr.bf16.mxu0 %v2478
    %3346 = vmatpush2.bf16.msra.mxu0 %v2477
    %3347 = vmatprep.subr.bf16.mxu0 %v2474
    %3348 = vmatpush2.bf16.msra.mxu0 %v2473
    %3349 = vmatprep.subr.bf16.mxu0 %v2470
    %3350 = vmatpush2.bf16.msra.mxu0 %v2469
    %3351 = vmatprep.subr.bf16.mxu0 %v2466
    %3352 = vmatpush2.bf16.msra.mxu0 %v2465
    %3353 = vmatprep.subr.bf16.mxu0 %v2462
    %3354 = vmatpush2.bf16.msra.mxu0 %v2461
    %3355 = vmatprep.subr.bf16.mxu0 %v2458
    %3356 = vmatpush2.bf16.msra.mxu0 %v2457
    %3357 = vmatprep.subr.bf16.mxu0 %v2454
    %3358 = vmatpush2.bf16.msra.mxu0 %v2453
    %3359 = vmatprep.subr.bf16.mxu0 %v2450
    %3360 = vmatpush2.bf16.msra.mxu0 %v2449
    %3361 = vmatprep.mubr.bf16.mxu0 %v634
    %3362 = vmatmul.mubr.bf16.gmra.mxu0 %v620
    %v3363 = vpop.f32.mrf.mxu0
    %v3364 = vadd.f32 %v3323, %v3363
    %v3365 = vpop.f32.mrf.mxu0
    %v3366 = vadd.f32 %v3325, %v3365
    %v3367 = vpop.f32.mrf.mxu0
    %v3368 = vpop.f32.mrf.mxu0
    %3369 = vdwg.mxu0
    %3370 = vmatprep.subr.bf16.mxu0 %v2510
    %3371 = vmatpush1.bf16.msra.mxu0 %v2509
    %3372 = vmatprep.subr.bf16.mxu0 %v2506
    %3373 = vmatpush1.bf16.msra.mxu0 %v2505
    %3374 = vmatprep.subr.bf16.mxu0 %v2502
    %3375 = vmatpush1.bf16.msra.mxu0 %v2501
    %3376 = vmatprep.subr.bf16.mxu0 %v2498
    %3377 = vmatpush1.bf16.msra.mxu0 %v2497
    %3378 = vmatprep.subr.bf16.mxu0 %v2494
    %3379 = vmatpush1.bf16.msra.mxu0 %v2493
    %3380 = vmatprep.subr.bf16.mxu0 %v2490
    %3381 = vmatpush1.bf16.msra.mxu0 %v2489
    %3382 = vmatprep.subr.bf16.mxu0 %v2486
    %3383 = vmatpush1.bf16.msra.mxu0 %v2485
    %3384 = vmatprep.subr.bf16.mxu0 %v2482
    %3385 = vmatpush1.bf16.msra.mxu0 %v2481
    %3386 = vmatprep.subr.bf16.mxu0 %v2542
    %3387 = vmatpush2.bf16.msra.mxu0 %v2541
    %3388 = vmatprep.subr.bf16.mxu0 %v2538
    %3389 = vmatpush2.bf16.msra.mxu0 %v2537
    %3390 = vmatprep.subr.bf16.mxu0 %v2534
    %3391 = vmatpush2.bf16.msra.mxu0 %v2533
    %3392 = vmatprep.subr.bf16.mxu0 %v2530
    %3393 = vmatpush2.bf16.msra.mxu0 %v2529
    %3394 = vmatprep.subr.bf16.mxu0 %v2526
    %3395 = vmatpush2.bf16.msra.mxu0 %v2525
    %3396 = vmatprep.subr.bf16.mxu0 %v2522
    %3397 = vmatpush2.bf16.msra.mxu0 %v2521
    %3398 = vmatprep.subr.bf16.mxu0 %v2518
    %3399 = vmatpush2.bf16.msra.mxu0 %v2517
    %3400 = vmatprep.subr.bf16.mxu0 %v2514
    %3401 = vmatpush2.bf16.msra.mxu0 %v2513
    %3402 = vmatprep.mubr.bf16.mxu0 %v644
    %3403 = vmatmul.mubr.bf16.gmra.mxu0 %v642
    %v3404 = vpop.f32.mrf.mxu0
    %v3405 = vadd.f32 %v3364, %v3404
    %v3406 = vpop.f32.mrf.mxu0
    %v3407 = vadd.f32 %v3366, %v3406
    %v3408 = vpop.f32.mrf.mxu0
    %v3409 = vpop.f32.mrf.mxu0
    %3410 = vdwg.mxu0
    %3411 = vmatprep.subr.bf16.mxu0 %v2574
    %3412 = vmatpush1.bf16.msra.mxu0 %v2573
    %3413 = vmatprep.subr.bf16.mxu0 %v2570
    %3414 = vmatpush1.bf16.msra.mxu0 %v2569
    %3415 = vmatprep.subr.bf16.mxu0 %v2566
    %3416 = vmatpush1.bf16.msra.mxu0 %v2565
    %3417 = vmatprep.subr.bf16.mxu0 %v2562
    %3418 = vmatpush1.bf16.msra.mxu0 %v2561
    %3419 = vmatprep.subr.bf16.mxu0 %v2558
    %3420 = vmatpush1.bf16.msra.mxu0 %v2557
    %3421 = vmatprep.subr.bf16.mxu0 %v2554
    %3422 = vmatpush1.bf16.msra.mxu0 %v2553
    %3423 = vmatprep.subr.bf16.mxu0 %v2550
    %3424 = vmatpush1.bf16.msra.mxu0 %v2549
    %3425 = vmatprep.subr.bf16.mxu0 %v2546
    %3426 = vmatpush1.bf16.msra.mxu0 %v2545
    %3427 = vmatprep.subr.bf16.mxu0 %v2606
    %3428 = vmatpush2.bf16.msra.mxu0 %v2605
    %3429 = vmatprep.subr.bf16.mxu0 %v2602
    %3430 = vmatpush2.bf16.msra.mxu0 %v2601
    %3431 = vmatprep.subr.bf16.mxu0 %v2598
    %3432 = vmatpush2.bf16.msra.mxu0 %v2597
    %3433 = vmatprep.subr.bf16.mxu0 %v2594
    %3434 = vmatpush2.bf16.msra.mxu0 %v2593
    %3435 = vmatprep.subr.bf16.mxu0 %v2590
    %3436 = vmatpush2.bf16.msra.mxu0 %v2589
    %3437 = vmatprep.subr.bf16.mxu0 %v2586
    %3438 = vmatpush2.bf16.msra.mxu0 %v2585
    %3439 = vmatprep.subr.bf16.mxu0 %v2582
    %3440 = vmatpush2.bf16.msra.mxu0 %v2581
    %3441 = vmatprep.subr.bf16.mxu0 %v2578
    %3442 = vmatpush2.bf16.msra.mxu0 %v2577
    %3443 = vmatprep.mubr.bf16.mxu0 %v641
    %3444 = vmatmul.mubr.bf16.gmra.mxu0 %v627
    %v3445 = vpop.f32.mrf.mxu0
    %v3446 = vadd.f32 %v3405, %v3445
    %v3447 = vpop.f32.mrf.mxu0
    %v3448 = vadd.f32 %v3407, %v3447
    %v3449 = vpop.f32.mrf.mxu0
    %v3450 = vpop.f32.mrf.mxu0
    %3451 = vdwg.mxu0
    %3452 = vmatprep.subr.bf16.mxu0 %v2638
    %3453 = vmatpush1.bf16.msra.mxu0 %v2637
    %3454 = vmatprep.subr.bf16.mxu0 %v2634
    %3455 = vmatpush1.bf16.msra.mxu0 %v2633
    %3456 = vmatprep.subr.bf16.mxu0 %v2630
    %3457 = vmatpush1.bf16.msra.mxu0 %v2629
    %3458 = vmatprep.subr.bf16.mxu0 %v2626
    %3459 = vmatpush1.bf16.msra.mxu0 %v2625
    %3460 = vmatprep.subr.bf16.mxu0 %v2622
    %3461 = vmatpush1.bf16.msra.mxu0 %v2621
    %3462 = vmatprep.subr.bf16.mxu0 %v2618
    %3463 = vmatpush1.bf16.msra.mxu0 %v2617
    %3464 = vmatprep.subr.bf16.mxu0 %v2614
    %3465 = vmatpush1.bf16.msra.mxu0 %v2613
    %3466 = vmatprep.subr.bf16.mxu0 %v2610
    %3467 = vmatpush1.bf16.msra.mxu0 %v2609
    %3468 = vmatprep.subr.bf16.mxu0 0
    %3469 = vmatpush2.bf16.msra.mxu0 0
    %3470 = vmatprep.subr.bf16.mxu0 0
    %3471 = vmatpush2.bf16.msra.mxu0 0
    %3472 = vmatprep.subr.bf16.mxu0 0
    %3473 = vmatpush2.bf16.msra.mxu0 0
    %3474 = vmatprep.subr.bf16.mxu0 %v2658
    %3475 = vmatpush2.bf16.msra.mxu0 %v2657
    %3476 = vmatprep.subr.bf16.mxu0 %v2654
    %3477 = vmatpush2.bf16.msra.mxu0 %v2653
    %3478 = vmatprep.subr.bf16.mxu0 %v2650
    %3479 = vmatpush2.bf16.msra.mxu0 %v2649
    %3480 = vmatprep.subr.bf16.mxu0 %v2646
    %3481 = vmatpush2.bf16.msra.mxu0 %v2645
    %3482 = vmatprep.subr.bf16.mxu0 %v2642
    %3483 = vmatpush2.bf16.msra.mxu0 %v2641
    %3484 = vmatprep.mubr.bf16.mxu0 %v3163
    %3485 = vmatmul.mubr.bf16.gmra.mxu0 %v643
    %v3486 = vpop.f32.mrf.mxu0
    %v3487 = vadd.f32 %v3446, %v3486
    %v3488 = vpop.f32.mrf.mxu0
    %v3489 = vadd.f32 %v3448, %v3488
    %v3490 = vpop.f32.mrf.mxu0
    %v3491 = vpop.f32.mrf.mxu0
    %3492 = vdwg.mxu0
    %3493 = vmatprep.subr.bf16.mxu0 %v2192
    %3494 = vmatpush1.bf16.msra.mxu0 %v2191
    %3495 = vmatprep.subr.bf16.mxu0 %v2188
    %3496 = vmatpush1.bf16.msra.mxu0 %v2187
    %3497 = vmatprep.subr.bf16.mxu0 %v2184
    %3498 = vmatpush1.bf16.msra.mxu0 %v2183
    %3499 = vmatprep.subr.bf16.mxu0 %v2180
    %3500 = vmatpush1.bf16.msra.mxu0 %v2179
    %3501 = vmatprep.subr.bf16.mxu0 %v2176
    %3502 = vmatpush1.bf16.msra.mxu0 %v2175
    %3503 = vmatprep.subr.bf16.mxu0 %v2172
    %3504 = vmatpush1.bf16.msra.mxu0 %v2171
    %3505 = vmatprep.subr.bf16.mxu0 %v2168
    %3506 = vmatpush1.bf16.msra.mxu0 %v2167
    %3507 = vmatprep.subr.bf16.mxu0 %v2164
    %3508 = vmatpush1.bf16.msra.mxu0 %v2163
    %3509 = vmatprep.subr.bf16.mxu0 %v2224
    %3510 = vmatpush2.bf16.msra.mxu0 %v2223
    %3511 = vmatprep.subr.bf16.mxu0 %v2220
    %3512 = vmatpush2.bf16.msra.mxu0 %v2219
    %3513 = vmatprep.subr.bf16.mxu0 %v2216
    %3514 = vmatpush2.bf16.msra.mxu0 %v2215
    %3515 = vmatprep.subr.bf16.mxu0 %v2212
    %3516 = vmatpush2.bf16.msra.mxu0 %v2211
    %3517 = vmatprep.subr.bf16.mxu0 %v2208
    %3518 = vmatpush2.bf16.msra.mxu0 %v2207
    %3519 = vmatprep.subr.bf16.mxu0 %v2204
    %3520 = vmatpush2.bf16.msra.mxu0 %v2203
    %3521 = vmatprep.subr.bf16.mxu0 %v2200
    %3522 = vmatpush2.bf16.msra.mxu0 %v2199
    %3523 = vmatprep.subr.bf16.mxu0 %v2196
    %3524 = vmatpush2.bf16.msra.mxu0 %v2195
    %3525 = vmatprep.mubr.bf16.mxu0 %v585
    %3526 = vmatmul.mubr.bf16.gmra.mxu0 %v571
    %v3527 = vpop.f32.mrf.mxu0
    %v3528 = vadd.f32 %v537, %v3527
    %v3529 = vpop.f32.mrf.mxu0
    %v3530 = vadd.f32 %v541, %v3529
    %v3531 = vpop.f32.mrf.mxu0
    %v3532 = vpop.f32.mrf.mxu0
    %3533 = vdwg.mxu0
    %3534 = vmatprep.subr.bf16.mxu0 %v2256
    %3535 = vmatpush1.bf16.msra.mxu0 %v2255
    %3536 = vmatprep.subr.bf16.mxu0 %v2252
    %3537 = vmatpush1.bf16.msra.mxu0 %v2251
    %3538 = vmatprep.subr.bf16.mxu0 %v2248
    %3539 = vmatpush1.bf16.msra.mxu0 %v2247
    %3540 = vmatprep.subr.bf16.mxu0 %v2244
    %3541 = vmatpush1.bf16.msra.mxu0 %v2243
    %3542 = vmatprep.subr.bf16.mxu0 %v2240
    %3543 = vmatpush1.bf16.msra.mxu0 %v2239
    %3544 = vmatprep.subr.bf16.mxu0 %v2236
    %3545 = vmatpush1.bf16.msra.mxu0 %v2235
    %3546 = vmatprep.subr.bf16.mxu0 %v2232
    %3547 = vmatpush1.bf16.msra.mxu0 %v2231
    %3548 = vmatprep.subr.bf16.mxu0 %v2228
    %3549 = vmatpush1.bf16.msra.mxu0 %v2227
    %3550 = vmatprep.subr.bf16.mxu0 %v2288
    %3551 = vmatpush2.bf16.msra.mxu0 %v2287
    %3552 = vmatprep.subr.bf16.mxu0 %v2284
    %3553 = vmatpush2.bf16.msra.mxu0 %v2283
    %3554 = vmatprep.subr.bf16.mxu0 %v2280
    %3555 = vmatpush2.bf16.msra.mxu0 %v2279
    %3556 = vmatprep.subr.bf16.mxu0 %v2276
    %3557 = vmatpush2.bf16.msra.mxu0 %v2275
    %3558 = vmatprep.subr.bf16.mxu0 %v2272
    %3559 = vmatpush2.bf16.msra.mxu0 %v2271
    %3560 = vmatprep.subr.bf16.mxu0 %v2268
    %3561 = vmatpush2.bf16.msra.mxu0 %v2267
    %3562 = vmatprep.subr.bf16.mxu0 %v2264
    %3563 = vmatpush2.bf16.msra.mxu0 %v2263
    %3564 = vmatprep.subr.bf16.mxu0 %v2260
    %3565 = vmatpush2.bf16.msra.mxu0 %v2259
    %3566 = vmatprep.mubr.bf16.mxu0 %v595
    %3567 = vmatmul.mubr.bf16.gmra.mxu0 %v593
    %v3568 = vpop.f32.mrf.mxu0
    %v3569 = vadd.f32 %v3528, %v3568
    %v3570 = vpop.f32.mrf.mxu0
    %v3571 = vadd.f32 %v3530, %v3570
    %v3572 = vpop.f32.mrf.mxu0
    %v3573 = vpop.f32.mrf.mxu0
    %3574 = vdwg.mxu0
    %3575 = vmatprep.subr.bf16.mxu0 %v2320
    %3576 = vmatpush1.bf16.msra.mxu0 %v2319
    %3577 = vmatprep.subr.bf16.mxu0 %v2316
    %3578 = vmatpush1.bf16.msra.mxu0 %v2315
    %3579 = vmatprep.subr.bf16.mxu0 %v2312
    %3580 = vmatpush1.bf16.msra.mxu0 %v2311
    %3581 = vmatprep.subr.bf16.mxu0 %v2308
    %3582 = vmatpush1.bf16.msra.mxu0 %v2307
    %3583 = vmatprep.subr.bf16.mxu0 %v2304
    %3584 = vmatpush1.bf16.msra.mxu0 %v2303
    %3585 = vmatprep.subr.bf16.mxu0 %v2300
    %3586 = vmatpush1.bf16.msra.mxu0 %v2299
    %3587 = vmatprep.subr.bf16.mxu0 %v2296
    %3588 = vmatpush1.bf16.msra.mxu0 %v2295
    %3589 = vmatprep.subr.bf16.mxu0 %v2292
    %3590 = vmatpush1.bf16.msra.mxu0 %v2291
    %3591 = vmatprep.subr.bf16.mxu0 %v2352
    %3592 = vmatpush2.bf16.msra.mxu0 %v2351
    %3593 = vmatprep.subr.bf16.mxu0 %v2348
    %3594 = vmatpush2.bf16.msra.mxu0 %v2347
    %3595 = vmatprep.subr.bf16.mxu0 %v2344
    %3596 = vmatpush2.bf16.msra.mxu0 %v2343
    %3597 = vmatprep.subr.bf16.mxu0 %v2340
    %3598 = vmatpush2.bf16.msra.mxu0 %v2339
    %3599 = vmatprep.subr.bf16.mxu0 %v2336
    %3600 = vmatpush2.bf16.msra.mxu0 %v2335
    %3601 = vmatprep.subr.bf16.mxu0 %v2332
    %3602 = vmatpush2.bf16.msra.mxu0 %v2331
    %3603 = vmatprep.subr.bf16.mxu0 %v2328
    %3604 = vmatpush2.bf16.msra.mxu0 %v2327
    %3605 = vmatprep.subr.bf16.mxu0 %v2324
    %3606 = vmatpush2.bf16.msra.mxu0 %v2323
    %3607 = vmatprep.mubr.bf16.mxu0 %v592
    %3608 = vmatmul.mubr.bf16.gmra.mxu0 %v578
    %v3609 = vpop.f32.mrf.mxu0
    %v3610 = vadd.f32 %v3569, %v3609
    %v3611 = vpop.f32.mrf.mxu0
    %v3612 = vadd.f32 %v3571, %v3611
    %v3613 = vpop.f32.mrf.mxu0
    %v3614 = vpop.f32.mrf.mxu0
    %3615 = vdwg.mxu0
    %3616 = vmatprep.subr.bf16.mxu0 %v2384
    %3617 = vmatpush1.bf16.msra.mxu0 %v2383
    %3618 = vmatprep.subr.bf16.mxu0 %v2380
    %3619 = vmatpush1.bf16.msra.mxu0 %v2379
    %3620 = vmatprep.subr.bf16.mxu0 %v2376
    %3621 = vmatpush1.bf16.msra.mxu0 %v2375
    %3622 = vmatprep.subr.bf16.mxu0 %v2372
    %3623 = vmatpush1.bf16.msra.mxu0 %v2371
    %3624 = vmatprep.subr.bf16.mxu0 %v2368
    %3625 = vmatpush1.bf16.msra.mxu0 %v2367
    %3626 = vmatprep.subr.bf16.mxu0 %v2364
    %3627 = vmatpush1.bf16.msra.mxu0 %v2363
    %3628 = vmatprep.subr.bf16.mxu0 %v2360
    %3629 = vmatpush1.bf16.msra.mxu0 %v2359
    %3630 = vmatprep.subr.bf16.mxu0 %v2356
    %3631 = vmatpush1.bf16.msra.mxu0 %v2355
    %3632 = vmatprep.subr.bf16.mxu0 %v2416
    %3633 = vmatpush2.bf16.msra.mxu0 %v2415
    %3634 = vmatprep.subr.bf16.mxu0 %v2412
    %3635 = vmatpush2.bf16.msra.mxu0 %v2411
    %3636 = vmatprep.subr.bf16.mxu0 %v2408
    %3637 = vmatpush2.bf16.msra.mxu0 %v2407
    %3638 = vmatprep.subr.bf16.mxu0 %v2404
    %3639 = vmatpush2.bf16.msra.mxu0 %v2403
    %3640 = vmatprep.subr.bf16.mxu0 %v2400
    %3641 = vmatpush2.bf16.msra.mxu0 %v2399
    %3642 = vmatprep.subr.bf16.mxu0 %v2396
    %3643 = vmatpush2.bf16.msra.mxu0 %v2395
    %3644 = vmatprep.subr.bf16.mxu0 %v2392
    %3645 = vmatpush2.bf16.msra.mxu0 %v2391
    %3646 = vmatprep.subr.bf16.mxu0 %v2388
    %3647 = vmatpush2.bf16.msra.mxu0 %v2387
    %3648 = vmatprep.mubr.bf16.mxu0 %v596
    %3649 = vmatmul.mubr.bf16.gmra.mxu0 %v594
    %v3650 = vpop.f32.mrf.mxu0
    %v3651 = vadd.f32 %v3610, %v3650
    %v3652 = vpop.f32.mrf.mxu0
    %v3653 = vadd.f32 %v3612, %v3652
    %v3654 = vpop.f32.mrf.mxu0
    %v3655 = vpop.f32.mrf.mxu0
    %3656 = vdwg.mxu0
    %3657 = vmatprep.subr.bf16.mxu0 %v2448
    %3658 = vmatpush1.bf16.msra.mxu0 %v2447
    %3659 = vmatprep.subr.bf16.mxu0 %v2444
    %3660 = vmatpush1.bf16.msra.mxu0 %v2443
    %3661 = vmatprep.subr.bf16.mxu0 %v2440
    %3662 = vmatpush1.bf16.msra.mxu0 %v2439
    %3663 = vmatprep.subr.bf16.mxu0 %v2436
    %3664 = vmatpush1.bf16.msra.mxu0 %v2435
    %3665 = vmatprep.subr.bf16.mxu0 %v2432
    %3666 = vmatpush1.bf16.msra.mxu0 %v2431
    %3667 = vmatprep.subr.bf16.mxu0 %v2428
    %3668 = vmatpush1.bf16.msra.mxu0 %v2427
    %3669 = vmatprep.subr.bf16.mxu0 %v2424
    %3670 = vmatpush1.bf16.msra.mxu0 %v2423
    %3671 = vmatprep.subr.bf16.mxu0 %v2420
    %3672 = vmatpush1.bf16.msra.mxu0 %v2419
    %3673 = vmatprep.subr.bf16.mxu0 %v2480
    %3674 = vmatpush2.bf16.msra.mxu0 %v2479
    %3675 = vmatprep.subr.bf16.mxu0 %v2476
    %3676 = vmatpush2.bf16.msra.mxu0 %v2475
    %3677 = vmatprep.subr.bf16.mxu0 %v2472
    %3678 = vmatpush2.bf16.msra.mxu0 %v2471
    %3679 = vmatprep.subr.bf16.mxu0 %v2468
    %3680 = vmatpush2.bf16.msra.mxu0 %v2467
    %3681 = vmatprep.subr.bf16.mxu0 %v2464
    %3682 = vmatpush2.bf16.msra.mxu0 %v2463
    %3683 = vmatprep.subr.bf16.mxu0 %v2460
    %3684 = vmatpush2.bf16.msra.mxu0 %v2459
    %3685 = vmatprep.subr.bf16.mxu0 %v2456
    %3686 = vmatpush2.bf16.msra.mxu0 %v2455
    %3687 = vmatprep.subr.bf16.mxu0 %v2452
    %3688 = vmatpush2.bf16.msra.mxu0 %v2451
    %3689 = vmatprep.mubr.bf16.mxu0 %v634
    %3690 = vmatmul.mubr.bf16.gmra.mxu0 %v620
    %v3691 = vpop.f32.mrf.mxu0
    %v3692 = vadd.f32 %v3651, %v3691
    %v3693 = vpop.f32.mrf.mxu0
    %v3694 = vadd.f32 %v3653, %v3693
    %v3695 = vpop.f32.mrf.mxu0
    %v3696 = vpop.f32.mrf.mxu0
    %3697 = vdwg.mxu0
    %3698 = vmatprep.subr.bf16.mxu0 %v2512
    %3699 = vmatpush1.bf16.msra.mxu0 %v2511
    %3700 = vmatprep.subr.bf16.mxu0 %v2508
    %3701 = vmatpush1.bf16.msra.mxu0 %v2507
    %3702 = vmatprep.subr.bf16.mxu0 %v2504
    %3703 = vmatpush1.bf16.msra.mxu0 %v2503
    %3704 = vmatprep.subr.bf16.mxu0 %v2500
    %3705 = vmatpush1.bf16.msra.mxu0 %v2499
    %3706 = vmatprep.subr.bf16.mxu0 %v2496
    %3707 = vmatpush1.bf16.msra.mxu0 %v2495
    %3708 = vmatprep.subr.bf16.mxu0 %v2492
    %3709 = vmatpush1.bf16.msra.mxu0 %v2491
    %3710 = vmatprep.subr.bf16.mxu0 %v2488
    %3711 = vmatpush1.bf16.msra.mxu0 %v2487
    %3712 = vmatprep.subr.bf16.mxu0 %v2484
    %3713 = vmatpush1.bf16.msra.mxu0 %v2483
    %3714 = vmatprep.subr.bf16.mxu0 %v2544
    %3715 = vmatpush2.bf16.msra.mxu0 %v2543
    %3716 = vmatprep.subr.bf16.mxu0 %v2540
    %3717 = vmatpush2.bf16.msra.mxu0 %v2539
    %3718 = vmatprep.subr.bf16.mxu0 %v2536
    %3719 = vmatpush2.bf16.msra.mxu0 %v2535
    %3720 = vmatprep.subr.bf16.mxu0 %v2532
    %3721 = vmatpush2.bf16.msra.mxu0 %v2531
    %3722 = vmatprep.subr.bf16.mxu0 %v2528
    %3723 = vmatpush2.bf16.msra.mxu0 %v2527
    %3724 = vmatprep.subr.bf16.mxu0 %v2524
    %3725 = vmatpush2.bf16.msra.mxu0 %v2523
    %3726 = vmatprep.subr.bf16.mxu0 %v2520
    %3727 = vmatpush2.bf16.msra.mxu0 %v2519
    %3728 = vmatprep.subr.bf16.mxu0 %v2516
    %3729 = vmatpush2.bf16.msra.mxu0 %v2515
    %3730 = vmatprep.mubr.bf16.mxu0 %v644
    %3731 = vmatmul.mubr.bf16.gmra.mxu0 %v642
    %v3732 = vpop.f32.mrf.mxu0
    %v3733 = vadd.f32 %v3692, %v3732
    %v3734 = vpop.f32.mrf.mxu0
    %v3735 = vadd.f32 %v3694, %v3734
    %v3736 = vpop.f32.mrf.mxu0
    %v3737 = vpop.f32.mrf.mxu0
    %3738 = vdwg.mxu0
    %3739 = vmatprep.subr.bf16.mxu0 %v2576
    %3740 = vmatpush1.bf16.msra.mxu0 %v2575
    %3741 = vmatprep.subr.bf16.mxu0 %v2572
    %3742 = vmatpush1.bf16.msra.mxu0 %v2571
    %3743 = vmatprep.subr.bf16.mxu0 %v2568
    %3744 = vmatpush1.bf16.msra.mxu0 %v2567
    %3745 = vmatprep.subr.bf16.mxu0 %v2564
    %3746 = vmatpush1.bf16.msra.mxu0 %v2563
    %3747 = vmatprep.subr.bf16.mxu0 %v2560
    %3748 = vmatpush1.bf16.msra.mxu0 %v2559
    %3749 = vmatprep.subr.bf16.mxu0 %v2556
    %3750 = vmatpush1.bf16.msra.mxu0 %v2555
    %3751 = vmatprep.subr.bf16.mxu0 %v2552
    %3752 = vmatpush1.bf16.msra.mxu0 %v2551
    %3753 = vmatprep.subr.bf16.mxu0 %v2548
    %3754 = vmatpush1.bf16.msra.mxu0 %v2547
    %3755 = vmatprep.subr.bf16.mxu0 %v2608
    %3756 = vmatpush2.bf16.msra.mxu0 %v2607
    %3757 = vmatprep.subr.bf16.mxu0 %v2604
    %3758 = vmatpush2.bf16.msra.mxu0 %v2603
    %3759 = vmatprep.subr.bf16.mxu0 %v2600
    %3760 = vmatpush2.bf16.msra.mxu0 %v2599
    %3761 = vmatprep.subr.bf16.mxu0 %v2596
    %3762 = vmatpush2.bf16.msra.mxu0 %v2595
    %3763 = vmatprep.subr.bf16.mxu0 %v2592
    %3764 = vmatpush2.bf16.msra.mxu0 %v2591
    %3765 = vmatprep.subr.bf16.mxu0 %v2588
    %3766 = vmatpush2.bf16.msra.mxu0 %v2587
    %3767 = vmatprep.subr.bf16.mxu0 %v2584
    %3768 = vmatpush2.bf16.msra.mxu0 %v2583
    %3769 = vmatprep.subr.bf16.mxu0 %v2580
    %3770 = vmatpush2.bf16.msra.mxu0 %v2579
    %3771 = vmatprep.mubr.bf16.mxu0 %v641
    %3772 = vmatmul.mubr.bf16.gmra.mxu0 %v627
    %v3773 = vpop.f32.mrf.mxu0
    %v3774 = vadd.f32 %v3733, %v3773
    %v3775 = vpop.f32.mrf.mxu0
    %v3776 = vadd.f32 %v3735, %v3775
    %v3777 = vpop.f32.mrf.mxu0
    %v3778 = vpop.f32.mrf.mxu0
    %3779 = vdwg.mxu0
    %3780 = vmatprep.subr.bf16.mxu0 %v2640
    %3781 = vmatpush1.bf16.msra.mxu0 %v2639
    %3782 = vmatprep.subr.bf16.mxu0 %v2636
    %3783 = vmatpush1.bf16.msra.mxu0 %v2635
    %3784 = vmatprep.subr.bf16.mxu0 %v2632
    %3785 = vmatpush1.bf16.msra.mxu0 %v2631
    %3786 = vmatprep.subr.bf16.mxu0 %v2628
    %3787 = vmatpush1.bf16.msra.mxu0 %v2627
    %3788 = vmatprep.subr.bf16.mxu0 %v2624
    %3789 = vmatpush1.bf16.msra.mxu0 %v2623
    %3790 = vmatprep.subr.bf16.mxu0 %v2620
    %3791 = vmatpush1.bf16.msra.mxu0 %v2619
    %3792 = vmatprep.subr.bf16.mxu0 %v2616
    %3793 = vmatpush1.bf16.msra.mxu0 %v2615
    %3794 = vmatprep.subr.bf16.mxu0 %v2612
    %3795 = vmatpush1.bf16.msra.mxu0 %v2611
    %3796 = vmatprep.subr.bf16.mxu0 0
    %3797 = vmatpush2.bf16.msra.mxu0 0
    %3798 = vmatprep.subr.bf16.mxu0 0
    %3799 = vmatpush2.bf16.msra.mxu0 0
    %3800 = vmatprep.subr.bf16.mxu0 0
    %3801 = vmatpush2.bf16.msra.mxu0 0
    %3802 = vmatprep.subr.bf16.mxu0 %v2660
    %3803 = vmatpush2.bf16.msra.mxu0 %v2659
    %3804 = vmatprep.subr.bf16.mxu0 %v2656
    %3805 = vmatpush2.bf16.msra.mxu0 %v2655
    %3806 = vmatprep.subr.bf16.mxu0 %v2652
    %3807 = vmatpush2.bf16.msra.mxu0 %v2651
    %3808 = vmatprep.subr.bf16.mxu0 %v2648
    %3809 = vmatpush2.bf16.msra.mxu0 %v2647
    %3810 = vmatprep.subr.bf16.mxu0 %v2644
    %3811 = vmatpush2.bf16.msra.mxu0 %v2643
    %3812 = vmatprep.mubr.bf16.mxu0 %v3163
    %3813 = vmatmul.mubr.bf16.gmra.mxu0 %v643
    %v3814 = vpop.f32.mrf.mxu0
    %v3815 = vadd.f32 %v3774, %v3814
    %v3816 = vpop.f32.mrf.mxu0
    %v3817 = vadd.f32 %v3776, %v3816
    %v3818 = vpop.f32.mrf.mxu0
    %v3819 = vpop.f32.mrf.mxu0
    %3820 = vdwg.mxu0
    %v3821 = vmax.f32 %v3487, 0.0
    %v3822 = vmax.f32 %v3489, 0.0
    %v3823 = vmax.f32 %v3815, 0.0
    %v3824 = vmax.f32 %v3817, 0.0
    %v3825 = vpack.c.bf16 %v3821, %v3821
    %v3826 = vpack.c.bf16 %v3822, %v3822
    %v3827 = vpack.c.bf16 %v3823, %v3823
    %v3828 = vpack.c.bf16 %v3824, %v3824
    %v3829 = vld [vmem:[%s3] sm:$0xf]
    %v3830 = vld [vmem:[%s3 + $0x4] sm:$0xf]
    %v3831 = vld [vmem:[%s3 + $0x8] sm:$0xf]
    %v3832 = vld [vmem:[%s3 + $0xc] sm:$0xf]
    %v3833 = vld [vmem:[%s3 + $0x10] sm:$0xf]
    %v3834 = vld [vmem:[%s3 + $0x14] sm:$0xf]
    %v3835 = vld [vmem:[%s3 + $0x18] sm:$0xf]
    %v3836 = vld [vmem:[%s3 + $0x1c] sm:$0xf]
    %v3837 = vld [vmem:[%s3 + $0x20] sm:$0xf]
    %v3838 = vld [vmem:[%s3 + $0x24] sm:$0xf]
    %v3839 = vld [vmem:[%s3 + $0x28] sm:$0xf]
    %v3840 = vld [vmem:[%s3 + $0x2c] sm:$0xf]
    %v3841 = vld [vmem:[%s3 + $0x30] sm:$0xf]
    %v3842 = vld [vmem:[%s3 + $0x34] sm:$0xf]
    %v3843 = vld [vmem:[%s3 + $0x38] sm:$0xf]
    %v3844 = vld [vmem:[%s3 + $0x3c] sm:$0xf]
    %v3845 = vld [vmem:[%s3 + $0x40] sm:$0xf]
    %v3846 = vld [vmem:[%s3 + $0x44] sm:$0xf]
    %v3847 = vld [vmem:[%s3 + $0x48] sm:$0xf]
    %v3848 = vld [vmem:[%s3 + $0x4c] sm:$0xf]
    %v3849 = vld [vmem:[%s3 + $0x50] sm:$0xf]
    %v3850 = vld [vmem:[%s3 + $0x54] sm:$0xf]
    %v3851 = vld [vmem:[%s3 + $0x58] sm:$0xf]
    %v3852 = vld [vmem:[%s3 + $0x5c] sm:$0xf]
    %v3853 = vld [vmem:[%s3 + $0x60] sm:$0xf]
    %v3854 = vld [vmem:[%s3 + $0x64] sm:$0xf]
    %v3855 = vld [vmem:[%s3 + $0x68] sm:$0xf]
    %v3856 = vld [vmem:[%s3 + $0x6c] sm:$0xf]
    %v3857 = vld [vmem:[%s3 + $0x70] sm:$0xf]
    %v3858 = vld [vmem:[%s3 + $0x74] sm:$0xf]
    %v3859 = vld [vmem:[%s3 + $0x78] sm:$0xf]
    %v3860 = vld [vmem:[%s3 + $0x7c] sm:$0xf]
    %v3861 = vld [vmem:[%s3 + $0x80] sm:$0xf]
    %v3862 = vld [vmem:[%s3 + $0x84] sm:$0xf]
    %v3863 = vld [vmem:[%s3 + $0x88] sm:$0xf]
    %v3864 = vld [vmem:[%s3 + $0x8c] sm:$0xf]
    %v3865 = vld [vmem:[%s3 + $0x90] sm:$0xf]
    %v3866 = vld [vmem:[%s3 + $0x94] sm:$0xf]
    %v3867 = vld [vmem:[%s3 + $0x98] sm:$0xf]
    %v3868 = vld [vmem:[%s3 + $0x9c] sm:$0xf]
    %v3869 = vld [vmem:[%s3 + $0xa0] sm:$0xf]
    %v3870 = vld [vmem:[%s3 + $0xa4] sm:$0xf]
    %v3871 = vld [vmem:[%s3 + $0xa8] sm:$0xf]
    %v3872 = vld [vmem:[%s3 + $0xac] sm:$0xf]
    %v3873 = vld [vmem:[%s3 + $0xb0] sm:$0xf]
    %v3874 = vld [vmem:[%s3 + $0xb4] sm:$0xf]
    %v3875 = vld [vmem:[%s3 + $0xb8] sm:$0xf]
    %v3876 = vld [vmem:[%s3 + $0xbc] sm:$0xf]
    %v3877 = vld [vmem:[%s3 + $0xc0] sm:$0xf]
    %v3878 = vld [vmem:[%s3 + $0xc4] sm:$0xf]
    %v3879 = vld [vmem:[%s3 + $0xc8] sm:$0xf]
    %v3880 = vld [vmem:[%s3 + $0xcc] sm:$0xf]
    %v3881 = vld [vmem:[%s3 + $0xd0] sm:$0xf]
    %v3882 = vld [vmem:[%s3 + $0xd4] sm:$0xf]
    %v3883 = vld [vmem:[%s3 + $0xd8] sm:$0xf]
    %v3884 = vld [vmem:[%s3 + $0xdc] sm:$0xf]
    %v3885 = vld [vmem:[%s3 + $0xe0] sm:$0xf]
    %v3886 = vld [vmem:[%s3 + $0xe4] sm:$0xf]
    %v3887 = vld [vmem:[%s3 + $0xe8] sm:$0xf]
    %v3888 = vld [vmem:[%s3 + $0xec] sm:$0xf]
    %v3889 = vld [vmem:[%s3 + $0xf0] sm:$0xf]
    %v3890 = vld [vmem:[%s3 + $0xf4] sm:$0xf]
    %v3891 = vld [vmem:[%s3 + $0xf8] sm:$0x3]
    %v3892 = vld [vmem:[%s4] sm:$0x1]
    %v3894 = vlaneseq
    %v3895 = vshrl.u32 %v3894, 7
    %v3896 = vsub.s32 0, %v3895
    %v3897 = vrot.slane %v3892, %v3896
    %v3962 = vunpack.c.l.b16 %v3829
    %v3963 = vunpack.c.l.b16 %v3830
    %v3964 = vunpack.c.l.b16 %v3831
    %v3965 = vunpack.c.l.b16 %v3832
    %v3966 = vunpack.c.l.b16 %v3833
    %v3967 = vunpack.c.l.b16 %v3834
    %v3968 = vunpack.c.l.b16 %v3835
    %v3969 = vunpack.c.l.b16 %v3836
    %v3970 = vunpack.c.l.b16 %v3837
    %v3971 = vunpack.c.l.b16 %v3838
    %v3972 = vunpack.c.l.b16 %v3839
    %v3973 = vunpack.c.l.b16 %v3840
    %v3974 = vunpack.c.l.b16 %v3841
    %v3975 = vunpack.c.l.b16 %v3842
    %v3976 = vunpack.c.l.b16 %v3843
    %v3977 = vunpack.c.l.b16 %v3844
    %v3978 = vunpack.c.l.b16 %v3845
    %v3979 = vunpack.c.l.b16 %v3846
    %v3980 = vunpack.c.l.b16 %v3847
    %v3981 = vunpack.c.l.b16 %v3848
    %v3982 = vunpack.c.l.b16 %v3849
    %v3983 = vunpack.c.l.b16 %v3850
    %v3984 = vunpack.c.l.b16 %v3851
    %v3985 = vunpack.c.l.b16 %v3852
    %v3986 = vunpack.c.l.b16 %v3853
    %v3987 = vunpack.c.l.b16 %v3854
    %v3988 = vunpack.c.l.b16 %v3855
    %v3989 = vunpack.c.l.b16 %v3856
    %v3990 = vunpack.c.l.b16 %v3857
    %v3991 = vunpack.c.l.b16 %v3858
    %v3992 = vunpack.c.l.b16 %v3859
    %v3993 = vunpack.c.l.b16 %v3860
    %v3994 = vunpack.c.l.b16 %v3861
    %v3995 = vunpack.c.l.b16 %v3862
    %v3996 = vunpack.c.l.b16 %v3863
    %v3997 = vunpack.c.l.b16 %v3864
    %v3998 = vunpack.c.l.b16 %v3865
    %v3999 = vunpack.c.l.b16 %v3866
    %v4000 = vunpack.c.l.b16 %v3867
    %v4001 = vunpack.c.l.b16 %v3868
    %v4002 = vunpack.c.l.b16 %v3869
    %v4003 = vunpack.c.l.b16 %v3870
    %v4004 = vunpack.c.l.b16 %v3871
    %v4005 = vunpack.c.l.b16 %v3872
    %v4006 = vunpack.c.l.b16 %v3873
    %v4007 = vunpack.c.l.b16 %v3874
    %v4008 = vunpack.c.l.b16 %v3875
    %v4009 = vunpack.c.l.b16 %v3876
    %v4010 = vunpack.c.l.b16 %v3877
    %v4011 = vunpack.c.l.b16 %v3878
    %v4012 = vunpack.c.l.b16 %v3879
    %v4013 = vunpack.c.l.b16 %v3880
    %v4014 = vunpack.c.l.b16 %v3881
    %v4015 = vunpack.c.l.b16 %v3882
    %v4016 = vunpack.c.l.b16 %v3883
    %v4017 = vunpack.c.l.b16 %v3884
    %v4018 = vunpack.c.l.b16 %v3885
    %v4019 = vunpack.c.l.b16 %v3886
    %v4020 = vunpack.c.l.b16 %v3887
    %v4021 = vunpack.c.l.b16 %v3888
    %v4022 = vunpack.c.l.b16 %v3889
    %v4023 = vunpack.c.l.b16 %v3890
    %v4024 = vunpack.c.l.b16 %v3891
    %v4025 = vpack.c.b16 %v3963, %v3962
    %v4026 = vpack.c.b16 %v3965, %v3964
    %v4027 = vpack.c.b16 %v3967, %v3966
    %v4028 = vpack.c.b16 %v3969, %v3968
    %v4029 = vpack.c.b16 %v3971, %v3970
    %v4030 = vpack.c.b16 %v3973, %v3972
    %v4031 = vpack.c.b16 %v3975, %v3974
    %v4032 = vpack.c.b16 %v3977, %v3976
    %v4033 = vpack.c.b16 %v3979, %v3978
    %v4034 = vpack.c.b16 %v3981, %v3980
    %v4035 = vpack.c.b16 %v3983, %v3982
    %v4036 = vpack.c.b16 %v3985, %v3984
    %v4037 = vpack.c.b16 %v3987, %v3986
    %v4038 = vpack.c.b16 %v3989, %v3988
    %v4039 = vpack.c.b16 %v3991, %v3990
    %v4040 = vpack.c.b16 %v3993, %v3992
    %v4041 = vpack.c.b16 %v3995, %v3994
    %v4042 = vpack.c.b16 %v3997, %v3996
    %v4043 = vpack.c.b16 %v3999, %v3998
    %v4044 = vpack.c.b16 %v4001, %v4000
    %v4045 = vpack.c.b16 %v4003, %v4002
    %v4046 = vpack.c.b16 %v4005, %v4004
    %v4047 = vpack.c.b16 %v4007, %v4006
    %v4048 = vpack.c.b16 %v4009, %v4008
    %v4049 = vpack.c.b16 %v4011, %v4010
    %v4050 = vpack.c.b16 %v4013, %v4012
    %v4051 = vpack.c.b16 %v4015, %v4014
    %v4052 = vpack.c.b16 %v4017, %v4016
    %v4053 = vpack.c.b16 %v4019, %v4018
    %v4054 = vpack.c.b16 %v4021, %v4020
    %v4055 = vpack.c.b16 %v4023, %v4022
    %v4056 = vpack.c.b16 %v4024, %v4024
    %vm4088 = vcmask 949248
    %v4090 = vsel %vm4088, %v3828, 0
    %vm4092 = vcmask 1041408
    %v4094 = vsel %vm4092, %v4056, 0
    %4096 = vmatprep.subr.bf16.mxu0 0
    %4097 = vmatpush1.bf16.msra.mxu0 %v4032
    %4098 = vmatprep.subr.bf16.mxu0 0
    %4099 = vmatpush1.bf16.msra.mxu0 %v4031
    %4100 = vmatprep.subr.bf16.mxu0 0
    %4101 = vmatpush1.bf16.msra.mxu0 %v4030
    %4102 = vmatprep.subr.bf16.mxu0 0
    %4103 = vmatpush1.bf16.msra.mxu0 %v4029
    %4104 = vmatprep.subr.bf16.mxu0 0
    %4105 = vmatpush1.bf16.msra.mxu0 %v4028
    %4106 = vmatprep.subr.bf16.mxu0 0
    %4107 = vmatpush1.bf16.msra.mxu0 %v4027
    %4108 = vmatprep.subr.bf16.mxu0 0
    %4109 = vmatpush1.bf16.msra.mxu0 %v4026
    %4110 = vmatprep.subr.bf16.mxu0 0
    %4111 = vmatpush1.bf16.msra.mxu0 %v4025
    %4112 = vmatprep.subr.bf16.mxu0 0
    %4113 = vmatpush2.bf16.msra.mxu0 %v4040
    %4114 = vmatprep.subr.bf16.mxu0 0
    %4115 = vmatpush2.bf16.msra.mxu0 %v4039
    %4116 = vmatprep.subr.bf16.mxu0 0
    %4117 = vmatpush2.bf16.msra.mxu0 %v4038
    %4118 = vmatprep.subr.bf16.mxu0 0
    %4119 = vmatpush2.bf16.msra.mxu0 %v4037
    %4120 = vmatprep.subr.bf16.mxu0 0
    %4121 = vmatpush2.bf16.msra.mxu0 %v4036
    %4122 = vmatprep.subr.bf16.mxu0 0
    %4123 = vmatpush2.bf16.msra.mxu0 %v4035
    %4124 = vmatprep.subr.bf16.mxu0 0
    %4125 = vmatpush2.bf16.msra.mxu0 %v4034
    %4126 = vmatprep.subr.bf16.mxu0 0
    %4127 = vmatpush2.bf16.msra.mxu0 %v4033
    %4128 = vmatprep.mubr.bf16.mxu0 %v3826
    %4129 = vmatmul.mubr.bf16.gmra.mxu0 %v3825
    %v4130 = vpop.f32.mrf.mxu0
    %v4131 = vadd.f32 %v3897, %v4130
    %v4132 = vpop.f32.mrf.mxu0
    %v4133 = vpop.f32.mrf.mxu0
    %v4134 = vpop.f32.mrf.mxu0
    %4135 = vdwg.mxu0
    %4136 = vmatprep.subr.bf16.mxu0 0
    %4137 = vmatpush1.bf16.msra.mxu0 %v4048
    %4138 = vmatprep.subr.bf16.mxu0 0
    %4139 = vmatpush1.bf16.msra.mxu0 %v4047
    %4140 = vmatprep.subr.bf16.mxu0 0
    %4141 = vmatpush1.bf16.msra.mxu0 %v4046
    %4142 = vmatprep.subr.bf16.mxu0 0
    %4143 = vmatpush1.bf16.msra.mxu0 %v4045
    %4144 = vmatprep.subr.bf16.mxu0 0
    %4145 = vmatpush1.bf16.msra.mxu0 %v4044
    %4146 = vmatprep.subr.bf16.mxu0 0
    %4147 = vmatpush1.bf16.msra.mxu0 %v4043
    %4148 = vmatprep.subr.bf16.mxu0 0
    %4149 = vmatpush1.bf16.msra.mxu0 %v4042
    %4150 = vmatprep.subr.bf16.mxu0 0
    %4151 = vmatpush1.bf16.msra.mxu0 %v4041
    %4152 = vmatprep.subr.bf16.mxu0 0
    %4153 = vmatpush2.bf16.msra.mxu0 %v4094
    %4154 = vmatprep.subr.bf16.mxu0 0
    %4155 = vmatpush2.bf16.msra.mxu0 %v4055
    %4156 = vmatprep.subr.bf16.mxu0 0
    %4157 = vmatpush2.bf16.msra.mxu0 %v4054
    %4158 = vmatprep.subr.bf16.mxu0 0
    %4159 = vmatpush2.bf16.msra.mxu0 %v4053
    %4160 = vmatprep.subr.bf16.mxu0 0
    %4161 = vmatpush2.bf16.msra.mxu0 %v4052
    %4162 = vmatprep.subr.bf16.mxu0 0
    %4163 = vmatpush2.bf16.msra.mxu0 %v4051
    %4164 = vmatprep.subr.bf16.mxu0 0
    %4165 = vmatpush2.bf16.msra.mxu0 %v4050
    %4166 = vmatprep.subr.bf16.mxu0 0
    %4167 = vmatpush2.bf16.msra.mxu0 %v4049
    %4168 = vmatprep.mubr.bf16.mxu0 %v4090
    %4169 = vmatmul.mubr.bf16.gmra.mxu0 %v3827
    %v4170 = vpop.f32.mrf.mxu0
    %v4171 = vadd.f32 %v4131, %v4170
    %v4172 = vpop.f32.mrf.mxu0
    %v4173 = vpop.f32.mrf.mxu0
    %v4174 = vpop.f32.mrf.mxu0
    %4175 = vdwg.mxu0
    %vm4176 = vcmask 74752
    %v4177 = vsel %vm4176, %v4171, -inf
    %4178 = vmax.xlane.f32.xlu0 %v4177
    %v4179 = vpop.xlane.xlu0 %4178
    %v4180 = vsub.f32 %v4171, %v4179
    %v4181 = vmul.f32 %v4180, 1.442695
    %v4182 = vpow.pop %v4181
    %v4183 = vsel %vm4176, %v4182, 0.0
    %4184 = vadd.xlane.f32.xlu0 %v4183
    %v4185 = vpop.xlane.xlu0 %4184
    %v4186 = vlog2.pop %v4185
    %v4187 = vmul.f32 %v4186, 0.6931472
    %v4188 = vsub.f32 %v4180, %v4187
    %4189 = vst.msk [vmem:[#allocation2] sm:$0x3] %vm4176, %v4188
    // Predicated region
    $region22: #{convnet_forward.7} parent=1 // pred_check
      _
    $region23: #{convnet_forward.7} parent=1 // pred_check_branch
      %4191 = sbr.rel (0) target = $region25
    $region24: #{convnet_forward.7} parent=1 // pred_region
      %s4193 = ssub.s32 32, 32
      %4194 = vsyncadd [#allocation3], %s4193
      %s4196 = sshll.u32 [#allocation2], 4
      %s4197 = int_to_ptr.vmem [resolvable:$true] %s4196
      %4199 = dma.vmem_to_hbm [thread:$0]  %s4197, 32, %s5, [#allocation3]
    $region25: #{convnet_forward.7} parent=1 // pred_fallthru
      _
    // Predicated region
    $region26: #{convnet_forward.7} parent=1 // pred_check
      _
    $region27: #{convnet_forward.7} parent=1 // pred_check_branch
      %4201 = sbr.rel (0) target = $region29
    $region28: #{convnet_forward.7} parent=1 // pred_region
      %4202 = dma.done [#allocation3], 32
    $region29: #{convnet_forward.7} parent=1 // pred_fallthru
      _
    %4203 = vsyncpa [#allocation3], 1

</llo_original>
